<compile_context>
chip_gen: v7x
topology: tpu7x:2x2x1
jax: 0.10.0
libtpu: 0.0.40
codegen_flags: <defaults>
</compile_context>

<pallas_src>
import functools

import jax
import jax.numpy as jnp
import numpy as np
from jax import lax
from jax.experimental import pallas as pl
from jax.experimental.pallas import tpu as pltpu

# Geometry implied by the torch module (fc1 in_features = 64 * 5 * 5).
_H, _W = 5, 5
_HP, _WP = _H + 2, _W + 2                  # zero-padded 7x7 grid (conv padding = 1)
_G = _HP * _WP                             # 49 padded-grid positions per image
_C1, _C2, _F1 = 32, 64, 256
_INTERIOR = tuple(py * _WP + px            # the 25 interior grid positions
                  for py in range(1, _HP - 1) for px in range(1, _WP - 1))
_J0 = _INTERIOR[0]                         # 8  : first position conv2 must produce
_JN = _INTERIOR[-1] + 1                    # 41 : one past the last
_G2 = _JN - _J0                            # 33 positions computed for conv2


def _round_up(n, m):
    return ((n + m - 1) // m) * m


# ---------------- fused Pallas kernel ----------------

def _dqn_fused_kernel(x_ref, mask_ref, w1_ref, b1_ref, w2_ref, b2_ref,
                      fw1_ref, fb1_ref, fw2_ref, fb2_ref, o_ref, h1_ref):
    """Whole DQN forward for one batch block; everything resident in VMEM.

    Row layout of the slabs is position-major: row = grid_position * nb + image.

    x_ref   : (49*nb, K1p)  conv1 im2col slab (lanes = tap-major, channel)
    mask_ref: (49*nb, 1)    1.0 on interior grid positions, 0.0 on the border
    w1_ref  : (K1p, 32)     conv1 weight, taps folded into K
    b1_ref  : (1, 32)
    w2_ref  : (288, 64)     conv2 weight, taps folded into K
    b2_ref  : (1, 64)
    fw1_ref : (1600, 256)   fc1 weight, rows ordered (position, channel)
    fb1_ref : (1, 256)
    fw2_ref : (256, Npad)   fc2 weight, output channels zero-padded to 128 lanes
    fb2_ref : (1, Npad)
    o_ref   : (nb, Npad)
    h1_ref  : (49*nb, 32)   VMEM scratch: conv1 activation over the padded grid
    """
    f32 = jnp.float32
    nb = o_ref.shape[0]                        # images in this batch block
    m2 = _G2 * nb

    # ---- conv1 (taps folded into K): one (49*nb, K1p) x (K1p, 32) matmul ----
    a1 = jnp.dot(x_ref[...], w1_ref[...], preferred_element_type=f32)
    # ReLU, then zero the 7x7-grid border rows (they are conv2's zero padding).
    h1_ref[...] = jnp.maximum(a1 + b1_ref[...], 0.0) * mask_ref[...]

    # ---- conv2 (taps folded into K): lane-concat 9 aligned shifted views ----
    views = []
    for t in range(9):
        ky, kx = divmod(t, 3)
        lo = (_J0 + (ky - 1) * _WP + (kx - 1)) * nb    # multiple of nb: aligned
        views.append(h1_ref[lo:lo + m2, :])
    x2 = jnp.concatenate(views, axis=-1)               # (33*nb, 288)
    h2 = jnp.maximum(jnp.dot(x2, w2_ref[...], preferred_element_type=f32)
                     + b2_ref[...], 0.0)               # (33*nb, 64)

    # ---- fc1 (1600 -> 256): gather the 25 interior position blocks
    #      (contiguous, aligned) into a (nb, 1600) slab -> ONE large-K matmul --
    cols = [h2[(j - _J0) * nb:(j - _J0 + 1) * nb, :] for j in _INTERIOR]
    f_in = jnp.concatenate(cols, axis=-1)              # (nb, 1600)
    h3 = jnp.maximum(jnp.dot(f_in, fw1_ref[...], preferred_element_type=f32)
                     + fb1_ref[...], 0.0)              # (nb, 256)

    # ---- fc2 (256 -> Npad): lane-dense (nb, 128) store ----
    o_ref[...] = (jnp.dot(h3, fw2_ref[...], preferred_element_type=f32)
                  + fb2_ref[...])


# ---------------- one-time parameter re-layout (hoisted out of forward) ----------------

def prepare_params(params):
    """Re-layout torch-style parameters into kernel-ready form (done once)."""
    w1, b1, w2, b2, fw1, fb1, fw2, fb2 = [jnp.asarray(p, jnp.float32) for p in params]
    cin = w1.shape[1]
    k1 = 9 * cin
    k1p = _round_up(k1, 8)
    cout = fw2.shape[0]
    npad = _round_up(max(cout, 128), 128)

    # conv weights: (O, I, ky, kx) -> (tap-major, in) x out, taps folded into K.
    w1cat = jnp.transpose(w1, (2, 3, 1, 0)).reshape(k1, _C1)
    w1cat = jnp.pad(w1cat, ((0, k1p - k1), (0, 0)))
    w2cat = jnp.transpose(w2, (2, 3, 1, 0)).reshape(9 * _C1, _C2)

    # fc1: torch flatten index is c*25 + (y*5 + x); the kernel's fc1 input lane
    # order is (position, channel) -> permute the weight once here.
    fw1k = fw1.reshape(_F1, _C2, _H * _W).transpose(2, 1, 0).reshape(_H * _W * _C2, _F1)

    fw2p = jnp.zeros((_F1, npad), jnp.float32).at[:, :cout].set(fw2.T)
    fb2p = jnp.zeros((1, npad), jnp.float32).at[0, :cout].set(fb2)

    # interior mask over the 49 padded-grid positions (host-side constant)
    mask49 = np.zeros((_G, 1), np.float32)
    for py in range(1, _HP - 1):
        for px in range(1, _WP - 1):
            mask49[py * _WP + px, 0] = 1.0
    mask49 = jnp.asarray(mask49)

    kp = (mask49, w1cat, b1.reshape(1, _C1), w2cat, b2.reshape(1, _C2),
          fw1k, fb1.reshape(1, _F1), fw2p, fb2p)
    return kp, cout


# ---------------- jitted forward ----------------

@functools.partial(jax.jit, static_argnames=("cout", "block_b"))
def dqn_forward(x, kp, *, cout, block_b=128):
    """x: (B, channel_in, 5, 5) NCHW (or (channel_in, 5, 5)).  -> (B, channel_out)."""
    mask49, w1cat, b1r, w2cat, b2r, fw1k, fb1r, fw2p, fb2p = kp
    if x.ndim == 3:                        # torch forward unsqueezes 3-D input
        x = x[None]
    B, cin, h, w = x.shape
    assert h == _H and w == _W, "fc1 in_features=1600 implies 5x5 spatial input"
    k1p = w1cat.shape[0]
    npad = fw2p.shape[1]

    nb = min(_round_up(B, 8), _round_up(block_b, 8))   # images per grid step
    nblk = (B + nb - 1) // nb
    bp = nblk * nb
    mg = _G * nb

    # Tiny input re-layout (wrapper-side, jitted): NCHW -> im2col over the 7x7
    # padded grid, lanes = (tap, channel), rows position-major within each block.
    xh = jnp.transpose(x.astype(jnp.float32), (0, 2, 3, 1))            # (B,5,5,C)
    xh = jnp.pad(xh, ((0, bp - B), (2, 2), (2, 2), (0, 0)))            # (Bp,9,9,C)
    pats = jnp.stack([xh[:, ky:ky + _HP, kx:kx + _WP, :]
                      for ky in range(3) for kx in range(3)], axis=3)  # (Bp,7,7,9,C)
    pats = pats.reshape(bp, _G, 9 * cin)
    pats = jnp.pad(pats, ((0, 0), (0, 0), (0, k1p - 9 * cin)))
    slab = (pats.reshape(nblk, nb, _G, k1p).transpose(0, 2, 1, 3)
                .reshape(nblk * mg, k1p))                              # position-major
    maskb = jnp.repeat(mask49, nb, axis=0)                             # (49*nb, 1)

    flops = 2 * bp * (_G * k1p * _C1 + _G2 * 9 * _C1 * _C2
                      + len(_INTERIOR) * _C2 * _F1 + _F1 * npad)
    bytes_accessed = 4 * (slab.size + maskb.size + w1cat.size + w2cat.size
                          + fw1k.size + fw2p.size + bp * npad
                          + b1r.size + b2r.size + fb1r.size + fb2p.size)

    out = pl.pallas_call(
        _dqn_fused_kernel,
        out_shape=jax.ShapeDtypeStruct((bp, npad), jnp.float32),
        grid=(nblk,),
        in_specs=[
            pl.BlockSpec((mg, k1p), lambda i: (i, 0)),       # per-block input slab
            pl.BlockSpec((mg, 1), lambda i: (0, 0)),         # interior mask (shared)
            pl.BlockSpec(w1cat.shape, lambda i: (0, 0)),     # weights: VMEM-resident
            pl.BlockSpec(b1r.shape, lambda i: (0, 0)),
            pl.BlockSpec(w2cat.shape, lambda i: (0, 0)),
            pl.BlockSpec(b2r.shape, lambda i: (0, 0)),
            pl.BlockSpec(fw1k.shape, lambda i: (0, 0)),
            pl.BlockSpec(fb1r.shape, lambda i: (0, 0)),
            pl.BlockSpec(fw2p.shape, lambda i: (0, 0)),
            pl.BlockSpec(fb2p.shape, lambda i: (0, 0)),
        ],
        out_specs=pl.BlockSpec((nb, npad), lambda i: (i, 0)),
        scratch_shapes=[pltpu.VMEM((mg, _C1), jnp.float32)],
        compiler_params=pltpu.CompilerParams(
            dimension_semantics=("parallel",)),
        cost_estimate=pl.CostEstimate(flops=flops, transcendentals=0,
                                      bytes_accessed=bytes_accessed),
    )(slab, maskb, w1cat, b1r, w2cat, b2r, fw1k, fb1r, fw2p, fb2p)
    return out[:B, :cout]


# ---------------- deterministic parameter init ----------------

def init_params(key, channel_in, channel_out):
    ks = jax.random.split(key, 8)

    def unif(k, shape, fan_in):
        bound = 1.0 / np.sqrt(fan_in)
        return jax.random.uniform(k, shape, jnp.float32, -bound, bound)

    w1 = unif(ks[0], (32, channel_in, 3, 3), channel_in * 9)
    b1 = unif(ks[1], (32,), channel_in * 9)
    w2 = unif(ks[2], (64, 32, 3, 3), 32 * 9)
    b2 = unif(ks[3], (64,), 32 * 9)
    fw1 = unif(ks[4], (256, 1600), 1600)
    fb1 = unif(ks[5], (256,), 1600)
    fw2 = unif(ks[6], (channel_out, 256), 256)
    fb2 = unif(ks[7], (channel_out,), 256)
    return (w1, b1, w2, b2, fw1, fb1, fw2, fb2)


# ---------------- pure-JAX reference (sanity check only) ----------------

def ref_forward(x, params):
    w1, b1, w2, b2, fw1, fb1, fw2, fb2 = params
    dn = ('NCHW', 'OIHW', 'NCHW')
    y = lax.conv_general_dilated(x.astype(jnp.float32), w1, (1, 1), 'SAME',
                                 dimension_numbers=dn)
    y = jnp.maximum(y + b1[None, :, None, None], 0.0)
    y = lax.conv_general_dilated(y, w2, (1, 1), 'SAME', dimension_numbers=dn)
    y = jnp.maximum(y + b2[None, :, None, None], 0.0)
    y = y.reshape(y.shape[0], -1)                 # torch .view order (c, y, x)
    y = jnp.maximum(y @ fw1.T + fb1, 0.0)
    return y @ fw2.T + fb2


if __name__ == "__main__":
    key = jax.random.PRNGKey(0)
    k_x, k_p = jax.random.split(key)

    B, C_in = 2, 4
    C_out = 6                                     # len(ACTIONS)

    x = jax.random.normal(k_x, (B, C_in, _H, _W), jnp.float32)
    params = init_params(k_p, C_in, C_out)

    kp, cout = prepare_params(params)             # one-time weight re-layout
    out = jax.block_until_ready(dqn_forward(x, kp, cout=cout))
    assert out.shape == (B, C_out)

    ref = jax.block_until_ready(ref_forward(x, params))
    np.testing.assert_allclose(np.asarray(out), np.asarray(ref), rtol=1e-2, atol=1e-2)

    print("KERNEL_OK")
</pallas_src>

<mosaic_0001>
module attributes {stable_mosaic.version = 11 : i64} {
  func.func @_dqn_fused_kernel(%arg0: i32, %arg1: memref<392x40xf32, #tpu.memory_space<vmem>>, %arg2: memref<392x1xf32, #tpu.memory_space<vmem>>, %arg3: memref<40x32xf32, #tpu.memory_space<vmem>>, %arg4: memref<1x32xf32, #tpu.memory_space<vmem>>, %arg5: memref<288x64xf32, #tpu.memory_space<vmem>>, %arg6: memref<1x64xf32, #tpu.memory_space<vmem>>, %arg7: memref<1600x256xf32, #tpu.memory_space<vmem>>, %arg8: memref<1x256xf32, #tpu.memory_space<vmem>>, %arg9: memref<256x128xf32, #tpu.memory_space<vmem>>, %arg10: memref<1x128xf32, #tpu.memory_space<vmem>>, %arg11: memref<8x128xf32, #tpu.memory_space<vmem>>, %arg12: memref<392x32xf32, #tpu.memory_space<vmem>>) attributes {dimension_semantics = [#tpu.dimension_semantics<parallel>], iteration_bounds = array<i64: 1>, scalar_prefetch = 0 : i64, scratch_operands = 1 : i64, tpu.core_type = #tpu.core_type<tc>, window_params = [{transform_indices = @transform_0, window_bounds = array<i64: 392, 40>}, {pipeline_mode = #tpu.pipeline_mode<synchronous>, transform_indices = @transform_1, window_bounds = array<i64: 392, 1>}, {pipeline_mode = #tpu.pipeline_mode<synchronous>, transform_indices = @transform_2, window_bounds = array<i64: 40, 32>}, {pipeline_mode = #tpu.pipeline_mode<synchronous>, transform_indices = @transform_3, window_bounds = array<i64: 1, 32>}, {pipeline_mode = #tpu.pipeline_mode<synchronous>, transform_indices = @transform_4, window_bounds = array<i64: 288, 64>}, {pipeline_mode = #tpu.pipeline_mode<synchronous>, transform_indices = @transform_5, window_bounds = array<i64: 1, 64>}, {pipeline_mode = #tpu.pipeline_mode<synchronous>, transform_indices = @transform_6, window_bounds = array<i64: 1600, 256>}, {pipeline_mode = #tpu.pipeline_mode<synchronous>, transform_indices = @transform_7, window_bounds = array<i64: 1, 256>}, {pipeline_mode = #tpu.pipeline_mode<synchronous>, transform_indices = @transform_8, window_bounds = array<i64: 256, 128>}, {pipeline_mode = #tpu.pipeline_mode<synchronous>, transform_indices = @transform_9, window_bounds = array<i64: 1, 128>}, {transform_indices = @transform_10, window_bounds = array<i64: 8, 128>}]} {
    %c0 = arith.constant 0 : index
    %c0_0 = arith.constant 0 : index
    %0 = vector.load %arg1[%c0, %c0_0] : memref<392x40xf32, #tpu.memory_space<vmem>>, vector<392x40xf32>
    %c0_1 = arith.constant 0 : index
    %c0_2 = arith.constant 0 : index
    %1 = vector.load %arg3[%c0_1, %c0_2] : memref<40x32xf32, #tpu.memory_space<vmem>>, vector<40x32xf32>
    %cst = arith.constant dense<0.000000e+00> : vector<392x32xf32>
    %2 = tpu.matmul %0, %1, %cst {dimension_numbers = #tpu.dot_dimension_numbers<[1], [0], [0], [1], [0, 0, 1, 1], [], []>} : vector<392x40xf32>, vector<40x32xf32>, vector<392x32xf32> -> vector<392x32xf32>
    %c0_3 = arith.constant 0 : index
    %c0_4 = arith.constant 0 : index
    %3 = vector.load %arg4[%c0_3, %c0_4] : memref<1x32xf32, #tpu.memory_space<vmem>>, vector<1x32xf32>
    %4 = vector.broadcast %3 : vector<1x32xf32> to vector<392x32xf32>
    %5 = arith.addf %2, %4 : vector<392x32xf32>
    %cst_5 = arith.constant 0.000000e+00 : f32
    %6 = vector.broadcast %cst_5 : f32 to vector<392x32xf32>
    %7 = arith.maximumf %5, %6 : vector<392x32xf32>
    %c0_6 = arith.constant 0 : index
    %c0_7 = arith.constant 0 : index
    %8 = vector.load %arg2[%c0_6, %c0_7] : memref<392x1xf32, #tpu.memory_space<vmem>>, vector<392x1xf32>
    %9 = vector.broadcast %8 : vector<392x1xf32> to vector<392x32xf32>
    %10 = arith.mulf %7, %9 : vector<392x32xf32>
    %c0_8 = arith.constant 0 : index
    %c0_9 = arith.constant 0 : index
    %11 = vector.load %arg12[%c0_8, %c0_9] : memref<392x32xf32, #tpu.memory_space<vmem>>, vector<392x32xf32>
    tpu.vector_store %arg12[%c0_8, %c0_9], %10 {strides = array<i32>} : memref<392x32xf32, #tpu.memory_space<vmem>>, vector<392x32xf32>,
    %c0_10 = arith.constant 0 : index
    %c0_11 = arith.constant 0 : index
    %12 = vector.load %arg12[%c0_10, %c0_11] : memref<392x32xf32, #tpu.memory_space<vmem>>, vector<264x32xf32>
    %c8 = arith.constant 8 : index
    %c0_12 = arith.constant 0 : index
    %13 = vector.load %arg12[%c8, %c0_12] : memref<392x32xf32, #tpu.memory_space<vmem>>, vector<264x32xf32>
    %c16 = arith.constant 16 : index
    %c0_13 = arith.constant 0 : index
    %14 = vector.load %arg12[%c16, %c0_13] : memref<392x32xf32, #tpu.memory_space<vmem>>, vector<264x32xf32>
    %c56 = arith.constant 56 : index
    %c0_14 = arith.constant 0 : index
    %15 = vector.load %arg12[%c56, %c0_14] : memref<392x32xf32, #tpu.memory_space<vmem>>, vector<264x32xf32>
    %c64 = arith.constant 64 : index
    %c0_15 = arith.constant 0 : index
    %16 = vector.load %arg12[%c64, %c0_15] : memref<392x32xf32, #tpu.memory_space<vmem>>, vector<264x32xf32>
    %c72 = arith.constant 72 : index
    %c0_16 = arith.constant 0 : index
    %17 = vector.load %arg12[%c72, %c0_16] : memref<392x32xf32, #tpu.memory_space<vmem>>, vector<264x32xf32>
    %c112 = arith.constant 112 : index
    %c0_17 = arith.constant 0 : index
    %18 = vector.load %arg12[%c112, %c0_17] : memref<392x32xf32, #tpu.memory_space<vmem>>, vector<264x32xf32>
    %c120 = arith.constant 120 : index
    %c0_18 = arith.constant 0 : index
    %19 = vector.load %arg12[%c120, %c0_18] : memref<392x32xf32, #tpu.memory_space<vmem>>, vector<264x32xf32>
    %c128 = arith.constant 128 : index
    %c0_19 = arith.constant 0 : index
    %20 = vector.load %arg12[%c128, %c0_19] : memref<392x32xf32, #tpu.memory_space<vmem>>, vector<264x32xf32>
    %21 = tpu.concatenate %12, %13, %14, %15, %16, %17, %18, %19, %20 in 1 : vector<264x32xf32>, vector<264x32xf32>, vector<264x32xf32>, vector<264x32xf32>, vector<264x32xf32>, vector<264x32xf32>, vector<264x32xf32>, vector<264x32xf32>, vector<264x32xf32> -> vector<264x288xf32>
    %c0_20 = arith.constant 0 : index
    %c0_21 = arith.constant 0 : index
    %22 = vector.load %arg5[%c0_20, %c0_21] : memref<288x64xf32, #tpu.memory_space<vmem>>, vector<288x64xf32>
    %cst_22 = arith.constant dense<0.000000e+00> : vector<264x64xf32>
    %23 = tpu.matmul %21, %22, %cst_22 {dimension_numbers = #tpu.dot_dimension_numbers<[1], [0], [0], [1], [0, 0, 1, 1], [], []>} : vector<264x288xf32>, vector<288x64xf32>, vector<264x64xf32> -> vector<264x64xf32>
    %c0_23 = arith.constant 0 : index
    %c0_24 = arith.constant 0 : index
    %24 = vector.load %arg6[%c0_23, %c0_24] : memref<1x64xf32, #tpu.memory_space<vmem>>, vector<1x64xf32>
    %25 = vector.broadcast %24 : vector<1x64xf32> to vector<264x64xf32>
    %26 = arith.addf %23, %25 : vector<264x64xf32>
    %cst_25 = arith.constant 0.000000e+00 : f32
    %27 = vector.broadcast %cst_25 : f32 to vector<264x64xf32>
    %28 = arith.maximumf %26, %27 : vector<264x64xf32>
    %29 = vector.extract_strided_slice %28 {offsets = [0, 0], sizes = [8, 64], strides = [1, 1]} : vector<264x64xf32> to vector<8x64xf32>
    %30 = vector.extract_strided_slice %28 {offsets = [8, 0], sizes = [8, 64], strides = [1, 1]} : vector<264x64xf32> to vector<8x64xf32>
    %31 = vector.extract_strided_slice %28 {offsets = [16, 0], sizes = [8, 64], strides = [1, 1]} : vector<264x64xf32> to vector<8x64xf32>
    %32 = vector.extract_strided_slice %28 {offsets = [24, 0], sizes = [8, 64], strides = [1, 1]} : vector<264x64xf32> to vector<8x64xf32>
    %33 = vector.extract_strided_slice %28 {offsets = [32, 0], sizes = [8, 64], strides = [1, 1]} : vector<264x64xf32> to vector<8x64xf32>
    %34 = vector.extract_strided_slice %28 {offsets = [56, 0], sizes = [8, 64], strides = [1, 1]} : vector<264x64xf32> to vector<8x64xf32>
    %35 = vector.extract_strided_slice %28 {offsets = [64, 0], sizes = [8, 64], strides = [1, 1]} : vector<264x64xf32> to vector<8x64xf32>
    %36 = vector.extract_strided_slice %28 {offsets = [72, 0], sizes = [8, 64], strides = [1, 1]} : vector<264x64xf32> to vector<8x64xf32>
    %37 = vector.extract_strided_slice %28 {offsets = [80, 0], sizes = [8, 64], strides = [1, 1]} : vector<264x64xf32> to vector<8x64xf32>
    %38 = vector.extract_strided_slice %28 {offsets = [88, 0], sizes = [8, 64], strides = [1, 1]} : vector<264x64xf32> to vector<8x64xf32>
    %39 = vector.extract_strided_slice %28 {offsets = [112, 0], sizes = [8, 64], strides = [1, 1]} : vector<264x64xf32> to vector<8x64xf32>
    %40 = vector.extract_strided_slice %28 {offsets = [120, 0], sizes = [8, 64], strides = [1, 1]} : vector<264x64xf32> to vector<8x64xf32>
    %41 = vector.extract_strided_slice %28 {offsets = [128, 0], sizes = [8, 64], strides = [1, 1]} : vector<264x64xf32> to vector<8x64xf32>
    %42 = vector.extract_strided_slice %28 {offsets = [136, 0], sizes = [8, 64], strides = [1, 1]} : vector<264x64xf32> to vector<8x64xf32>
    %43 = vector.extract_strided_slice %28 {offsets = [144, 0], sizes = [8, 64], strides = [1, 1]} : vector<264x64xf32> to vector<8x64xf32>
    %44 = vector.extract_strided_slice %28 {offsets = [168, 0], sizes = [8, 64], strides = [1, 1]} : vector<264x64xf32> to vector<8x64xf32>
    %45 = vector.extract_strided_slice %28 {offsets = [176, 0], sizes = [8, 64], strides = [1, 1]} : vector<264x64xf32> to vector<8x64xf32>
    %46 = vector.extract_strided_slice %28 {offsets = [184, 0], sizes = [8, 64], strides = [1, 1]} : vector<264x64xf32> to vector<8x64xf32>
    %47 = vector.extract_strided_slice %28 {offsets = [192, 0], sizes = [8, 64], strides = [1, 1]} : vector<264x64xf32> to vector<8x64xf32>
    %48 = vector.extract_strided_slice %28 {offsets = [200, 0], sizes = [8, 64], strides = [1, 1]} : vector<264x64xf32> to vector<8x64xf32>
    %49 = vector.extract_strided_slice %28 {offsets = [224, 0], sizes = [8, 64], strides = [1, 1]} : vector<264x64xf32> to vector<8x64xf32>
    %50 = vector.extract_strided_slice %28 {offsets = [232, 0], sizes = [8, 64], strides = [1, 1]} : vector<264x64xf32> to vector<8x64xf32>
    %51 = vector.extract_strided_slice %28 {offsets = [240, 0], sizes = [8, 64], strides = [1, 1]} : vector<264x64xf32> to vector<8x64xf32>
    %52 = vector.extract_strided_slice %28 {offsets = [248, 0], sizes = [8, 64], strides = [1, 1]} : vector<264x64xf32> to vector<8x64xf32>
    %53 = vector.extract_strided_slice %28 {offsets = [256, 0], sizes = [8, 64], strides = [1, 1]} : vector<264x64xf32> to vector<8x64xf32>
    %54 = tpu.concatenate %29, %30, %31, %32, %33, %34, %35, %36, %37, %38, %39, %40, %41, %42, %43, %44 in 1 : vector<8x64xf32>, vector<8x64xf32>, vector<8x64xf32>, vector<8x64xf32>, vector<8x64xf32>, vector<8x64xf32>, vector<8x64xf32>, vector<8x64xf32>, vector<8x64xf32>, vector<8x64xf32>, vector<8x64xf32>, vector<8x64xf32>, vector<8x64xf32>, vector<8x64xf32>, vector<8x64xf32>, vector<8x64xf32> -> vector<8x1024xf32>
    %55 = tpu.concatenate %45, %46, %47, %48, %49, %50, %51, %52, %53 in 1 : vector<8x64xf32>, vector<8x64xf32>, vector<8x64xf32>, vector<8x64xf32>, vector<8x64xf32>, vector<8x64xf32>, vector<8x64xf32>, vector<8x64xf32>, vector<8x64xf32> -> vector<8x576xf32>
    %56 = tpu.concatenate %54, %55 in 1 : vector<8x1024xf32>, vector<8x576xf32> -> vector<8x1600xf32>
    %c0_26 = arith.constant 0 : index
    %c0_27 = arith.constant 0 : index
    %57 = vector.load %arg7[%c0_26, %c0_27] : memref<1600x256xf32, #tpu.memory_space<vmem>>, vector<1600x256xf32>
    %cst_28 = arith.constant dense<0.000000e+00> : vector<8x256xf32>
    %58 = tpu.matmul %56, %57, %cst_28 {dimension_numbers = #tpu.dot_dimension_numbers<[1], [0], [0], [1], [0, 0, 1, 1], [], []>} : vector<8x1600xf32>, vector<1600x256xf32>, vector<8x256xf32> -> vector<8x256xf32>
    %c0_29 = arith.constant 0 : index
    %c0_30 = arith.constant 0 : index
    %59 = vector.load %arg8[%c0_29, %c0_30] : memref<1x256xf32, #tpu.memory_space<vmem>>, vector<1x256xf32>
    %60 = vector.broadcast %59 : vector<1x256xf32> to vector<8x256xf32>
    %61 = arith.addf %58, %60 : vector<8x256xf32>
    %cst_31 = arith.constant 0.000000e+00 : f32
    %62 = vector.broadcast %cst_31 : f32 to vector<8x256xf32>
    %63 = arith.maximumf %61, %62 : vector<8x256xf32>
    %c0_32 = arith.constant 0 : index
    %c0_33 = arith.constant 0 : index
    %64 = vector.load %arg9[%c0_32, %c0_33] : memref<256x128xf32, #tpu.memory_space<vmem>>, vector<256x128xf32>
    %cst_34 = arith.constant dense<0.000000e+00> : vector<8x128xf32>
    %65 = tpu.matmul %63, %64, %cst_34 {dimension_numbers = #tpu.dot_dimension_numbers<[1], [0], [0], [1], [0, 0, 1, 1], [], []>} : vector<8x256xf32>, vector<256x128xf32>, vector<8x128xf32> -> vector<8x128xf32>
    %c0_35 = arith.constant 0 : index
    %c0_36 = arith.constant 0 : index
    %66 = vector.load %arg10[%c0_35, %c0_36] : memref<1x128xf32, #tpu.memory_space<vmem>>, vector<1x128xf32>
    %67 = vector.broadcast %66 : vector<1x128xf32> to vector<8x128xf32>
    %68 = arith.addf %65, %67 : vector<8x128xf32>
    %c0_37 = arith.constant 0 : index
    %c0_38 = arith.constant 0 : index
    %69 = vector.load %arg11[%c0_37, %c0_38] : memref<8x128xf32, #tpu.memory_space<vmem>>, vector<8x128xf32>
    tpu.vector_store %arg11[%c0_37, %c0_38], %68 {strides = array<i32>} : memref<8x128xf32, #tpu.memory_space<vmem>>, vector<8x128xf32>,
    return
  }
  func.func @transform_0(%arg0: i32) -> (i32, i32) {
    %c0_i32 = arith.constant 0 : i32
    %c0_i32_0 = arith.constant 0 : i32
    return %arg0, %c0_i32 : i32, i32
  }
  func.func @transform_1(%arg0: i32) -> (i32, i32) {
    %c0_i32 = arith.constant 0 : i32
    %c0_i32_0 = arith.constant 0 : i32
    %c0_i32_1 = arith.constant 0 : i32
    return %c0_i32, %c0_i32_0 : i32, i32
  }
  func.func @transform_2(%arg0: i32) -> (i32, i32) {
    %c0_i32 = arith.constant 0 : i32
    %c0_i32_0 = arith.constant 0 : i32
    %c0_i32_1 = arith.constant 0 : i32
    return %c0_i32, %c0_i32_0 : i32, i32
  }
  func.func @transform_3(%arg0: i32) -> (i32, i32) {
    %c0_i32 = arith.constant 0 : i32
    %c0_i32_0 = arith.constant 0 : i32
    %c0_i32_1 = arith.constant 0 : i32
    return %c0_i32, %c0_i32_0 : i32, i32
  }
  func.func @transform_4(%arg0: i32) -> (i32, i32) {
    %c0_i32 = arith.constant 0 : i32
    %c0_i32_0 = arith.constant 0 : i32
    %c0_i32_1 = arith.constant 0 : i32
    return %c0_i32, %c0_i32_0 : i32, i32
  }
  func.func @transform_5(%arg0: i32) -> (i32, i32) {
    %c0_i32 = arith.constant 0 : i32
    %c0_i32_0 = arith.constant 0 : i32
    %c0_i32_1 = arith.constant 0 : i32
    return %c0_i32, %c0_i32_0 : i32, i32
  }
  func.func @transform_6(%arg0: i32) -> (i32, i32) {
    %c0_i32 = arith.constant 0 : i32
    %c0_i32_0 = arith.constant 0 : i32
    %c0_i32_1 = arith.constant 0 : i32
    return %c0_i32, %c0_i32_0 : i32, i32
  }
  func.func @transform_7(%arg0: i32) -> (i32, i32) {
    %c0_i32 = arith.constant 0 : i32
    %c0_i32_0 = arith.constant 0 : i32
    %c0_i32_1 = arith.constant 0 : i32
    return %c0_i32, %c0_i32_0 : i32, i32
  }
  func.func @transform_8(%arg0: i32) -> (i32, i32) {
    %c0_i32 = arith.constant 0 : i32
    %c0_i32_0 = arith.constant 0 : i32
    %c0_i32_1 = arith.constant 0 : i32
    return %c0_i32, %c0_i32_0 : i32, i32
  }
  func.func @transform_9(%arg0: i32) -> (i32, i32) {
    %c0_i32 = arith.constant 0 : i32
    %c0_i32_0 = arith.constant 0 : i32
    %c0_i32_1 = arith.constant 0 : i32
    return %c0_i32, %c0_i32_0 : i32, i32
  }
  func.func @transform_10(%arg0: i32) -> (i32, i32) {
    %c0_i32 = arith.constant 0 : i32
    %c0_i32_0 = arith.constant 0 : i32
    return %arg0, %c0_i32 : i32, i32
  }
}

</mosaic_0001>

<llo_original>
// kernel: dqn_forward.1
$region0: #{dqn_forward.1}
  #allocation0 [shape = 'u32[]', space=smem, size = 0x4, offset = 0x4, fixed_abs, tag = 'smem constant byte address 0x4 - core index']
  #allocation1 [shape = 'u32[144,128]{1,0:T(1,128)}', space=vmem, size = 0x12000, scoped, tag = 'internal scratch']
  #allocation2 [shape = 'f32[392,32]{1,0:T(8,128)}', space=vmem, size = 0x31000, scoped, tag = 'scratch operand']
  %s0 = inlined_call_operand.vmem [shape: f32[392,40], index: 0, kind: input, shape index: {}]
  %s1 = inlined_call_operand.vmem [shape: f32[392,1], index: 1, kind: input, shape index: {}]
  %s2 = inlined_call_operand.vmem [shape: f32[40,32], index: 2, kind: input, shape index: {}]
  %s3 = inlined_call_operand.vmem [shape: f32[1,32], index: 3, kind: input, shape index: {}]
  %s4 = inlined_call_operand.vmem [shape: f32[288,64], index: 4, kind: input, shape index: {}]
  %s5 = inlined_call_operand.vmem [shape: f32[1,64], index: 5, kind: input, shape index: {}]
  %s6 = inlined_call_operand.vmem [shape: f32[1600,256], index: 6, kind: input, shape index: {}]
  %s7 = inlined_call_operand.vmem [shape: f32[1,256], index: 7, kind: input, shape index: {}]
  %s8 = inlined_call_operand.vmem [shape: f32[256,128], index: 8, kind: input, shape index: {}]
  %s9 = inlined_call_operand.vmem [shape: f32[1,128], index: 9, kind: input, shape index: {}]
  %s10 = inlined_call_operand.vmem [shape: f32[8,128], index: 10, kind: output, shape index: {}]
  %s11 = sld [smem:[#allocation0]]
  $region50: #{dqn_forward.1} parent=0
    _
  %s13 = ssub.s32 1, %s11
  %s14 = scalar_select 0, %s13, %s11
  // Predicated region
  $region2: #{dqn_forward.1} parent=0 // pred_check
    _
  $region3: #{dqn_forward.1} parent=0 // pred_check_branch
    %16 = sbr.rel (0) target = $region5
  $region4: #{dqn_forward.1} parent=0 // pred_region
    _
  $region5: #{dqn_forward.1} parent=0 // pred_fallthru
    _
  // Predicated region
  $region6: #{dqn_forward.1} parent=0 // pred_check
    _
  $region7: #{dqn_forward.1} parent=0 // pred_check_branch
    %18 = sbr.rel (0) target = $region9
  $region8: #{dqn_forward.1} parent=0 // pred_region
    _
  $region9: #{dqn_forward.1} parent=0 // pred_fallthru
    _
  // Predicated region
  $region10: #{dqn_forward.1} parent=0 // pred_check
    _
  $region11: #{dqn_forward.1} parent=0 // pred_check_branch
    %20 = sbr.rel (0) target = $region13
  $region12: #{dqn_forward.1} parent=0 // pred_region
    _
  $region13: #{dqn_forward.1} parent=0 // pred_fallthru
    _
  // Predicated region
  $region14: #{dqn_forward.1} parent=0 // pred_check
    _
  $region15: #{dqn_forward.1} parent=0 // pred_check_branch
    %22 = sbr.rel (0) target = $region17
  $region16: #{dqn_forward.1} parent=0 // pred_region
    _
  $region17: #{dqn_forward.1} parent=0 // pred_fallthru
    _
  // Predicated region
  $region18: #{dqn_forward.1} parent=0 // pred_check
    _
  $region19: #{dqn_forward.1} parent=0 // pred_check_branch
    %24 = sbr.rel (0) target = $region21
  $region20: #{dqn_forward.1} parent=0 // pred_region
    _
  $region21: #{dqn_forward.1} parent=0 // pred_fallthru
    _
  // Predicated region
  $region22: #{dqn_forward.1} parent=0 // pred_check
    _
  $region23: #{dqn_forward.1} parent=0 // pred_check_branch
    %26 = sbr.rel (0) target = $region25
  $region24: #{dqn_forward.1} parent=0 // pred_region
    _
  $region25: #{dqn_forward.1} parent=0 // pred_fallthru
    _
  // Predicated region
  $region26: #{dqn_forward.1} parent=0 // pred_check
    _
  $region27: #{dqn_forward.1} parent=0 // pred_check_branch
    %28 = sbr.rel (0) target = $region29
  $region28: #{dqn_forward.1} parent=0 // pred_region
    _
  $region29: #{dqn_forward.1} parent=0 // pred_fallthru
    _
  // Predicated region
  $region30: #{dqn_forward.1} parent=0 // pred_check
    _
  $region31: #{dqn_forward.1} parent=0 // pred_check_branch
    %30 = sbr.rel (0) target = $region33
  $region32: #{dqn_forward.1} parent=0 // pred_region
    _
  $region33: #{dqn_forward.1} parent=0 // pred_fallthru
    _
  // Predicated region
  $region34: #{dqn_forward.1} parent=0 // pred_check
    _
  $region35: #{dqn_forward.1} parent=0 // pred_check_branch
    %32 = sbr.rel (0) target = $region37
  $region36: #{dqn_forward.1} parent=0 // pred_region
    _
  $region37: #{dqn_forward.1} parent=0 // pred_fallthru
    _
  // Predicated region
  $region38: #{dqn_forward.1} parent=0 // pred_check
    _
  $region39: #{dqn_forward.1} parent=0 // pred_check_branch
    %34 = sbr.rel (0) target = $region41
  $region40: #{dqn_forward.1} parent=0 // pred_region
    _
  $region41: #{dqn_forward.1} parent=0 // pred_fallthru
    _
  %v35 = vld [vmem:[%s0] sm:$0xff]
  %v36 = vld [vmem:[%s0 + $0x8] sm:$0xff]
  %v37 = vld [vmem:[%s0 + $0x10] sm:$0xff]
  %v38 = vld [vmem:[%s0 + $0x18] sm:$0xff]
  %v39 = vld [vmem:[%s0 + $0x20] sm:$0xff]
  %v40 = vld [vmem:[%s0 + $0x28] sm:$0xff]
  %v41 = vld [vmem:[%s0 + $0x30] sm:$0xff]
  %v42 = vld [vmem:[%s0 + $0x38] sm:$0xff]
  %v43 = vld [vmem:[%s0 + $0x40] sm:$0xff]
  %v44 = vld [vmem:[%s0 + $0x48] sm:$0xff]
  %v45 = vld [vmem:[%s0 + $0x50] sm:$0xff]
  %v46 = vld [vmem:[%s0 + $0x58] sm:$0xff]
  %v47 = vld [vmem:[%s0 + $0x60] sm:$0xff]
  %v48 = vld [vmem:[%s0 + $0x68] sm:$0xff]
  %v49 = vld [vmem:[%s0 + $0x70] sm:$0xff]
  %v50 = vld [vmem:[%s0 + $0x78] sm:$0xff]
  %v51 = vld [vmem:[%s0 + $0x80] sm:$0xff]
  %v52 = vld [vmem:[%s0 + $0x88] sm:$0xff]
  %v53 = vld [vmem:[%s0 + $0x90] sm:$0xff]
  %v54 = vld [vmem:[%s0 + $0x98] sm:$0xff]
  %v55 = vld [vmem:[%s0 + $0xa0] sm:$0xff]
  %v56 = vld [vmem:[%s0 + $0xa8] sm:$0xff]
  %v57 = vld [vmem:[%s0 + $0xb0] sm:$0xff]
  %v58 = vld [vmem:[%s0 + $0xb8] sm:$0xff]
  %v59 = vld [vmem:[%s0 + $0xc0] sm:$0xff]
  %v60 = vld [vmem:[%s0 + $0xc8] sm:$0xff]
  %v61 = vld [vmem:[%s0 + $0xd0] sm:$0xff]
  %v62 = vld [vmem:[%s0 + $0xd8] sm:$0xff]
  %v63 = vld [vmem:[%s0 + $0xe0] sm:$0xff]
  %v64 = vld [vmem:[%s0 + $0xe8] sm:$0xff]
  %v65 = vld [vmem:[%s0 + $0xf0] sm:$0xff]
  %v66 = vld [vmem:[%s0 + $0xf8] sm:$0xff]
  %v67 = vld [vmem:[%s0 + $0x100] sm:$0xff]
  %v68 = vld [vmem:[%s0 + $0x108] sm:$0xff]
  %v69 = vld [vmem:[%s0 + $0x110] sm:$0xff]
  %v70 = vld [vmem:[%s0 + $0x118] sm:$0xff]
  %v71 = vld [vmem:[%s0 + $0x120] sm:$0xff]
  %v72 = vld [vmem:[%s0 + $0x128] sm:$0xff]
  %v73 = vld [vmem:[%s0 + $0x130] sm:$0xff]
  %v74 = vld [vmem:[%s0 + $0x138] sm:$0xff]
  %v75 = vld [vmem:[%s0 + $0x140] sm:$0xff]
  %v76 = vld [vmem:[%s0 + $0x148] sm:$0xff]
  %v77 = vld [vmem:[%s0 + $0x150] sm:$0xff]
  %v78 = vld [vmem:[%s0 + $0x158] sm:$0xff]
  %v79 = vld [vmem:[%s0 + $0x160] sm:$0xff]
  %v80 = vld [vmem:[%s0 + $0x168] sm:$0xff]
  %v81 = vld [vmem:[%s0 + $0x170] sm:$0xff]
  %v82 = vld [vmem:[%s0 + $0x178] sm:$0xff]
  %v83 = vld [vmem:[%s0 + $0x180] sm:$0xff]
  %v84 = vld [vmem:[%s2] sm:$0xff]
  %v85 = vld [vmem:[%s2 + $0x8] sm:$0xff]
  %v86 = vld [vmem:[%s2 + $0x10] sm:$0xff]
  %v87 = vld [vmem:[%s2 + $0x18] sm:$0xff]
  %v88 = vld [vmem:[%s2 + $0x20] sm:$0xff]
  %v89 = vld [vmem:[%s3] sm:$0x1]
  %v91 = vlaneseq
  %v92 = vshrl.u32 %v91, 7
  %v93 = vsub.s32 0, %v92
  %v94 = vrot.slane %v89, %v93
  %vm96 = vcmask 326656
  %v98 = vsel %vm96, %v35, 0
  %v101 = vsel %vm96, %v36, 0
  %v104 = vsel %vm96, %v37, 0
  %v107 = vsel %vm96, %v38, 0
  %v110 = vsel %vm96, %v39, 0
  %v113 = vsel %vm96, %v40, 0
  %v116 = vsel %vm96, %v41, 0
  %v119 = vsel %vm96, %v42, 0
  %v122 = vsel %vm96, %v43, 0
  %v125 = vsel %vm96, %v44, 0
  %v128 = vsel %vm96, %v45, 0
  %v131 = vsel %vm96, %v46, 0
  %v134 = vsel %vm96, %v47, 0
  %v137 = vsel %vm96, %v48, 0
  %v140 = vsel %vm96, %v49, 0
  %v143 = vsel %vm96, %v50, 0
  %v146 = vsel %vm96, %v51, 0
  %v149 = vsel %vm96, %v52, 0
  %v152 = vsel %vm96, %v53, 0
  %v155 = vsel %vm96, %v54, 0
  %v158 = vsel %vm96, %v55, 0
  %v161 = vsel %vm96, %v56, 0
  %v164 = vsel %vm96, %v57, 0
  %v167 = vsel %vm96, %v58, 0
  %v170 = vsel %vm96, %v59, 0
  %v173 = vsel %vm96, %v60, 0
  %v176 = vsel %vm96, %v61, 0
  %v179 = vsel %vm96, %v62, 0
  %v182 = vsel %vm96, %v63, 0
  %v185 = vsel %vm96, %v64, 0
  %v188 = vsel %vm96, %v65, 0
  %v191 = vsel %vm96, %v66, 0
  %v194 = vsel %vm96, %v67, 0
  %v197 = vsel %vm96, %v68, 0
  %v200 = vsel %vm96, %v69, 0
  %v203 = vsel %vm96, %v70, 0
  %v206 = vsel %vm96, %v71, 0
  %v209 = vsel %vm96, %v72, 0
  %v212 = vsel %vm96, %v73, 0
  %v215 = vsel %vm96, %v74, 0
  %v218 = vsel %vm96, %v75, 0
  %v221 = vsel %vm96, %v76, 0
  %v224 = vsel %vm96, %v77, 0
  %v227 = vsel %vm96, %v78, 0
  %v230 = vsel %vm96, %v79, 0
  %v233 = vsel %vm96, %v80, 0
  %v236 = vsel %vm96, %v81, 0
  %v239 = vsel %vm96, %v82, 0
  %v242 = vsel %vm96, %v83, 0
  %244 = vmatprep.subr.mxu0 0.0
  %245 = vmatpush1.msra.mxu0 %v84
  %246 = vmatprep.subr.mxu0 0.0
  %247 = vmatpush1.msra.mxu0 %v85
  %248 = vmatprep.subr.mxu0 0.0
  %249 = vmatpush1.msra.mxu0 %v86
  %250 = vmatprep.subr.mxu0 0.0
  %251 = vmatpush1.msra.mxu0 %v87
  %252 = vmatprep.subr.mxu0 0.0
  %253 = vmatpush1.msra.mxu0 %v88
  %254 = vmatprep.subr.mxu0 0.0
  %255 = vmatpush1.msra.mxu0 0.0
  %256 = vmatprep.subr.mxu0 0.0
  %257 = vmatpush1.msra.mxu0 0.0
  %258 = vmatprep.subr.mxu0 0.0
  %259 = vmatpush1.msra.mxu0 0.0
  %260 = vmatprep.subr.mxu0 0.0
  %261 = vmatpush1.msra.mxu0 0.0
  %262 = vmatprep.subr.mxu0 0.0
  %263 = vmatpush1.msra.mxu0 0.0
  %264 = vmatprep.subr.mxu0 0.0
  %265 = vmatpush1.msra.mxu0 0.0
  %266 = vmatprep.subr.mxu0 0.0
  %267 = vmatpush1.msra.mxu0 0.0
  %268 = vmatprep.subr.mxu0 0.0
  %269 = vmatpush1.msra.mxu0 0.0
  %270 = vmatprep.subr.mxu0 0.0
  %271 = vmatpush1.msra.mxu0 0.0
  %272 = vmatprep.subr.mxu0 0.0
  %273 = vmatpush1.msra.mxu0 0.0
  %274 = vmatprep.subr.mxu0 0.0
  %275 = vmatpush1.msra.mxu0 0.0
  %276 = vmatprep.subr.mxu0 0.0
  %277 = vmatpush1.msra.mxu0 0.0
  %278 = vmatprep.subr.mxu0 0.0
  %279 = vmatpush1.msra.mxu0 0.0
  %280 = vmatprep.subr.mxu0 0.0
  %281 = vmatpush1.msra.mxu0 0.0
  %282 = vmatprep.subr.mxu0 0.0
  %283 = vmatpush1.msra.mxu0 0.0
  %284 = vmatprep.subr.mxu0 0.0
  %285 = vmatpush1.msra.mxu0 0.0
  %286 = vmatprep.subr.mxu0 0.0
  %287 = vmatpush1.msra.mxu0 0.0
  %288 = vmatprep.subr.mxu0 0.0
  %289 = vmatpush1.msra.mxu0 0.0
  %290 = vmatprep.subr.mxu0 0.0
  %291 = vmatpush1.msra.mxu0 0.0
  %292 = vmatprep.subr.mxu0 0.0
  %293 = vmatpush1.msra.mxu0 0.0
  %294 = vmatprep.subr.mxu0 0.0
  %295 = vmatpush1.msra.mxu0 0.0
  %296 = vmatprep.subr.mxu0 0.0
  %297 = vmatpush1.msra.mxu0 0.0
  %298 = vmatprep.subr.mxu0 0.0
  %299 = vmatpush1.msra.mxu0 0.0
  %300 = vmatprep.subr.mxu0 0.0
  %301 = vmatpush1.msra.mxu0 0.0
  %302 = vmatprep.subr.mxu0 0.0
  %303 = vmatpush1.msra.mxu0 0.0
  %304 = vmatprep.subr.mxu0 0.0
  %305 = vmatpush1.msra.mxu0 0.0
  %306 = vmatprep.subr.mxu0 0.0
  %307 = vmatpush1.msra.mxu0 0.0
  %308 = vmatprep.mubr.f32.mxu0 0.0
  %309 = vmatmul.mubr.f32.gmra.mrb[0].mxu0 %v98
  %v310 = vpop.f32.mrb[0].mxu0
  %v311 = vadd.f32 %v94, %v310
  %v312 = vpop.f32.mrb[0].mxu0
  %313 = vmatprep.mubr.f32.mxu0 0.0
  %314 = vmatmul.mubr.f32.gmra.mrb[0].mxu0 %v101
  %v315 = vpop.f32.mrb[0].mxu0
  %v316 = vadd.f32 %v94, %v315
  %v317 = vpop.f32.mrb[0].mxu0
  %318 = vmatprep.mubr.f32.mxu0 0.0
  %319 = vmatmul.mubr.f32.gmra.mrb[0].mxu0 %v104
  %v320 = vpop.f32.mrb[0].mxu0
  %v321 = vadd.f32 %v94, %v320
  %v322 = vpop.f32.mrb[0].mxu0
  %323 = vmatprep.mubr.f32.mxu0 0.0
  %324 = vmatmul.mubr.f32.gmra.mrb[0].mxu0 %v107
  %v325 = vpop.f32.mrb[0].mxu0
  %v326 = vadd.f32 %v94, %v325
  %v327 = vpop.f32.mrb[0].mxu0
  %328 = vmatprep.mubr.f32.mxu0 0.0
  %329 = vmatmul.mubr.f32.gmra.mrb[0].mxu0 %v110
  %v330 = vpop.f32.mrb[0].mxu0
  %v331 = vadd.f32 %v94, %v330
  %v332 = vpop.f32.mrb[0].mxu0
  %333 = vmatprep.mubr.f32.mxu0 0.0
  %334 = vmatmul.mubr.f32.gmra.mrb[0].mxu0 %v113
  %v335 = vpop.f32.mrb[0].mxu0
  %v336 = vadd.f32 %v94, %v335
  %v337 = vpop.f32.mrb[0].mxu0
  %338 = vmatprep.mubr.f32.mxu0 0.0
  %339 = vmatmul.mubr.f32.gmra.mrb[0].mxu0 %v116
  %v340 = vpop.f32.mrb[0].mxu0
  %v341 = vadd.f32 %v94, %v340
  %v342 = vpop.f32.mrb[0].mxu0
  %343 = vmatprep.mubr.f32.mxu0 0.0
  %344 = vmatmul.mubr.f32.gmra.mrb[0].mxu0 %v119
  %v345 = vpop.f32.mrb[0].mxu0
  %v346 = vadd.f32 %v94, %v345
  %v347 = vpop.f32.mrb[0].mxu0
  %348 = vmatprep.mubr.f32.mxu0 0.0
  %349 = vmatmul.mubr.f32.gmra.mrb[0].mxu0 %v122
  %v350 = vpop.f32.mrb[0].mxu0
  %v351 = vadd.f32 %v94, %v350
  %v352 = vpop.f32.mrb[0].mxu0
  %353 = vmatprep.mubr.f32.mxu0 0.0
  %354 = vmatmul.mubr.f32.gmra.mrb[0].mxu0 %v125
  %v355 = vpop.f32.mrb[0].mxu0
  %v356 = vadd.f32 %v94, %v355
  %v357 = vpop.f32.mrb[0].mxu0
  %358 = vmatprep.mubr.f32.mxu0 0.0
  %359 = vmatmul.mubr.f32.gmra.mrb[0].mxu0 %v128
  %v360 = vpop.f32.mrb[0].mxu0
  %v361 = vadd.f32 %v94, %v360
  %v362 = vpop.f32.mrb[0].mxu0
  %363 = vmatprep.mubr.f32.mxu0 0.0
  %364 = vmatmul.mubr.f32.gmra.mrb[0].mxu0 %v131
  %v365 = vpop.f32.mrb[0].mxu0
  %v366 = vadd.f32 %v94, %v365
  %v367 = vpop.f32.mrb[0].mxu0
  %368 = vmatprep.mubr.f32.mxu0 0.0
  %369 = vmatmul.mubr.f32.gmra.mrb[0].mxu0 %v134
  %v370 = vpop.f32.mrb[0].mxu0
  %v371 = vadd.f32 %v94, %v370
  %v372 = vpop.f32.mrb[0].mxu0
  %373 = vmatprep.mubr.f32.mxu0 0.0
  %374 = vmatmul.mubr.f32.gmra.mrb[0].mxu0 %v137
  %v375 = vpop.f32.mrb[0].mxu0
  %v376 = vadd.f32 %v94, %v375
  %v377 = vpop.f32.mrb[0].mxu0
  %378 = vmatprep.mubr.f32.mxu0 0.0
  %379 = vmatmul.mubr.f32.gmra.mrb[0].mxu0 %v140
  %v380 = vpop.f32.mrb[0].mxu0
  %v381 = vadd.f32 %v94, %v380
  %v382 = vpop.f32.mrb[0].mxu0
  %383 = vmatprep.mubr.f32.mxu0 0.0
  %384 = vmatmul.mubr.f32.gmra.mrb[0].mxu0 %v143
  %v385 = vpop.f32.mrb[0].mxu0
  %v386 = vadd.f32 %v94, %v385
  %v387 = vpop.f32.mrb[0].mxu0
  %388 = vmatprep.mubr.f32.mxu0 0.0
  %389 = vmatmul.mubr.f32.gmra.mrb[0].mxu0 %v146
  %v390 = vpop.f32.mrb[0].mxu0
  %v391 = vadd.f32 %v94, %v390
  %v392 = vpop.f32.mrb[0].mxu0
  %393 = vmatprep.mubr.f32.mxu0 0.0
  %394 = vmatmul.mubr.f32.gmra.mrb[0].mxu0 %v149
  %v395 = vpop.f32.mrb[0].mxu0
  %v396 = vadd.f32 %v94, %v395
  %v397 = vpop.f32.mrb[0].mxu0
  %398 = vmatprep.mubr.f32.mxu0 0.0
  %399 = vmatmul.mubr.f32.gmra.mrb[0].mxu0 %v152
  %v400 = vpop.f32.mrb[0].mxu0
  %v401 = vadd.f32 %v94, %v400
  %v402 = vpop.f32.mrb[0].mxu0
  %403 = vmatprep.mubr.f32.mxu0 0.0
  %404 = vmatmul.mubr.f32.gmra.mrb[0].mxu0 %v155
  %v405 = vpop.f32.mrb[0].mxu0
  %v406 = vadd.f32 %v94, %v405
  %v407 = vpop.f32.mrb[0].mxu0
  %408 = vmatprep.mubr.f32.mxu0 0.0
  %409 = vmatmul.mubr.f32.gmra.mrb[0].mxu0 %v158
  %v410 = vpop.f32.mrb[0].mxu0
  %v411 = vadd.f32 %v94, %v410
  %v412 = vpop.f32.mrb[0].mxu0
  %413 = vmatprep.mubr.f32.mxu0 0.0
  %414 = vmatmul.mubr.f32.gmra.mrb[0].mxu0 %v161
  %v415 = vpop.f32.mrb[0].mxu0
  %v416 = vadd.f32 %v94, %v415
  %v417 = vpop.f32.mrb[0].mxu0
  %418 = vmatprep.mubr.f32.mxu0 0.0
  %419 = vmatmul.mubr.f32.gmra.mrb[0].mxu0 %v164
  %v420 = vpop.f32.mrb[0].mxu0
  %v421 = vadd.f32 %v94, %v420
  %v422 = vpop.f32.mrb[0].mxu0
  %423 = vmatprep.mubr.f32.mxu0 0.0
  %424 = vmatmul.mubr.f32.gmra.mrb[0].mxu0 %v167
  %v425 = vpop.f32.mrb[0].mxu0
  %v426 = vadd.f32 %v94, %v425
  %v427 = vpop.f32.mrb[0].mxu0
  %428 = vmatprep.mubr.f32.mxu0 0.0
  %429 = vmatmul.mubr.f32.gmra.mrb[0].mxu0 %v170
  %v430 = vpop.f32.mrb[0].mxu0
  %v431 = vadd.f32 %v94, %v430
  %v432 = vpop.f32.mrb[0].mxu0
  %433 = vmatprep.mubr.f32.mxu0 0.0
  %434 = vmatmul.mubr.f32.gmra.mrb[0].mxu0 %v173
  %v435 = vpop.f32.mrb[0].mxu0
  %v436 = vadd.f32 %v94, %v435
  %v437 = vpop.f32.mrb[0].mxu0
  %438 = vmatprep.mubr.f32.mxu0 0.0
  %439 = vmatmul.mubr.f32.gmra.mrb[0].mxu0 %v176
  %v440 = vpop.f32.mrb[0].mxu0
  %v441 = vadd.f32 %v94, %v440
  %v442 = vpop.f32.mrb[0].mxu0
  %443 = vmatprep.mubr.f32.mxu0 0.0
  %444 = vmatmul.mubr.f32.gmra.mrb[0].mxu0 %v179
  %v445 = vpop.f32.mrb[0].mxu0
  %v446 = vadd.f32 %v94, %v445
  %v447 = vpop.f32.mrb[0].mxu0
  %448 = vmatprep.mubr.f32.mxu0 0.0
  %449 = vmatmul.mubr.f32.gmra.mrb[0].mxu0 %v182
  %v450 = vpop.f32.mrb[0].mxu0
  %v451 = vadd.f32 %v94, %v450
  %v452 = vpop.f32.mrb[0].mxu0
  %453 = vmatprep.mubr.f32.mxu0 0.0
  %454 = vmatmul.mubr.f32.gmra.mrb[0].mxu0 %v185
  %v455 = vpop.f32.mrb[0].mxu0
  %v456 = vadd.f32 %v94, %v455
  %v457 = vpop.f32.mrb[0].mxu0
  %458 = vmatprep.mubr.f32.mxu0 0.0
  %459 = vmatmul.mubr.f32.gmra.mrb[0].mxu0 %v188
  %v460 = vpop.f32.mrb[0].mxu0
  %v461 = vadd.f32 %v94, %v460
  %v462 = vpop.f32.mrb[0].mxu0
  %463 = vmatprep.mubr.f32.mxu0 0.0
  %464 = vmatmul.mubr.f32.gmra.mrb[0].mxu0 %v191
  %v465 = vpop.f32.mrb[0].mxu0
  %v466 = vadd.f32 %v94, %v465
  %v467 = vpop.f32.mrb[0].mxu0
  %468 = vmatprep.mubr.f32.mxu0 0.0
  %469 = vmatmul.mubr.f32.gmra.mrb[0].mxu0 %v194
  %v470 = vpop.f32.mrb[0].mxu0
  %v471 = vadd.f32 %v94, %v470
  %v472 = vpop.f32.mrb[0].mxu0
  %473 = vmatprep.mubr.f32.mxu0 0.0
  %474 = vmatmul.mubr.f32.gmra.mrb[0].mxu0 %v197
  %v475 = vpop.f32.mrb[0].mxu0
  %v476 = vadd.f32 %v94, %v475
  %v477 = vpop.f32.mrb[0].mxu0
  %478 = vmatprep.mubr.f32.mxu0 0.0
  %479 = vmatmul.mubr.f32.gmra.mrb[0].mxu0 %v200
  %v480 = vpop.f32.mrb[0].mxu0
  %v481 = vadd.f32 %v94, %v480
  %v482 = vpop.f32.mrb[0].mxu0
  %483 = vmatprep.mubr.f32.mxu0 0.0
  %484 = vmatmul.mubr.f32.gmra.mrb[0].mxu0 %v203
  %v485 = vpop.f32.mrb[0].mxu0
  %v486 = vadd.f32 %v94, %v485
  %v487 = vpop.f32.mrb[0].mxu0
  %488 = vmatprep.mubr.f32.mxu0 0.0
  %489 = vmatmul.mubr.f32.gmra.mrb[0].mxu0 %v206
  %v490 = vpop.f32.mrb[0].mxu0
  %v491 = vadd.f32 %v94, %v490
  %v492 = vpop.f32.mrb[0].mxu0
  %493 = vmatprep.mubr.f32.mxu0 0.0
  %494 = vmatmul.mubr.f32.gmra.mrb[0].mxu0 %v209
  %v495 = vpop.f32.mrb[0].mxu0
  %v496 = vadd.f32 %v94, %v495
  %v497 = vpop.f32.mrb[0].mxu0
  %498 = vmatprep.mubr.f32.mxu0 0.0
  %499 = vmatmul.mubr.f32.gmra.mrb[0].mxu0 %v212
  %v500 = vpop.f32.mrb[0].mxu0
  %v501 = vadd.f32 %v94, %v500
  %v502 = vpop.f32.mrb[0].mxu0
  %503 = vmatprep.mubr.f32.mxu0 0.0
  %504 = vmatmul.mubr.f32.gmra.mrb[0].mxu0 %v215
  %v505 = vpop.f32.mrb[0].mxu0
  %v506 = vadd.f32 %v94, %v505
  %v507 = vpop.f32.mrb[0].mxu0
  %508 = vmatprep.mubr.f32.mxu0 0.0
  %509 = vmatmul.mubr.f32.gmra.mrb[0].mxu0 %v218
  %v510 = vpop.f32.mrb[0].mxu0
  %v511 = vadd.f32 %v94, %v510
  %v512 = vpop.f32.mrb[0].mxu0
  %513 = vmatprep.mubr.f32.mxu0 0.0
  %514 = vmatmul.mubr.f32.gmra.mrb[0].mxu0 %v221
  %v515 = vpop.f32.mrb[0].mxu0
  %v516 = vadd.f32 %v94, %v515
  %v517 = vpop.f32.mrb[0].mxu0
  %518 = vmatprep.mubr.f32.mxu0 0.0
  %519 = vmatmul.mubr.f32.gmra.mrb[0].mxu0 %v224
  %v520 = vpop.f32.mrb[0].mxu0
  %v521 = vadd.f32 %v94, %v520
  %v522 = vpop.f32.mrb[0].mxu0
  %523 = vmatprep.mubr.f32.mxu0 0.0
  %524 = vmatmul.mubr.f32.gmra.mrb[0].mxu0 %v227
  %v525 = vpop.f32.mrb[0].mxu0
  %v526 = vadd.f32 %v94, %v525
  %v527 = vpop.f32.mrb[0].mxu0
  %528 = vmatprep.mubr.f32.mxu0 0.0
  %529 = vmatmul.mubr.f32.gmra.mrb[0].mxu0 %v230
  %v530 = vpop.f32.mrb[0].mxu0
  %v531 = vadd.f32 %v94, %v530
  %v532 = vpop.f32.mrb[0].mxu0
  %533 = vmatprep.mubr.f32.mxu0 0.0
  %534 = vmatmul.mubr.f32.gmra.mrb[0].mxu0 %v233
  %v535 = vpop.f32.mrb[0].mxu0
  %v536 = vadd.f32 %v94, %v535
  %v537 = vpop.f32.mrb[0].mxu0
  %538 = vmatprep.mubr.f32.mxu0 0.0
  %539 = vmatmul.mubr.f32.gmra.mrb[0].mxu0 %v236
  %v540 = vpop.f32.mrb[0].mxu0
  %v541 = vadd.f32 %v94, %v540
  %v542 = vpop.f32.mrb[0].mxu0
  %543 = vmatprep.mubr.f32.mxu0 0.0
  %544 = vmatmul.mubr.f32.gmra.mrb[0].mxu0 %v239
  %v545 = vpop.f32.mrb[0].mxu0
  %v546 = vadd.f32 %v94, %v545
  %v547 = vpop.f32.mrb[0].mxu0
  %548 = vmatprep.mubr.f32.mxu0 0.0
  %549 = vmatmul.mubr.f32.gmra.mrb[0].mxu0 %v242
  %v550 = vpop.f32.mrb[0].mxu0
  %v551 = vadd.f32 %v94, %v550
  %v552 = vpop.f32.mrb[0].mxu0
  %553 = vdwg.mxu0
  %v554 = vmax.f32 %v311, 0.0
  %v555 = vmax.f32 %v316, 0.0
  %v556 = vmax.f32 %v321, 0.0
  %v557 = vmax.f32 %v326, 0.0
  %v558 = vmax.f32 %v331, 0.0
  %v559 = vmax.f32 %v336, 0.0
  %v560 = vmax.f32 %v341, 0.0
  %v561 = vmax.f32 %v346, 0.0
  %v562 = vmax.f32 %v351, 0.0
  %v563 = vmax.f32 %v356, 0.0
  %v564 = vmax.f32 %v361, 0.0
  %v565 = vmax.f32 %v366, 0.0
  %v566 = vmax.f32 %v371, 0.0
  %v567 = vmax.f32 %v376, 0.0
  %v568 = vmax.f32 %v381, 0.0
  %v569 = vmax.f32 %v386, 0.0
  %v570 = vmax.f32 %v391, 0.0
  %v571 = vmax.f32 %v396, 0.0
  %v572 = vmax.f32 %v401, 0.0
  %v573 = vmax.f32 %v406, 0.0
  %v574 = vmax.f32 %v411, 0.0
  %v575 = vmax.f32 %v416, 0.0
  %v576 = vmax.f32 %v421, 0.0
  %v577 = vmax.f32 %v426, 0.0
  %v578 = vmax.f32 %v431, 0.0
  %v579 = vmax.f32 %v436, 0.0
  %v580 = vmax.f32 %v441, 0.0
  %v581 = vmax.f32 %v446, 0.0
  %v582 = vmax.f32 %v451, 0.0
  %v583 = vmax.f32 %v456, 0.0
  %v584 = vmax.f32 %v461, 0.0
  %v585 = vmax.f32 %v466, 0.0
  %v586 = vmax.f32 %v471, 0.0
  %v587 = vmax.f32 %v476, 0.0
  %v588 = vmax.f32 %v481, 0.0
  %v589 = vmax.f32 %v486, 0.0
  %v590 = vmax.f32 %v491, 0.0
  %v591 = vmax.f32 %v496, 0.0
  %v592 = vmax.f32 %v501, 0.0
  %v593 = vmax.f32 %v506, 0.0
  %v594 = vmax.f32 %v511, 0.0
  %v595 = vmax.f32 %v516, 0.0
  %v596 = vmax.f32 %v521, 0.0
  %v597 = vmax.f32 %v526, 0.0
  %v598 = vmax.f32 %v531, 0.0
  %v599 = vmax.f32 %v536, 0.0
  %v600 = vmax.f32 %v541, 0.0
  %v601 = vmax.f32 %v546, 0.0
  %v602 = vmax.f32 %v551, 0.0
  %v603 = vld [vmem:[%s1] sm:$0xff]
  %v604 = vld [vmem:[%s1 + $0x8] sm:$0xff]
  %v605 = vld [vmem:[%s1 + $0x10] sm:$0xff]
  %v606 = vld [vmem:[%s1 + $0x18] sm:$0xff]
  %v607 = vld [vmem:[%s1 + $0x20] sm:$0xff]
  %v608 = vld [vmem:[%s1 + $0x28] sm:$0xff]
  %v609 = vld [vmem:[%s1 + $0x30] sm:$0xff]
  %v610 = vld [vmem:[%s1 + $0x38] sm:$0xff]
  %v611 = vld [vmem:[%s1 + $0x40] sm:$0xff]
  %v612 = vld [vmem:[%s1 + $0x48] sm:$0xff]
  %v613 = vld [vmem:[%s1 + $0x50] sm:$0xff]
  %v614 = vld [vmem:[%s1 + $0x58] sm:$0xff]
  %v615 = vld [vmem:[%s1 + $0x60] sm:$0xff]
  %v616 = vld [vmem:[%s1 + $0x68] sm:$0xff]
  %v617 = vld [vmem:[%s1 + $0x70] sm:$0xff]
  %v618 = vld [vmem:[%s1 + $0x78] sm:$0xff]
  %v619 = vld [vmem:[%s1 + $0x80] sm:$0xff]
  %v620 = vld [vmem:[%s1 + $0x88] sm:$0xff]
  %v621 = vld [vmem:[%s1 + $0x90] sm:$0xff]
  %v622 = vld [vmem:[%s1 + $0x98] sm:$0xff]
  %v623 = vld [vmem:[%s1 + $0xa0] sm:$0xff]
  %v624 = vld [vmem:[%s1 + $0xa8] sm:$0xff]
  %v625 = vld [vmem:[%s1 + $0xb0] sm:$0xff]
  %v626 = vld [vmem:[%s1 + $0xb8] sm:$0xff]
  %v627 = vld [vmem:[%s1 + $0xc0] sm:$0xff]
  %v628 = vld [vmem:[%s1 + $0xc8] sm:$0xff]
  %v629 = vld [vmem:[%s1 + $0xd0] sm:$0xff]
  %v630 = vld [vmem:[%s1 + $0xd8] sm:$0xff]
  %v631 = vld [vmem:[%s1 + $0xe0] sm:$0xff]
  %v632 = vld [vmem:[%s1 + $0xe8] sm:$0xff]
  %v633 = vld [vmem:[%s1 + $0xf0] sm:$0xff]
  %v634 = vld [vmem:[%s1 + $0xf8] sm:$0xff]
  %v635 = vld [vmem:[%s1 + $0x100] sm:$0xff]
  %v636 = vld [vmem:[%s1 + $0x108] sm:$0xff]
  %v637 = vld [vmem:[%s1 + $0x110] sm:$0xff]
  %v638 = vld [vmem:[%s1 + $0x118] sm:$0xff]
  %v639 = vld [vmem:[%s1 + $0x120] sm:$0xff]
  %v640 = vld [vmem:[%s1 + $0x128] sm:$0xff]
  %v641 = vld [vmem:[%s1 + $0x130] sm:$0xff]
  %v642 = vld [vmem:[%s1 + $0x138] sm:$0xff]
  %v643 = vld [vmem:[%s1 + $0x140] sm:$0xff]
  %v644 = vld [vmem:[%s1 + $0x148] sm:$0xff]
  %v645 = vld [vmem:[%s1 + $0x150] sm:$0xff]
  %v646 = vld [vmem:[%s1 + $0x158] sm:$0xff]
  %v647 = vld [vmem:[%s1 + $0x160] sm:$0xff]
  %v648 = vld [vmem:[%s1 + $0x168] sm:$0xff]
  %v649 = vld [vmem:[%s1 + $0x170] sm:$0xff]
  %v650 = vld [vmem:[%s1 + $0x178] sm:$0xff]
  %v651 = vld [vmem:[%s1 + $0x180] sm:$0xff]
  %653 = vset.pattern.permute.xlu0 0
  %654 = vperm.xlu0 %653, %v603
  %v655 = vpop.permute.xlu0 %654
  %658 = vset.pattern.permute.xlu0 0
  %659 = vperm.xlu0 %658, %v604
  %v660 = vpop.permute.xlu0 %659
  %663 = vset.pattern.permute.xlu0 0
  %664 = vperm.xlu0 %663, %v605
  %v665 = vpop.permute.xlu0 %664
  %668 = vset.pattern.permute.xlu0 0
  %669 = vperm.xlu0 %668, %v606
  %v670 = vpop.permute.xlu0 %669
  %673 = vset.pattern.permute.xlu0 0
  %674 = vperm.xlu0 %673, %v607
  %v675 = vpop.permute.xlu0 %674
  %678 = vset.pattern.permute.xlu0 0
  %679 = vperm.xlu0 %678, %v608
  %v680 = vpop.permute.xlu0 %679
  %683 = vset.pattern.permute.xlu0 0
  %684 = vperm.xlu0 %683, %v609
  %v685 = vpop.permute.xlu0 %684
  %688 = vset.pattern.permute.xlu0 0
  %689 = vperm.xlu0 %688, %v610
  %v690 = vpop.permute.xlu0 %689
  %693 = vset.pattern.permute.xlu0 0
  %694 = vperm.xlu0 %693, %v611
  %v695 = vpop.permute.xlu0 %694
  %698 = vset.pattern.permute.xlu0 0
  %699 = vperm.xlu0 %698, %v612
  %v700 = vpop.permute.xlu0 %699
  %703 = vset.pattern.permute.xlu0 0
  %704 = vperm.xlu0 %703, %v613
  %v705 = vpop.permute.xlu0 %704
  %708 = vset.pattern.permute.xlu0 0
  %709 = vperm.xlu0 %708, %v614
  %v710 = vpop.permute.xlu0 %709
  %713 = vset.pattern.permute.xlu0 0
  %714 = vperm.xlu0 %713, %v615
  %v715 = vpop.permute.xlu0 %714
  %718 = vset.pattern.permute.xlu0 0
  %719 = vperm.xlu0 %718, %v616
  %v720 = vpop.permute.xlu0 %719
  %723 = vset.pattern.permute.xlu0 0
  %724 = vperm.xlu0 %723, %v617
  %v725 = vpop.permute.xlu0 %724
  %728 = vset.pattern.permute.xlu0 0
  %729 = vperm.xlu0 %728, %v618
  %v730 = vpop.permute.xlu0 %729
  %733 = vset.pattern.permute.xlu0 0
  %734 = vperm.xlu0 %733, %v619
  %v735 = vpop.permute.xlu0 %734
  %738 = vset.pattern.permute.xlu0 0
  %739 = vperm.xlu0 %738, %v620
  %v740 = vpop.permute.xlu0 %739
  %743 = vset.pattern.permute.xlu0 0
  %744 = vperm.xlu0 %743, %v621
  %v745 = vpop.permute.xlu0 %744
  %748 = vset.pattern.permute.xlu0 0
  %749 = vperm.xlu0 %748, %v622
  %v750 = vpop.permute.xlu0 %749
  %753 = vset.pattern.permute.xlu0 0
  %754 = vperm.xlu0 %753, %v623
  %v755 = vpop.permute.xlu0 %754
  %758 = vset.pattern.permute.xlu0 0
  %759 = vperm.xlu0 %758, %v624
  %v760 = vpop.permute.xlu0 %759
  %763 = vset.pattern.permute.xlu0 0
  %764 = vperm.xlu0 %763, %v625
  %v765 = vpop.permute.xlu0 %764
  %768 = vset.pattern.permute.xlu0 0
  %769 = vperm.xlu0 %768, %v626
  %v770 = vpop.permute.xlu0 %769
  %773 = vset.pattern.permute.xlu0 0
  %774 = vperm.xlu0 %773, %v627
  %v775 = vpop.permute.xlu0 %774
  %778 = vset.pattern.permute.xlu0 0
  %779 = vperm.xlu0 %778, %v628
  %v780 = vpop.permute.xlu0 %779
  %783 = vset.pattern.permute.xlu0 0
  %784 = vperm.xlu0 %783, %v629
  %v785 = vpop.permute.xlu0 %784
  %788 = vset.pattern.permute.xlu0 0
  %789 = vperm.xlu0 %788, %v630
  %v790 = vpop.permute.xlu0 %789
  %793 = vset.pattern.permute.xlu0 0
  %794 = vperm.xlu0 %793, %v631
  %v795 = vpop.permute.xlu0 %794
  %798 = vset.pattern.permute.xlu0 0
  %799 = vperm.xlu0 %798, %v632
  %v800 = vpop.permute.xlu0 %799
  %803 = vset.pattern.permute.xlu0 0
  %804 = vperm.xlu0 %803, %v633
  %v805 = vpop.permute.xlu0 %804
  %808 = vset.pattern.permute.xlu0 0
  %809 = vperm.xlu0 %808, %v634
  %v810 = vpop.permute.xlu0 %809
  %813 = vset.pattern.permute.xlu0 0
  %814 = vperm.xlu0 %813, %v635
  %v815 = vpop.permute.xlu0 %814
  %818 = vset.pattern.permute.xlu0 0
  %819 = vperm.xlu0 %818, %v636
  %v820 = vpop.permute.xlu0 %819
  %823 = vset.pattern.permute.xlu0 0
  %824 = vperm.xlu0 %823, %v637
  %v825 = vpop.permute.xlu0 %824
  %828 = vset.pattern.permute.xlu0 0
  %829 = vperm.xlu0 %828, %v638
  %v830 = vpop.permute.xlu0 %829
  %833 = vset.pattern.permute.xlu0 0
  %834 = vperm.xlu0 %833, %v639
  %v835 = vpop.permute.xlu0 %834
  %838 = vset.pattern.permute.xlu0 0
  %839 = vperm.xlu0 %838, %v640
  %v840 = vpop.permute.xlu0 %839
  %843 = vset.pattern.permute.xlu0 0
  %844 = vperm.xlu0 %843, %v641
  %v845 = vpop.permute.xlu0 %844
  %848 = vset.pattern.permute.xlu0 0
  %849 = vperm.xlu0 %848, %v642
  %v850 = vpop.permute.xlu0 %849
  %853 = vset.pattern.permute.xlu0 0
  %854 = vperm.xlu0 %853, %v643
  %v855 = vpop.permute.xlu0 %854
  %858 = vset.pattern.permute.xlu0 0
  %859 = vperm.xlu0 %858, %v644
  %v860 = vpop.permute.xlu0 %859
  %863 = vset.pattern.permute.xlu0 0
  %864 = vperm.xlu0 %863, %v645
  %v865 = vpop.permute.xlu0 %864
  %868 = vset.pattern.permute.xlu0 0
  %869 = vperm.xlu0 %868, %v646
  %v870 = vpop.permute.xlu0 %869
  %873 = vset.pattern.permute.xlu0 0
  %874 = vperm.xlu0 %873, %v647
  %v875 = vpop.permute.xlu0 %874
  %878 = vset.pattern.permute.xlu0 0
  %879 = vperm.xlu0 %878, %v648
  %v880 = vpop.permute.xlu0 %879
  %883 = vset.pattern.permute.xlu0 0
  %884 = vperm.xlu0 %883, %v649
  %v885 = vpop.permute.xlu0 %884
  %888 = vset.pattern.permute.xlu0 0
  %889 = vperm.xlu0 %888, %v650
  %v890 = vpop.permute.xlu0 %889
  %893 = vset.pattern.permute.xlu0 0
  %894 = vperm.xlu0 %893, %v651
  %v895 = vpop.permute.xlu0 %894
  %v897 = vmul.f32 %v554, %v655
  %v898 = vmul.f32 %v555, %v660
  %v899 = vmul.f32 %v556, %v665
  %v900 = vmul.f32 %v557, %v670
  %v901 = vmul.f32 %v558, %v675
  %v902 = vmul.f32 %v559, %v680
  %v903 = vmul.f32 %v560, %v685
  %v904 = vmul.f32 %v561, %v690
  %v905 = vmul.f32 %v562, %v695
  %v906 = vmul.f32 %v563, %v700
  %v907 = vmul.f32 %v564, %v705
  %v908 = vmul.f32 %v565, %v710
  %v909 = vmul.f32 %v566, %v715
  %v910 = vmul.f32 %v567, %v720
  %v911 = vmul.f32 %v568, %v725
  %v912 = vmul.f32 %v569, %v730
  %v913 = vmul.f32 %v570, %v735
  %v914 = vmul.f32 %v571, %v740
  %v915 = vmul.f32 %v572, %v745
  %v916 = vmul.f32 %v573, %v750
  %v917 = vmul.f32 %v574, %v755
  %v918 = vmul.f32 %v575, %v760
  %v919 = vmul.f32 %v576, %v765
  %v920 = vmul.f32 %v577, %v770
  %v921 = vmul.f32 %v578, %v775
  %v922 = vmul.f32 %v579, %v780
  %v923 = vmul.f32 %v580, %v785
  %v924 = vmul.f32 %v581, %v790
  %v925 = vmul.f32 %v582, %v795
  %v926 = vmul.f32 %v583, %v800
  %v927 = vmul.f32 %v584, %v805
  %v928 = vmul.f32 %v585, %v810
  %v929 = vmul.f32 %v586, %v815
  %v930 = vmul.f32 %v587, %v820
  %v931 = vmul.f32 %v588, %v825
  %v932 = vmul.f32 %v589, %v830
  %v933 = vmul.f32 %v590, %v835
  %v934 = vmul.f32 %v591, %v840
  %v935 = vmul.f32 %v592, %v845
  %v936 = vmul.f32 %v593, %v850
  %v937 = vmul.f32 %v594, %v855
  %v938 = vmul.f32 %v595, %v860
  %v939 = vmul.f32 %v596, %v865
  %v940 = vmul.f32 %v597, %v870
  %v941 = vmul.f32 %v598, %v875
  %v942 = vmul.f32 %v599, %v880
  %v943 = vmul.f32 %v600, %v885
  %v944 = vmul.f32 %v601, %v890
  %v945 = vmul.f32 %v602, %v895
  %vm946 = vcmask 261120
  %947 = vst.msk [vmem:[#allocation2] sm:$0xff] %vm946, %v897
  %948 = vst.msk [vmem:[#allocation2 + $0x8] sm:$0xff] %vm946, %v898
  %949 = vst.msk [vmem:[#allocation2 + $0x10] sm:$0xff] %vm946, %v899
  %950 = vst.msk [vmem:[#allocation2 + $0x18] sm:$0xff] %vm946, %v900
  %951 = vst.msk [vmem:[#allocation2 + $0x20] sm:$0xff] %vm946, %v901
  %952 = vst.msk [vmem:[#allocation2 + $0x28] sm:$0xff] %vm946, %v902
  %953 = vst.msk [vmem:[#allocation2 + $0x30] sm:$0xff] %vm946, %v903
  %954 = vst.msk [vmem:[#allocation2 + $0x38] sm:$0xff] %vm946, %v904
  %955 = vst.msk [vmem:[#allocation2 + $0x40] sm:$0xff] %vm946, %v905
  %956 = vst.msk [vmem:[#allocation2 + $0x48] sm:$0xff] %vm946, %v906
  %957 = vst.msk [vmem:[#allocation2 + $0x50] sm:$0xff] %vm946, %v907
  %958 = vst.msk [vmem:[#allocation2 + $0x58] sm:$0xff] %vm946, %v908
  %959 = vst.msk [vmem:[#allocation2 + $0x60] sm:$0xff] %vm946, %v909
  %960 = vst.msk [vmem:[#allocation2 + $0x68] sm:$0xff] %vm946, %v910
  %961 = vst.msk [vmem:[#allocation2 + $0x70] sm:$0xff] %vm946, %v911
  %962 = vst.msk [vmem:[#allocation2 + $0x78] sm:$0xff] %vm946, %v912
  %963 = vst.msk [vmem:[#allocation2 + $0x80] sm:$0xff] %vm946, %v913
  %964 = vst.msk [vmem:[#allocation2 + $0x88] sm:$0xff] %vm946, %v914
  %965 = vst.msk [vmem:[#allocation2 + $0x90] sm:$0xff] %vm946, %v915
  %966 = vst.msk [vmem:[#allocation2 + $0x98] sm:$0xff] %vm946, %v916
  %967 = vst.msk [vmem:[#allocation2 + $0xa0] sm:$0xff] %vm946, %v917
  %968 = vst.msk [vmem:[#allocation2 + $0xa8] sm:$0xff] %vm946, %v918
  %969 = vst.msk [vmem:[#allocation2 + $0xb0] sm:$0xff] %vm946, %v919
  %970 = vst.msk [vmem:[#allocation2 + $0xb8] sm:$0xff] %vm946, %v920
  %971 = vst.msk [vmem:[#allocation2 + $0xc0] sm:$0xff] %vm946, %v921
  %972 = vst.msk [vmem:[#allocation2 + $0xc8] sm:$0xff] %vm946, %v922
  %973 = vst.msk [vmem:[#allocation2 + $0xd0] sm:$0xff] %vm946, %v923
  %974 = vst.msk [vmem:[#allocation2 + $0xd8] sm:$0xff] %vm946, %v924
  %975 = vst.msk [vmem:[#allocation2 + $0xe0] sm:$0xff] %vm946, %v925
  %976 = vst.msk [vmem:[#allocation2 + $0xe8] sm:$0xff] %vm946, %v926
  %977 = vst.msk [vmem:[#allocation2 + $0xf0] sm:$0xff] %vm946, %v927
  %978 = vst.msk [vmem:[#allocation2 + $0xf8] sm:$0xff] %vm946, %v928
  %979 = vst.msk [vmem:[#allocation2 + $0x100] sm:$0xff] %vm946, %v929
  %980 = vst.msk [vmem:[#allocation2 + $0x108] sm:$0xff] %vm946, %v930
  %981 = vst.msk [vmem:[#allocation2 + $0x110] sm:$0xff] %vm946, %v931
  %982 = vst.msk [vmem:[#allocation2 + $0x118] sm:$0xff] %vm946, %v932
  %983 = vst.msk [vmem:[#allocation2 + $0x120] sm:$0xff] %vm946, %v933
  %984 = vst.msk [vmem:[#allocation2 + $0x128] sm:$0xff] %vm946, %v934
  %985 = vst.msk [vmem:[#allocation2 + $0x130] sm:$0xff] %vm946, %v935
  %986 = vst.msk [vmem:[#allocation2 + $0x138] sm:$0xff] %vm946, %v936
  %987 = vst.msk [vmem:[#allocation2 + $0x140] sm:$0xff] %vm946, %v937
  %988 = vst.msk [vmem:[#allocation2 + $0x148] sm:$0xff] %vm946, %v938
  %989 = vst.msk [vmem:[#allocation2 + $0x150] sm:$0xff] %vm946, %v939
  %990 = vst.msk [vmem:[#allocation2 + $0x158] sm:$0xff] %vm946, %v940
  %991 = vst.msk [vmem:[#allocation2 + $0x160] sm:$0xff] %vm946, %v941
  %992 = vst.msk [vmem:[#allocation2 + $0x168] sm:$0xff] %vm946, %v942
  %993 = vst.msk [vmem:[#allocation2 + $0x170] sm:$0xff] %vm946, %v943
  %994 = vst.msk [vmem:[#allocation2 + $0x178] sm:$0xff] %vm946, %v944
  %995 = vst.msk [vmem:[#allocation2 + $0x180] sm:$0xff] %vm946, %v945
  %v996 = vld [vmem:[#allocation2] sm:$0xff]
  %v997 = vld [vmem:[#allocation2 + $0x8] sm:$0xff]
  %v998 = vld [vmem:[#allocation2 + $0x10] sm:$0xff]
  %v999 = vld [vmem:[#allocation2 + $0x18] sm:$0xff]
  %v1000 = vld [vmem:[#allocation2 + $0x20] sm:$0xff]
  %v1001 = vld [vmem:[#allocation2 + $0x28] sm:$0xff]
  %v1002 = vld [vmem:[#allocation2 + $0x30] sm:$0xff]
  %v1003 = vld [vmem:[#allocation2 + $0x38] sm:$0xff]
  %v1004 = vld [vmem:[#allocation2 + $0x40] sm:$0xff]
  %v1005 = vld [vmem:[#allocation2 + $0x48] sm:$0xff]
  %v1006 = vld [vmem:[#allocation2 + $0x50] sm:$0xff]
  %v1007 = vld [vmem:[#allocation2 + $0x58] sm:$0xff]
  %v1008 = vld [vmem:[#allocation2 + $0x60] sm:$0xff]
  %v1009 = vld [vmem:[#allocation2 + $0x68] sm:$0xff]
  %v1010 = vld [vmem:[#allocation2 + $0x70] sm:$0xff]
  %v1011 = vld [vmem:[#allocation2 + $0x78] sm:$0xff]
  %v1012 = vld [vmem:[#allocation2 + $0x80] sm:$0xff]
  %v1013 = vld [vmem:[#allocation2 + $0x88] sm:$0xff]
  %v1014 = vld [vmem:[#allocation2 + $0x90] sm:$0xff]
  %v1015 = vld [vmem:[#allocation2 + $0x98] sm:$0xff]
  %v1016 = vld [vmem:[#allocation2 + $0xa0] sm:$0xff]
  %v1017 = vld [vmem:[#allocation2 + $0xa8] sm:$0xff]
  %v1018 = vld [vmem:[#allocation2 + $0xb0] sm:$0xff]
  %v1019 = vld [vmem:[#allocation2 + $0xb8] sm:$0xff]
  %v1020 = vld [vmem:[#allocation2 + $0xc0] sm:$0xff]
  %v1021 = vld [vmem:[#allocation2 + $0xc8] sm:$0xff]
  %v1022 = vld [vmem:[#allocation2 + $0xd0] sm:$0xff]
  %v1023 = vld [vmem:[#allocation2 + $0xd8] sm:$0xff]
  %v1024 = vld [vmem:[#allocation2 + $0xe0] sm:$0xff]
  %v1025 = vld [vmem:[#allocation2 + $0xe8] sm:$0xff]
  %v1026 = vld [vmem:[#allocation2 + $0xf0] sm:$0xff]
  %v1027 = vld [vmem:[#allocation2 + $0xf8] sm:$0xff]
  %v1028 = vld [vmem:[#allocation2 + $0x100] sm:$0xff]
  %v1029 = vld [vmem:[#allocation2 + $0x108] sm:$0xff]
  %v1030 = vld [vmem:[#allocation2 + $0x110] sm:$0xff]
  %v1031 = vld [vmem:[#allocation2 + $0x118] sm:$0xff]
  %v1032 = vld [vmem:[#allocation2 + $0x120] sm:$0xff]
  %v1033 = vld [vmem:[#allocation2 + $0x128] sm:$0xff]
  %v1034 = vld [vmem:[#allocation2 + $0x130] sm:$0xff]
  %v1035 = vld [vmem:[#allocation2 + $0x138] sm:$0xff]
  %v1036 = vld [vmem:[#allocation2 + $0x140] sm:$0xff]
  %v1037 = vld [vmem:[#allocation2 + $0x148] sm:$0xff]
  %v1038 = vld [vmem:[#allocation2 + $0x150] sm:$0xff]
  %v1039 = vld [vmem:[#allocation2 + $0x158] sm:$0xff]
  %v1040 = vld [vmem:[#allocation2 + $0x160] sm:$0xff]
  %v1041 = vld [vmem:[#allocation2 + $0x168] sm:$0xff]
  %v1042 = vld [vmem:[#allocation2 + $0x170] sm:$0xff]
  %v1043 = vld [vmem:[#allocation2 + $0x178] sm:$0xff]
  %v1044 = vld [vmem:[#allocation2 + $0x180] sm:$0xff]
  %1078 = vrot.lane.b32.xlu0 %v997, 32
  %v1079 = vpop.permute.xlu0 %1078
  %1080 = vrot.lane.b32.xlu0 %v998, 32
  %v1081 = vpop.permute.xlu0 %1080
  %1082 = vrot.lane.b32.xlu0 %v999, 32
  %v1083 = vpop.permute.xlu0 %1082
  %1084 = vrot.lane.b32.xlu0 %v1000, 32
  %v1085 = vpop.permute.xlu0 %1084
  %1086 = vrot.lane.b32.xlu0 %v1001, 32
  %v1087 = vpop.permute.xlu0 %1086
  %1088 = vrot.lane.b32.xlu0 %v1002, 32
  %v1089 = vpop.permute.xlu0 %1088
  %1090 = vrot.lane.b32.xlu0 %v1003, 32
  %v1091 = vpop.permute.xlu0 %1090
  %1092 = vrot.lane.b32.xlu0 %v1004, 32
  %v1093 = vpop.permute.xlu0 %1092
  %1094 = vrot.lane.b32.xlu0 %v1005, 32
  %v1095 = vpop.permute.xlu0 %1094
  %1096 = vrot.lane.b32.xlu0 %v1006, 32
  %v1097 = vpop.permute.xlu0 %1096
  %1098 = vrot.lane.b32.xlu0 %v1007, 32
  %v1099 = vpop.permute.xlu0 %1098
  %1100 = vrot.lane.b32.xlu0 %v1008, 32
  %v1101 = vpop.permute.xlu0 %1100
  %1102 = vrot.lane.b32.xlu0 %v1009, 32
  %v1103 = vpop.permute.xlu0 %1102
  %1104 = vrot.lane.b32.xlu0 %v1010, 32
  %v1105 = vpop.permute.xlu0 %1104
  %1106 = vrot.lane.b32.xlu0 %v1011, 32
  %v1107 = vpop.permute.xlu0 %1106
  %1108 = vrot.lane.b32.xlu0 %v1012, 32
  %v1109 = vpop.permute.xlu0 %1108
  %1110 = vrot.lane.b32.xlu0 %v1013, 32
  %v1111 = vpop.permute.xlu0 %1110
  %1112 = vrot.lane.b32.xlu0 %v1014, 32
  %v1113 = vpop.permute.xlu0 %1112
  %1114 = vrot.lane.b32.xlu0 %v1015, 32
  %v1115 = vpop.permute.xlu0 %1114
  %1116 = vrot.lane.b32.xlu0 %v1016, 32
  %v1117 = vpop.permute.xlu0 %1116
  %1118 = vrot.lane.b32.xlu0 %v1017, 32
  %v1119 = vpop.permute.xlu0 %1118
  %1120 = vrot.lane.b32.xlu0 %v1018, 32
  %v1121 = vpop.permute.xlu0 %1120
  %1122 = vrot.lane.b32.xlu0 %v1019, 32
  %v1123 = vpop.permute.xlu0 %1122
  %1124 = vrot.lane.b32.xlu0 %v1020, 32
  %v1125 = vpop.permute.xlu0 %1124
  %1126 = vrot.lane.b32.xlu0 %v1021, 32
  %v1127 = vpop.permute.xlu0 %1126
  %1128 = vrot.lane.b32.xlu0 %v1022, 32
  %v1129 = vpop.permute.xlu0 %1128
  %1130 = vrot.lane.b32.xlu0 %v1023, 32
  %v1131 = vpop.permute.xlu0 %1130
  %1132 = vrot.lane.b32.xlu0 %v1024, 32
  %v1133 = vpop.permute.xlu0 %1132
  %1134 = vrot.lane.b32.xlu0 %v1025, 32
  %v1135 = vpop.permute.xlu0 %1134
  %1136 = vrot.lane.b32.xlu0 %v1026, 32
  %v1137 = vpop.permute.xlu0 %1136
  %1138 = vrot.lane.b32.xlu0 %v1027, 32
  %v1139 = vpop.permute.xlu0 %1138
  %1140 = vrot.lane.b32.xlu0 %v1028, 32
  %v1141 = vpop.permute.xlu0 %1140
  %1142 = vrot.lane.b32.xlu0 %v1029, 32
  %v1143 = vpop.permute.xlu0 %1142
  %1178 = vrot.lane.b32.xlu0 %v998, 64
  %v1179 = vpop.permute.xlu0 %1178
  %1180 = vrot.lane.b32.xlu0 %v999, 64
  %v1181 = vpop.permute.xlu0 %1180
  %1182 = vrot.lane.b32.xlu0 %v1000, 64
  %v1183 = vpop.permute.xlu0 %1182
  %1184 = vrot.lane.b32.xlu0 %v1001, 64
  %v1185 = vpop.permute.xlu0 %1184
  %1186 = vrot.lane.b32.xlu0 %v1002, 64
  %v1187 = vpop.permute.xlu0 %1186
  %1188 = vrot.lane.b32.xlu0 %v1003, 64
  %v1189 = vpop.permute.xlu0 %1188
  %1190 = vrot.lane.b32.xlu0 %v1004, 64
  %v1191 = vpop.permute.xlu0 %1190
  %1192 = vrot.lane.b32.xlu0 %v1005, 64
  %v1193 = vpop.permute.xlu0 %1192
  %1194 = vrot.lane.b32.xlu0 %v1006, 64
  %v1195 = vpop.permute.xlu0 %1194
  %1196 = vrot.lane.b32.xlu0 %v1007, 64
  %v1197 = vpop.permute.xlu0 %1196
  %1198 = vrot.lane.b32.xlu0 %v1008, 64
  %v1199 = vpop.permute.xlu0 %1198
  %1200 = vrot.lane.b32.xlu0 %v1009, 64
  %v1201 = vpop.permute.xlu0 %1200
  %1202 = vrot.lane.b32.xlu0 %v1010, 64
  %v1203 = vpop.permute.xlu0 %1202
  %1204 = vrot.lane.b32.xlu0 %v1011, 64
  %v1205 = vpop.permute.xlu0 %1204
  %1206 = vrot.lane.b32.xlu0 %v1012, 64
  %v1207 = vpop.permute.xlu0 %1206
  %1208 = vrot.lane.b32.xlu0 %v1013, 64
  %v1209 = vpop.permute.xlu0 %1208
  %1210 = vrot.lane.b32.xlu0 %v1014, 64
  %v1211 = vpop.permute.xlu0 %1210
  %1212 = vrot.lane.b32.xlu0 %v1015, 64
  %v1213 = vpop.permute.xlu0 %1212
  %1214 = vrot.lane.b32.xlu0 %v1016, 64
  %v1215 = vpop.permute.xlu0 %1214
  %1216 = vrot.lane.b32.xlu0 %v1017, 64
  %v1217 = vpop.permute.xlu0 %1216
  %1218 = vrot.lane.b32.xlu0 %v1018, 64
  %v1219 = vpop.permute.xlu0 %1218
  %1220 = vrot.lane.b32.xlu0 %v1019, 64
  %v1221 = vpop.permute.xlu0 %1220
  %1222 = vrot.lane.b32.xlu0 %v1020, 64
  %v1223 = vpop.permute.xlu0 %1222
  %1224 = vrot.lane.b32.xlu0 %v1021, 64
  %v1225 = vpop.permute.xlu0 %1224
  %1226 = vrot.lane.b32.xlu0 %v1022, 64
  %v1227 = vpop.permute.xlu0 %1226
  %1228 = vrot.lane.b32.xlu0 %v1023, 64
  %v1229 = vpop.permute.xlu0 %1228
  %1230 = vrot.lane.b32.xlu0 %v1024, 64
  %v1231 = vpop.permute.xlu0 %1230
  %1232 = vrot.lane.b32.xlu0 %v1025, 64
  %v1233 = vpop.permute.xlu0 %1232
  %1234 = vrot.lane.b32.xlu0 %v1026, 64
  %v1235 = vpop.permute.xlu0 %1234
  %1236 = vrot.lane.b32.xlu0 %v1027, 64
  %v1237 = vpop.permute.xlu0 %1236
  %1238 = vrot.lane.b32.xlu0 %v1028, 64
  %v1239 = vpop.permute.xlu0 %1238
  %1240 = vrot.lane.b32.xlu0 %v1029, 64
  %v1241 = vpop.permute.xlu0 %1240
  %1242 = vrot.lane.b32.xlu0 %v1030, 64
  %v1243 = vpop.permute.xlu0 %1242
  %1282 = vrot.lane.b32.xlu0 %v1003, 96
  %v1283 = vpop.permute.xlu0 %1282
  %1284 = vrot.lane.b32.xlu0 %v1004, 96
  %v1285 = vpop.permute.xlu0 %1284
  %1286 = vrot.lane.b32.xlu0 %v1005, 96
  %v1287 = vpop.permute.xlu0 %1286
  %1288 = vrot.lane.b32.xlu0 %v1006, 96
  %v1289 = vpop.permute.xlu0 %1288
  %1290 = vrot.lane.b32.xlu0 %v1007, 96
  %v1291 = vpop.permute.xlu0 %1290
  %1292 = vrot.lane.b32.xlu0 %v1008, 96
  %v1293 = vpop.permute.xlu0 %1292
  %1294 = vrot.lane.b32.xlu0 %v1009, 96
  %v1295 = vpop.permute.xlu0 %1294
  %1296 = vrot.lane.b32.xlu0 %v1010, 96
  %v1297 = vpop.permute.xlu0 %1296
  %1298 = vrot.lane.b32.xlu0 %v1011, 96
  %v1299 = vpop.permute.xlu0 %1298
  %1300 = vrot.lane.b32.xlu0 %v1012, 96
  %v1301 = vpop.permute.xlu0 %1300
  %1302 = vrot.lane.b32.xlu0 %v1013, 96
  %v1303 = vpop.permute.xlu0 %1302
  %1304 = vrot.lane.b32.xlu0 %v1014, 96
  %v1305 = vpop.permute.xlu0 %1304
  %1306 = vrot.lane.b32.xlu0 %v1015, 96
  %v1307 = vpop.permute.xlu0 %1306
  %1308 = vrot.lane.b32.xlu0 %v1016, 96
  %v1309 = vpop.permute.xlu0 %1308
  %1310 = vrot.lane.b32.xlu0 %v1017, 96
  %v1311 = vpop.permute.xlu0 %1310
  %1312 = vrot.lane.b32.xlu0 %v1018, 96
  %v1313 = vpop.permute.xlu0 %1312
  %1314 = vrot.lane.b32.xlu0 %v1019, 96
  %v1315 = vpop.permute.xlu0 %1314
  %1316 = vrot.lane.b32.xlu0 %v1020, 96
  %v1317 = vpop.permute.xlu0 %1316
  %1318 = vrot.lane.b32.xlu0 %v1021, 96
  %v1319 = vpop.permute.xlu0 %1318
  %1320 = vrot.lane.b32.xlu0 %v1022, 96
  %v1321 = vpop.permute.xlu0 %1320
  %1322 = vrot.lane.b32.xlu0 %v1023, 96
  %v1323 = vpop.permute.xlu0 %1322
  %1324 = vrot.lane.b32.xlu0 %v1024, 96
  %v1325 = vpop.permute.xlu0 %1324
  %1326 = vrot.lane.b32.xlu0 %v1025, 96
  %v1327 = vpop.permute.xlu0 %1326
  %1328 = vrot.lane.b32.xlu0 %v1026, 96
  %v1329 = vpop.permute.xlu0 %1328
  %1330 = vrot.lane.b32.xlu0 %v1027, 96
  %v1331 = vpop.permute.xlu0 %1330
  %1332 = vrot.lane.b32.xlu0 %v1028, 96
  %v1333 = vpop.permute.xlu0 %1332
  %1334 = vrot.lane.b32.xlu0 %v1029, 96
  %v1335 = vpop.permute.xlu0 %1334
  %1336 = vrot.lane.b32.xlu0 %v1030, 96
  %v1337 = vpop.permute.xlu0 %1336
  %1338 = vrot.lane.b32.xlu0 %v1031, 96
  %v1339 = vpop.permute.xlu0 %1338
  %1340 = vrot.lane.b32.xlu0 %v1032, 96
  %v1341 = vpop.permute.xlu0 %1340
  %1342 = vrot.lane.b32.xlu0 %v1033, 96
  %v1343 = vpop.permute.xlu0 %1342
  %1344 = vrot.lane.b32.xlu0 %v1034, 96
  %v1345 = vpop.permute.xlu0 %1344
  %1346 = vrot.lane.b32.xlu0 %v1035, 96
  %v1347 = vpop.permute.xlu0 %1346
  %1383 = vrot.lane.b32.xlu0 %v1030, 32
  %v1384 = vpop.permute.xlu0 %1383
  %1385 = vrot.lane.b32.xlu0 %v1031, 32
  %v1386 = vpop.permute.xlu0 %1385
  %1387 = vrot.lane.b32.xlu0 %v1032, 32
  %v1388 = vpop.permute.xlu0 %1387
  %1389 = vrot.lane.b32.xlu0 %v1033, 32
  %v1390 = vpop.permute.xlu0 %1389
  %1391 = vrot.lane.b32.xlu0 %v1034, 32
  %v1392 = vpop.permute.xlu0 %1391
  %1393 = vrot.lane.b32.xlu0 %v1035, 32
  %v1394 = vpop.permute.xlu0 %1393
  %1395 = vrot.lane.b32.xlu0 %v1036, 32
  %v1396 = vpop.permute.xlu0 %1395
  %1397 = vrot.lane.b32.xlu0 %v1037, 32
  %v1398 = vpop.permute.xlu0 %1397
  %1412 = vrot.lane.b32.xlu0 %v1031, 64
  %v1413 = vpop.permute.xlu0 %1412
  %1414 = vrot.lane.b32.xlu0 %v1032, 64
  %v1415 = vpop.permute.xlu0 %1414
  %1416 = vrot.lane.b32.xlu0 %v1033, 64
  %v1417 = vpop.permute.xlu0 %1416
  %1418 = vrot.lane.b32.xlu0 %v1034, 64
  %v1419 = vpop.permute.xlu0 %1418
  %1420 = vrot.lane.b32.xlu0 %v1035, 64
  %v1421 = vpop.permute.xlu0 %1420
  %1422 = vrot.lane.b32.xlu0 %v1036, 64
  %v1423 = vpop.permute.xlu0 %1422
  %1424 = vrot.lane.b32.xlu0 %v1037, 64
  %v1425 = vpop.permute.xlu0 %1424
  %1426 = vrot.lane.b32.xlu0 %v1038, 64
  %v1427 = vpop.permute.xlu0 %1426
  %1428 = vrot.lane.b32.xlu0 %v1039, 64
  %v1429 = vpop.permute.xlu0 %1428
  %1430 = vrot.lane.b32.xlu0 %v1040, 64
  %v1431 = vpop.permute.xlu0 %1430
  %1432 = vrot.lane.b32.xlu0 %v1041, 64
  %v1433 = vpop.permute.xlu0 %1432
  %1434 = vrot.lane.b32.xlu0 %v1042, 64
  %v1435 = vpop.permute.xlu0 %1434
  %1449 = vrot.lane.b32.xlu0 %v1036, 96
  %v1450 = vpop.permute.xlu0 %1449
  %1451 = vrot.lane.b32.xlu0 %v1037, 96
  %v1452 = vpop.permute.xlu0 %1451
  %1453 = vrot.lane.b32.xlu0 %v1038, 96
  %v1454 = vpop.permute.xlu0 %1453
  %1455 = vrot.lane.b32.xlu0 %v1039, 96
  %v1456 = vpop.permute.xlu0 %1455
  %1457 = vrot.lane.b32.xlu0 %v1040, 96
  %v1458 = vpop.permute.xlu0 %1457
  %1459 = vrot.lane.b32.xlu0 %v1041, 96
  %v1460 = vpop.permute.xlu0 %1459
  %1461 = vrot.lane.b32.xlu0 %v1042, 96
  %v1462 = vpop.permute.xlu0 %1461
  %1463 = vrot.lane.b32.xlu0 %v1043, 96
  %v1464 = vpop.permute.xlu0 %1463
  %v1473 = vsel %vm946, %v996, %v1079
  %v1474 = vsel %vm946, %v997, %v1081
  %v1475 = vsel %vm946, %v998, %v1083
  %v1476 = vsel %vm946, %v999, %v1085
  %v1477 = vsel %vm946, %v1000, %v1087
  %v1478 = vsel %vm946, %v1001, %v1089
  %v1479 = vsel %vm946, %v1002, %v1091
  %v1480 = vsel %vm946, %v1003, %v1093
  %v1481 = vsel %vm946, %v1004, %v1095
  %v1482 = vsel %vm946, %v1005, %v1097
  %v1483 = vsel %vm946, %v1006, %v1099
  %v1484 = vsel %vm946, %v1007, %v1101
  %v1485 = vsel %vm946, %v1008, %v1103
  %v1486 = vsel %vm946, %v1009, %v1105
  %v1487 = vsel %vm946, %v1010, %v1107
  %v1488 = vsel %vm946, %v1011, %v1109
  %v1489 = vsel %vm946, %v1012, %v1111
  %v1490 = vsel %vm946, %v1013, %v1113
  %v1491 = vsel %vm946, %v1014, %v1115
  %v1492 = vsel %vm946, %v1015, %v1117
  %v1493 = vsel %vm946, %v1016, %v1119
  %v1494 = vsel %vm946, %v1017, %v1121
  %v1495 = vsel %vm946, %v1018, %v1123
  %v1496 = vsel %vm946, %v1019, %v1125
  %v1497 = vsel %vm946, %v1020, %v1127
  %v1498 = vsel %vm946, %v1021, %v1129
  %v1499 = vsel %vm946, %v1022, %v1131
  %v1500 = vsel %vm946, %v1023, %v1133
  %v1501 = vsel %vm946, %v1024, %v1135
  %v1502 = vsel %vm946, %v1025, %v1137
  %v1503 = vsel %vm946, %v1026, %v1139
  %v1504 = vsel %vm946, %v1027, %v1141
  %v1505 = vsel %vm946, %v1028, %v1143
  %vm1506 = vcmask 523264
  %v1507 = vsel %vm1506, %v1473, %v1179
  %v1508 = vsel %vm1506, %v1474, %v1181
  %v1509 = vsel %vm1506, %v1475, %v1183
  %v1510 = vsel %vm1506, %v1476, %v1185
  %v1511 = vsel %vm1506, %v1477, %v1187
  %v1512 = vsel %vm1506, %v1478, %v1189
  %v1513 = vsel %vm1506, %v1479, %v1191
  %v1514 = vsel %vm1506, %v1480, %v1193
  %v1515 = vsel %vm1506, %v1481, %v1195
  %v1516 = vsel %vm1506, %v1482, %v1197
  %v1517 = vsel %vm1506, %v1483, %v1199
  %v1518 = vsel %vm1506, %v1484, %v1201
  %v1519 = vsel %vm1506, %v1485, %v1203
  %v1520 = vsel %vm1506, %v1486, %v1205
  %v1521 = vsel %vm1506, %v1487, %v1207
  %v1522 = vsel %vm1506, %v1488, %v1209
  %v1523 = vsel %vm1506, %v1489, %v1211
  %v1524 = vsel %vm1506, %v1490, %v1213
  %v1525 = vsel %vm1506, %v1491, %v1215
  %v1526 = vsel %vm1506, %v1492, %v1217
  %v1527 = vsel %vm1506, %v1493, %v1219
  %v1528 = vsel %vm1506, %v1494, %v1221
  %v1529 = vsel %vm1506, %v1495, %v1223
  %v1530 = vsel %vm1506, %v1496, %v1225
  %v1531 = vsel %vm1506, %v1497, %v1227
  %v1532 = vsel %vm1506, %v1498, %v1229
  %v1533 = vsel %vm1506, %v1499, %v1231
  %v1534 = vsel %vm1506, %v1500, %v1233
  %v1535 = vsel %vm1506, %v1501, %v1235
  %v1536 = vsel %vm1506, %v1502, %v1237
  %v1537 = vsel %vm1506, %v1503, %v1239
  %v1538 = vsel %vm1506, %v1504, %v1241
  %v1539 = vsel %vm1506, %v1505, %v1243
  %vm1540 = vcmask 785408
  %v1541 = vsel %vm1540, %v1507, %v1283
  %v1542 = vsel %vm1540, %v1508, %v1285
  %v1543 = vsel %vm1540, %v1509, %v1287
  %v1544 = vsel %vm1540, %v1510, %v1289
  %v1545 = vsel %vm1540, %v1511, %v1291
  %v1546 = vsel %vm1540, %v1512, %v1293
  %v1547 = vsel %vm1540, %v1513, %v1295
  %v1548 = vsel %vm1540, %v1514, %v1297
  %v1549 = vsel %vm1540, %v1515, %v1299
  %v1550 = vsel %vm1540, %v1516, %v1301
  %v1551 = vsel %vm1540, %v1517, %v1303
  %v1552 = vsel %vm1540, %v1518, %v1305
  %v1553 = vsel %vm1540, %v1519, %v1307
  %v1554 = vsel %vm1540, %v1520, %v1309
  %v1555 = vsel %vm1540, %v1521, %v1311
  %v1556 = vsel %vm1540, %v1522, %v1313
  %v1557 = vsel %vm1540, %v1523, %v1315
  %v1558 = vsel %vm1540, %v1524, %v1317
  %v1559 = vsel %vm1540, %v1525, %v1319
  %v1560 = vsel %vm1540, %v1526, %v1321
  %v1561 = vsel %vm1540, %v1527, %v1323
  %v1562 = vsel %vm1540, %v1528, %v1325
  %v1563 = vsel %vm1540, %v1529, %v1327
  %v1564 = vsel %vm1540, %v1530, %v1329
  %v1565 = vsel %vm1540, %v1531, %v1331
  %v1566 = vsel %vm1540, %v1532, %v1333
  %v1567 = vsel %vm1540, %v1533, %v1335
  %v1568 = vsel %vm1540, %v1534, %v1337
  %v1569 = vsel %vm1540, %v1535, %v1339
  %v1570 = vsel %vm1540, %v1536, %v1341
  %v1571 = vsel %vm1540, %v1537, %v1343
  %v1572 = vsel %vm1540, %v1538, %v1345
  %v1573 = vsel %vm1540, %v1539, %v1347
  %v1574 = vsel %vm946, %v1029, %v1384
  %v1575 = vsel %vm946, %v1030, %v1386
  %v1576 = vsel %vm946, %v1031, %v1388
  %v1577 = vsel %vm946, %v1032, %v1390
  %v1578 = vsel %vm946, %v1033, %v1392
  %v1579 = vsel %vm946, %v1034, %v1394
  %v1580 = vsel %vm946, %v1035, %v1396
  %v1581 = vsel %vm946, %v1036, %v1398
  %v1582 = vsel %vm1506, %v1481, %v1203
  %v1583 = vsel %vm1506, %v1482, %v1205
  %v1584 = vsel %vm1506, %v1483, %v1207
  %v1585 = vsel %vm1506, %v1484, %v1209
  %v1586 = vsel %vm1506, %v1485, %v1211
  %v1587 = vsel %vm1506, %v1486, %v1213
  %v1588 = vsel %vm1506, %v1487, %v1215
  %v1589 = vsel %vm1506, %v1488, %v1217
  %v1590 = vsel %vm1506, %v1489, %v1219
  %v1591 = vsel %vm1506, %v1490, %v1221
  %v1592 = vsel %vm1506, %v1491, %v1223
  %v1593 = vsel %vm1506, %v1492, %v1225
  %v1594 = vsel %vm1506, %v1493, %v1227
  %v1595 = vsel %vm1506, %v1494, %v1229
  %v1596 = vsel %vm1506, %v1495, %v1231
  %v1597 = vsel %vm1506, %v1496, %v1233
  %v1598 = vsel %vm1506, %v1497, %v1235
  %v1599 = vsel %vm1506, %v1498, %v1237
  %v1600 = vsel %vm1506, %v1499, %v1239
  %v1601 = vsel %vm1506, %v1500, %v1241
  %v1602 = vsel %vm1506, %v1501, %v1243
  %v1603 = vsel %vm1506, %v1502, %v1413
  %v1604 = vsel %vm1506, %v1503, %v1415
  %v1605 = vsel %vm1506, %v1504, %v1417
  %v1606 = vsel %vm1506, %v1505, %v1419
  %v1607 = vsel %vm1506, %v1574, %v1421
  %v1608 = vsel %vm1506, %v1575, %v1423
  %v1609 = vsel %vm1506, %v1576, %v1425
  %v1610 = vsel %vm1506, %v1577, %v1427
  %v1611 = vsel %vm1506, %v1578, %v1429
  %v1612 = vsel %vm1506, %v1579, %v1431
  %v1613 = vsel %vm1506, %v1580, %v1433
  %v1614 = vsel %vm1506, %v1581, %v1435
  %v1615 = vsel %vm1540, %v1582, %v1299
  %v1616 = vsel %vm1540, %v1583, %v1301
  %v1617 = vsel %vm1540, %v1584, %v1303
  %v1618 = vsel %vm1540, %v1585, %v1305
  %v1619 = vsel %vm1540, %v1586, %v1307
  %v1620 = vsel %vm1540, %v1587, %v1309
  %v1621 = vsel %vm1540, %v1588, %v1311
  %v1622 = vsel %vm1540, %v1589, %v1313
  %v1623 = vsel %vm1540, %v1590, %v1315
  %v1624 = vsel %vm1540, %v1591, %v1317
  %v1625 = vsel %vm1540, %v1592, %v1319
  %v1626 = vsel %vm1540, %v1593, %v1321
  %v1627 = vsel %vm1540, %v1594, %v1323
  %v1628 = vsel %vm1540, %v1595, %v1325
  %v1629 = vsel %vm1540, %v1596, %v1327
  %v1630 = vsel %vm1540, %v1597, %v1329
  %v1631 = vsel %vm1540, %v1598, %v1331
  %v1632 = vsel %vm1540, %v1599, %v1333
  %v1633 = vsel %vm1540, %v1600, %v1335
  %v1634 = vsel %vm1540, %v1601, %v1337
  %v1635 = vsel %vm1540, %v1602, %v1339
  %v1636 = vsel %vm1540, %v1603, %v1341
  %v1637 = vsel %vm1540, %v1604, %v1343
  %v1638 = vsel %vm1540, %v1605, %v1345
  %v1639 = vsel %vm1540, %v1606, %v1347
  %v1640 = vsel %vm1540, %v1607, %v1450
  %v1641 = vsel %vm1540, %v1608, %v1452
  %v1642 = vsel %vm1540, %v1609, %v1454
  %v1643 = vsel %vm1540, %v1610, %v1456
  %v1644 = vsel %vm1540, %v1611, %v1458
  %v1645 = vsel %vm1540, %v1612, %v1460
  %v1646 = vsel %vm1540, %v1613, %v1462
  %v1647 = vsel %vm1540, %v1614, %v1464
  %v1648 = vld [vmem:[%s4] sm:$0xff]
  %v1649 = vld [vmem:[%s4 + $0x8] sm:$0xff]
  %v1650 = vld [vmem:[%s4 + $0x10] sm:$0xff]
  %v1651 = vld [vmem:[%s4 + $0x18] sm:$0xff]
  %v1652 = vld [vmem:[%s4 + $0x20] sm:$0xff]
  %v1653 = vld [vmem:[%s4 + $0x28] sm:$0xff]
  %v1654 = vld [vmem:[%s4 + $0x30] sm:$0xff]
  %v1655 = vld [vmem:[%s4 + $0x38] sm:$0xff]
  %v1656 = vld [vmem:[%s4 + $0x40] sm:$0xff]
  %v1657 = vld [vmem:[%s4 + $0x48] sm:$0xff]
  %v1658 = vld [vmem:[%s4 + $0x50] sm:$0xff]
  %v1659 = vld [vmem:[%s4 + $0x58] sm:$0xff]
  %v1660 = vld [vmem:[%s4 + $0x60] sm:$0xff]
  %v1661 = vld [vmem:[%s4 + $0x68] sm:$0xff]
  %v1662 = vld [vmem:[%s4 + $0x70] sm:$0xff]
  %v1663 = vld [vmem:[%s4 + $0x78] sm:$0xff]
  %v1664 = vld [vmem:[%s4 + $0x80] sm:$0xff]
  %v1665 = vld [vmem:[%s4 + $0x88] sm:$0xff]
  %v1666 = vld [vmem:[%s4 + $0x90] sm:$0xff]
  %v1667 = vld [vmem:[%s4 + $0x98] sm:$0xff]
  %v1668 = vld [vmem:[%s4 + $0xa0] sm:$0xff]
  %v1669 = vld [vmem:[%s4 + $0xa8] sm:$0xff]
  %v1670 = vld [vmem:[%s4 + $0xb0] sm:$0xff]
  %v1671 = vld [vmem:[%s4 + $0xb8] sm:$0xff]
  %v1672 = vld [vmem:[%s4 + $0xc0] sm:$0xff]
  %v1673 = vld [vmem:[%s4 + $0xc8] sm:$0xff]
  %v1674 = vld [vmem:[%s4 + $0xd0] sm:$0xff]
  %v1675 = vld [vmem:[%s4 + $0xd8] sm:$0xff]
  %v1676 = vld [vmem:[%s4 + $0xe0] sm:$0xff]
  %v1677 = vld [vmem:[%s4 + $0xe8] sm:$0xff]
  %v1678 = vld [vmem:[%s4 + $0xf0] sm:$0xff]
  %v1679 = vld [vmem:[%s4 + $0xf8] sm:$0xff]
  %v1680 = vld [vmem:[%s4 + $0x100] sm:$0xff]
  %v1681 = vld [vmem:[%s4 + $0x108] sm:$0xff]
  %v1682 = vld [vmem:[%s4 + $0x110] sm:$0xff]
  %v1683 = vld [vmem:[%s4 + $0x118] sm:$0xff]
  %v1684 = vld [vmem:[%s5] sm:$0x1]
  %v1686 = vlaneseq
  %v1687 = vshrl.u32 %v1686, 7
  %v1688 = vsub.s32 0, %v1687
  %v1689 = vrot.slane %v1684, %v1688
  %v1691 = vsel %vm946, %v1012, 0
  %v1693 = vsel %vm946, %v1013, 0
  %v1695 = vsel %vm946, %v1014, 0
  %v1697 = vsel %vm946, %v1015, 0
  %v1699 = vsel %vm946, %v1016, 0
  %v1701 = vsel %vm946, %v1017, 0
  %v1703 = vsel %vm946, %v1018, 0
  %v1705 = vsel %vm946, %v1019, 0
  %v1707 = vsel %vm946, %v1020, 0
  %v1709 = vsel %vm946, %v1021, 0
  %v1711 = vsel %vm946, %v1022, 0
  %v1713 = vsel %vm946, %v1023, 0
  %v1715 = vsel %vm946, %v1024, 0
  %v1717 = vsel %vm946, %v1025, 0
  %v1719 = vsel %vm946, %v1026, 0
  %v1721 = vsel %vm946, %v1027, 0
  %v1723 = vsel %vm946, %v1028, 0
  %v1725 = vsel %vm946, %v1029, 0
  %v1727 = vsel %vm946, %v1030, 0
  %v1729 = vsel %vm946, %v1031, 0
  %v1731 = vsel %vm946, %v1032, 0
  %v1733 = vsel %vm946, %v1033, 0
  %v1735 = vsel %vm946, %v1034, 0
  %v1737 = vsel %vm946, %v1035, 0
  %v1739 = vsel %vm946, %v1036, 0
  %v1741 = vsel %vm946, %v1037, 0
  %v1743 = vsel %vm946, %v1038, 0
  %v1745 = vsel %vm946, %v1039, 0
  %v1747 = vsel %vm946, %v1040, 0
  %v1749 = vsel %vm946, %v1041, 0
  %v1751 = vsel %vm946, %v1042, 0
  %v1753 = vsel %vm946, %v1043, 0
  %v1756 = vsel %vm946, %v1044, 0
  %1758 = vmatprep.subr.mxu0 0.0
  %1759 = vmatpush1.msra.mxu0 %v1648
  %1760 = vmatprep.subr.mxu0 0.0
  %1761 = vmatpush1.msra.mxu0 %v1649
  %1762 = vmatprep.subr.mxu0 0.0
  %1763 = vmatpush1.msra.mxu0 %v1650
  %1764 = vmatprep.subr.mxu0 0.0
  %1765 = vmatpush1.msra.mxu0 %v1651
  %1766 = vmatprep.subr.mxu0 0.0
  %1767 = vmatpush1.msra.mxu0 %v1652
  %1768 = vmatprep.subr.mxu0 0.0
  %1769 = vmatpush1.msra.mxu0 %v1653
  %1770 = vmatprep.subr.mxu0 0.0
  %1771 = vmatpush1.msra.mxu0 %v1654
  %1772 = vmatprep.subr.mxu0 0.0
  %1773 = vmatpush1.msra.mxu0 %v1655
  %1774 = vmatprep.subr.mxu0 0.0
  %1775 = vmatpush1.msra.mxu0 %v1656
  %1776 = vmatprep.subr.mxu0 0.0
  %1777 = vmatpush1.msra.mxu0 %v1657
  %1778 = vmatprep.subr.mxu0 0.0
  %1779 = vmatpush1.msra.mxu0 %v1658
  %1780 = vmatprep.subr.mxu0 0.0
  %1781 = vmatpush1.msra.mxu0 %v1659
  %1782 = vmatprep.subr.mxu0 0.0
  %1783 = vmatpush1.msra.mxu0 %v1660
  %1784 = vmatprep.subr.mxu0 0.0
  %1785 = vmatpush1.msra.mxu0 %v1661
  %1786 = vmatprep.subr.mxu0 0.0
  %1787 = vmatpush1.msra.mxu0 %v1662
  %1788 = vmatprep.subr.mxu0 0.0
  %1789 = vmatpush1.msra.mxu0 %v1663
  %1790 = vmatprep.subr.mxu0 0.0
  %1791 = vmatpush1.msra.mxu0 %v1664
  %1792 = vmatprep.subr.mxu0 0.0
  %1793 = vmatpush1.msra.mxu0 %v1665
  %1794 = vmatprep.subr.mxu0 0.0
  %1795 = vmatpush1.msra.mxu0 %v1666
  %1796 = vmatprep.subr.mxu0 0.0
  %1797 = vmatpush1.msra.mxu0 %v1667
  %1798 = vmatprep.subr.mxu0 0.0
  %1799 = vmatpush1.msra.mxu0 %v1668
  %1800 = vmatprep.subr.mxu0 0.0
  %1801 = vmatpush1.msra.mxu0 %v1669
  %1802 = vmatprep.subr.mxu0 0.0
  %1803 = vmatpush1.msra.mxu0 %v1670
  %1804 = vmatprep.subr.mxu0 0.0
  %1805 = vmatpush1.msra.mxu0 %v1671
  %1806 = vmatprep.subr.mxu0 0.0
  %1807 = vmatpush1.msra.mxu0 %v1672
  %1808 = vmatprep.subr.mxu0 0.0
  %1809 = vmatpush1.msra.mxu0 %v1673
  %1810 = vmatprep.subr.mxu0 0.0
  %1811 = vmatpush1.msra.mxu0 %v1674
  %1812 = vmatprep.subr.mxu0 0.0
  %1813 = vmatpush1.msra.mxu0 %v1675
  %1814 = vmatprep.subr.mxu0 0.0
  %1815 = vmatpush1.msra.mxu0 %v1676
  %1816 = vmatprep.subr.mxu0 0.0
  %1817 = vmatpush1.msra.mxu0 %v1677
  %1818 = vmatprep.subr.mxu0 0.0
  %1819 = vmatpush1.msra.mxu0 %v1678
  %1820 = vmatprep.subr.mxu0 0.0
  %1821 = vmatpush1.msra.mxu0 %v1679
  %1822 = vmatprep.mubr.f32.mxu0 %v1615
  %1823 = vmatmul.mubr.f32.gmra.mrb[0].mxu0 %v1541
  %v1824 = vpop.f32.mrb[0].mxu0
  %v1825 = vadd.f32 %v1689, %v1824
  %v1826 = vpop.f32.mrb[0].mxu0
  %1827 = vmatprep.mubr.f32.mxu0 %v1616
  %1828 = vmatmul.mubr.f32.gmra.mrb[0].mxu0 %v1542
  %v1829 = vpop.f32.mrb[0].mxu0
  %v1830 = vadd.f32 %v1689, %v1829
  %v1831 = vpop.f32.mrb[0].mxu0
  %1832 = vmatprep.mubr.f32.mxu0 %v1617
  %1833 = vmatmul.mubr.f32.gmra.mrb[0].mxu0 %v1543
  %v1834 = vpop.f32.mrb[0].mxu0
  %v1835 = vadd.f32 %v1689, %v1834
  %v1836 = vpop.f32.mrb[0].mxu0
  %1837 = vmatprep.mubr.f32.mxu0 %v1618
  %1838 = vmatmul.mubr.f32.gmra.mrb[0].mxu0 %v1544
  %v1839 = vpop.f32.mrb[0].mxu0
  %v1840 = vadd.f32 %v1689, %v1839
  %v1841 = vpop.f32.mrb[0].mxu0
  %1842 = vmatprep.mubr.f32.mxu0 %v1619
  %1843 = vmatmul.mubr.f32.gmra.mrb[0].mxu0 %v1545
  %v1844 = vpop.f32.mrb[0].mxu0
  %v1845 = vadd.f32 %v1689, %v1844
  %v1846 = vpop.f32.mrb[0].mxu0
  %1847 = vmatprep.mubr.f32.mxu0 %v1620
  %1848 = vmatmul.mubr.f32.gmra.mrb[0].mxu0 %v1546
  %v1849 = vpop.f32.mrb[0].mxu0
  %v1850 = vpop.f32.mrb[0].mxu0
  %1851 = vmatprep.mubr.f32.mxu0 %v1621
  %1852 = vmatmul.mubr.f32.gmra.mrb[0].mxu0 %v1547
  %v1853 = vpop.f32.mrb[0].mxu0
  %v1854 = vpop.f32.mrb[0].mxu0
  %1855 = vmatprep.mubr.f32.mxu0 %v1622
  %1856 = vmatmul.mubr.f32.gmra.mrb[0].mxu0 %v1548
  %v1857 = vpop.f32.mrb[0].mxu0
  %v1858 = vadd.f32 %v1689, %v1857
  %v1859 = vpop.f32.mrb[0].mxu0
  %1860 = vmatprep.mubr.f32.mxu0 %v1623
  %1861 = vmatmul.mubr.f32.gmra.mrb[0].mxu0 %v1549
  %v1862 = vpop.f32.mrb[0].mxu0
  %v1863 = vadd.f32 %v1689, %v1862
  %v1864 = vpop.f32.mrb[0].mxu0
  %1865 = vmatprep.mubr.f32.mxu0 %v1624
  %1866 = vmatmul.mubr.f32.gmra.mrb[0].mxu0 %v1550
  %v1867 = vpop.f32.mrb[0].mxu0
  %v1868 = vadd.f32 %v1689, %v1867
  %v1869 = vpop.f32.mrb[0].mxu0
  %1870 = vmatprep.mubr.f32.mxu0 %v1625
  %1871 = vmatmul.mubr.f32.gmra.mrb[0].mxu0 %v1551
  %v1872 = vpop.f32.mrb[0].mxu0
  %v1873 = vadd.f32 %v1689, %v1872
  %v1874 = vpop.f32.mrb[0].mxu0
  %1875 = vmatprep.mubr.f32.mxu0 %v1626
  %1876 = vmatmul.mubr.f32.gmra.mrb[0].mxu0 %v1552
  %v1877 = vpop.f32.mrb[0].mxu0
  %v1878 = vadd.f32 %v1689, %v1877
  %v1879 = vpop.f32.mrb[0].mxu0
  %1880 = vmatprep.mubr.f32.mxu0 %v1627
  %1881 = vmatmul.mubr.f32.gmra.mrb[0].mxu0 %v1553
  %v1882 = vpop.f32.mrb[0].mxu0
  %v1883 = vpop.f32.mrb[0].mxu0
  %1884 = vmatprep.mubr.f32.mxu0 %v1628
  %1885 = vmatmul.mubr.f32.gmra.mrb[0].mxu0 %v1554
  %v1886 = vpop.f32.mrb[0].mxu0
  %v1887 = vpop.f32.mrb[0].mxu0
  %1888 = vmatprep.mubr.f32.mxu0 %v1629
  %1889 = vmatmul.mubr.f32.gmra.mrb[0].mxu0 %v1555
  %v1890 = vpop.f32.mrb[0].mxu0
  %v1891 = vadd.f32 %v1689, %v1890
  %v1892 = vpop.f32.mrb[0].mxu0
  %1893 = vmatprep.mubr.f32.mxu0 %v1630
  %1894 = vmatmul.mubr.f32.gmra.mrb[0].mxu0 %v1556
  %v1895 = vpop.f32.mrb[0].mxu0
  %v1896 = vadd.f32 %v1689, %v1895
  %v1897 = vpop.f32.mrb[0].mxu0
  %1898 = vmatprep.mubr.f32.mxu0 %v1631
  %1899 = vmatmul.mubr.f32.gmra.mrb[0].mxu0 %v1557
  %v1900 = vpop.f32.mrb[0].mxu0
  %v1901 = vadd.f32 %v1689, %v1900
  %v1902 = vpop.f32.mrb[0].mxu0
  %1903 = vmatprep.mubr.f32.mxu0 %v1632
  %1904 = vmatmul.mubr.f32.gmra.mrb[0].mxu0 %v1558
  %v1905 = vpop.f32.mrb[0].mxu0
  %v1906 = vadd.f32 %v1689, %v1905
  %v1907 = vpop.f32.mrb[0].mxu0
  %1908 = vmatprep.mubr.f32.mxu0 %v1633
  %1909 = vmatmul.mubr.f32.gmra.mrb[0].mxu0 %v1559
  %v1910 = vpop.f32.mrb[0].mxu0
  %v1911 = vadd.f32 %v1689, %v1910
  %v1912 = vpop.f32.mrb[0].mxu0
  %1913 = vmatprep.mubr.f32.mxu0 %v1634
  %1914 = vmatmul.mubr.f32.gmra.mrb[0].mxu0 %v1560
  %v1915 = vpop.f32.mrb[0].mxu0
  %v1916 = vpop.f32.mrb[0].mxu0
  %1917 = vmatprep.mubr.f32.mxu0 %v1635
  %1918 = vmatmul.mubr.f32.gmra.mrb[0].mxu0 %v1561
  %v1919 = vpop.f32.mrb[0].mxu0
  %v1920 = vpop.f32.mrb[0].mxu0
  %1921 = vmatprep.mubr.f32.mxu0 %v1636
  %1922 = vmatmul.mubr.f32.gmra.mrb[0].mxu0 %v1562
  %v1923 = vpop.f32.mrb[0].mxu0
  %v1924 = vadd.f32 %v1689, %v1923
  %v1925 = vpop.f32.mrb[0].mxu0
  %1926 = vmatprep.mubr.f32.mxu0 %v1637
  %1927 = vmatmul.mubr.f32.gmra.mrb[0].mxu0 %v1563
  %v1928 = vpop.f32.mrb[0].mxu0
  %v1929 = vadd.f32 %v1689, %v1928
  %v1930 = vpop.f32.mrb[0].mxu0
  %1931 = vmatprep.mubr.f32.mxu0 %v1638
  %1932 = vmatmul.mubr.f32.gmra.mrb[0].mxu0 %v1564
  %v1933 = vpop.f32.mrb[0].mxu0
  %v1934 = vadd.f32 %v1689, %v1933
  %v1935 = vpop.f32.mrb[0].mxu0
  %1936 = vmatprep.mubr.f32.mxu0 %v1639
  %1937 = vmatmul.mubr.f32.gmra.mrb[0].mxu0 %v1565
  %v1938 = vpop.f32.mrb[0].mxu0
  %v1939 = vadd.f32 %v1689, %v1938
  %v1940 = vpop.f32.mrb[0].mxu0
  %1941 = vmatprep.mubr.f32.mxu0 %v1640
  %1942 = vmatmul.mubr.f32.gmra.mrb[0].mxu0 %v1566
  %v1943 = vpop.f32.mrb[0].mxu0
  %v1944 = vadd.f32 %v1689, %v1943
  %v1945 = vpop.f32.mrb[0].mxu0
  %1946 = vmatprep.mubr.f32.mxu0 %v1641
  %1947 = vmatmul.mubr.f32.gmra.mrb[0].mxu0 %v1567
  %v1948 = vpop.f32.mrb[0].mxu0
  %v1949 = vpop.f32.mrb[0].mxu0
  %1950 = vmatprep.mubr.f32.mxu0 %v1642
  %1951 = vmatmul.mubr.f32.gmra.mrb[0].mxu0 %v1568
  %v1952 = vpop.f32.mrb[0].mxu0
  %v1953 = vpop.f32.mrb[0].mxu0
  %1954 = vmatprep.mubr.f32.mxu0 %v1643
  %1955 = vmatmul.mubr.f32.gmra.mrb[0].mxu0 %v1569
  %v1956 = vpop.f32.mrb[0].mxu0
  %v1957 = vadd.f32 %v1689, %v1956
  %v1958 = vpop.f32.mrb[0].mxu0
  %1959 = vmatprep.mubr.f32.mxu0 %v1644
  %1960 = vmatmul.mubr.f32.gmra.mrb[0].mxu0 %v1570
  %v1961 = vpop.f32.mrb[0].mxu0
  %v1962 = vadd.f32 %v1689, %v1961
  %v1963 = vpop.f32.mrb[0].mxu0
  %1964 = vmatprep.mubr.f32.mxu0 %v1645
  %1965 = vmatmul.mubr.f32.gmra.mrb[0].mxu0 %v1571
  %v1966 = vpop.f32.mrb[0].mxu0
  %v1967 = vadd.f32 %v1689, %v1966
  %v1968 = vpop.f32.mrb[0].mxu0
  %1969 = vmatprep.mubr.f32.mxu0 %v1646
  %1970 = vmatmul.mubr.f32.gmra.mrb[0].mxu0 %v1572
  %v1971 = vpop.f32.mrb[0].mxu0
  %v1972 = vadd.f32 %v1689, %v1971
  %v1973 = vpop.f32.mrb[0].mxu0
  %1974 = vmatprep.mubr.f32.mxu0 %v1647
  %1975 = vmatmul.mubr.f32.gmra.mrb[0].mxu0 %v1573
  %v1976 = vpop.f32.mrb[0].mxu0
  %v1977 = vadd.f32 %v1689, %v1976
  %v1978 = vpop.f32.mrb[0].mxu0
  %1979 = vdwg.mxu0
  %1980 = vmatprep.subr.mxu0 0.0
  %1981 = vmatpush1.msra.mxu0 %v1680
  %1982 = vmatprep.subr.mxu0 0.0
  %1983 = vmatpush1.msra.mxu0 %v1681
  %1984 = vmatprep.subr.mxu0 0.0
  %1985 = vmatpush1.msra.mxu0 %v1682
  %1986 = vmatprep.subr.mxu0 0.0
  %1987 = vmatpush1.msra.mxu0 %v1683
  %1988 = vmatprep.subr.mxu0 0.0
  %1989 = vmatpush1.msra.mxu0 0.0
  %1990 = vmatprep.subr.mxu0 0.0
  %1991 = vmatpush1.msra.mxu0 0.0
  %1992 = vmatprep.subr.mxu0 0.0
  %1993 = vmatpush1.msra.mxu0 0.0
  %1994 = vmatprep.subr.mxu0 0.0
  %1995 = vmatpush1.msra.mxu0 0.0
  %1996 = vmatprep.subr.mxu0 0.0
  %1997 = vmatpush1.msra.mxu0 0.0
  %1998 = vmatprep.subr.mxu0 0.0
  %1999 = vmatpush1.msra.mxu0 0.0
  %2000 = vmatprep.subr.mxu0 0.0
  %2001 = vmatpush1.msra.mxu0 0.0
  %2002 = vmatprep.subr.mxu0 0.0
  %2003 = vmatpush1.msra.mxu0 0.0
  %2004 = vmatprep.subr.mxu0 0.0
  %2005 = vmatpush1.msra.mxu0 0.0
  %2006 = vmatprep.subr.mxu0 0.0
  %2007 = vmatpush1.msra.mxu0 0.0
  %2008 = vmatprep.subr.mxu0 0.0
  %2009 = vmatpush1.msra.mxu0 0.0
  %2010 = vmatprep.subr.mxu0 0.0
  %2011 = vmatpush1.msra.mxu0 0.0
  %2012 = vmatprep.subr.mxu0 0.0
  %2013 = vmatpush1.msra.mxu0 0.0
  %2014 = vmatprep.subr.mxu0 0.0
  %2015 = vmatpush1.msra.mxu0 0.0
  %2016 = vmatprep.subr.mxu0 0.0
  %2017 = vmatpush1.msra.mxu0 0.0
  %2018 = vmatprep.subr.mxu0 0.0
  %2019 = vmatpush1.msra.mxu0 0.0
  %2020 = vmatprep.subr.mxu0 0.0
  %2021 = vmatpush1.msra.mxu0 0.0
  %2022 = vmatprep.subr.mxu0 0.0
  %2023 = vmatpush1.msra.mxu0 0.0
  %2024 = vmatprep.subr.mxu0 0.0
  %2025 = vmatpush1.msra.mxu0 0.0
  %2026 = vmatprep.subr.mxu0 0.0
  %2027 = vmatpush1.msra.mxu0 0.0
  %2028 = vmatprep.subr.mxu0 0.0
  %2029 = vmatpush1.msra.mxu0 0.0
  %2030 = vmatprep.subr.mxu0 0.0
  %2031 = vmatpush1.msra.mxu0 0.0
  %2032 = vmatprep.subr.mxu0 0.0
  %2033 = vmatpush1.msra.mxu0 0.0
  %2034 = vmatprep.subr.mxu0 0.0
  %2035 = vmatpush1.msra.mxu0 0.0
  %2036 = vmatprep.subr.mxu0 0.0
  %2037 = vmatpush1.msra.mxu0 0.0
  %2038 = vmatprep.subr.mxu0 0.0
  %2039 = vmatpush1.msra.mxu0 0.0
  %2040 = vmatprep.subr.mxu0 0.0
  %2041 = vmatpush1.msra.mxu0 0.0
  %2042 = vmatprep.subr.mxu0 0.0
  %2043 = vmatpush1.msra.mxu0 0.0
  %2044 = vmatprep.mubr.f32.mxu0 0.0
  %2045 = vmatmul.mubr.f32.gmra.mrb[0].mxu0 %v1691
  %v2046 = vpop.f32.mrb[0].mxu0
  %v2047 = vadd.f32 %v1825, %v2046
  %v2048 = vpop.f32.mrb[0].mxu0
  %2049 = vmatprep.mubr.f32.mxu0 0.0
  %2050 = vmatmul.mubr.f32.gmra.mrb[0].mxu0 %v1693
  %v2051 = vpop.f32.mrb[0].mxu0
  %v2052 = vadd.f32 %v1830, %v2051
  %v2053 = vpop.f32.mrb[0].mxu0
  %2054 = vmatprep.mubr.f32.mxu0 0.0
  %2055 = vmatmul.mubr.f32.gmra.mrb[0].mxu0 %v1695
  %v2056 = vpop.f32.mrb[0].mxu0
  %v2057 = vadd.f32 %v1835, %v2056
  %v2058 = vpop.f32.mrb[0].mxu0
  %2059 = vmatprep.mubr.f32.mxu0 0.0
  %2060 = vmatmul.mubr.f32.gmra.mrb[0].mxu0 %v1697
  %v2061 = vpop.f32.mrb[0].mxu0
  %v2062 = vadd.f32 %v1840, %v2061
  %v2063 = vpop.f32.mrb[0].mxu0
  %2064 = vmatprep.mubr.f32.mxu0 0.0
  %2065 = vmatmul.mubr.f32.gmra.mrb[0].mxu0 %v1699
  %v2066 = vpop.f32.mrb[0].mxu0
  %v2067 = vadd.f32 %v1845, %v2066
  %v2068 = vpop.f32.mrb[0].mxu0
  %2069 = vmatprep.mubr.f32.mxu0 0.0
  %2070 = vmatmul.mubr.f32.gmra.mrb[0].mxu0 %v1701
  %v2071 = vpop.f32.mrb[0].mxu0
  %v2072 = vpop.f32.mrb[0].mxu0
  %2073 = vmatprep.mubr.f32.mxu0 0.0
  %2074 = vmatmul.mubr.f32.gmra.mrb[0].mxu0 %v1703
  %v2075 = vpop.f32.mrb[0].mxu0
  %v2076 = vpop.f32.mrb[0].mxu0
  %2077 = vmatprep.mubr.f32.mxu0 0.0
  %2078 = vmatmul.mubr.f32.gmra.mrb[0].mxu0 %v1705
  %v2079 = vpop.f32.mrb[0].mxu0
  %v2080 = vadd.f32 %v1858, %v2079
  %v2081 = vpop.f32.mrb[0].mxu0
  %2082 = vmatprep.mubr.f32.mxu0 0.0
  %2083 = vmatmul.mubr.f32.gmra.mrb[0].mxu0 %v1707
  %v2084 = vpop.f32.mrb[0].mxu0
  %v2085 = vadd.f32 %v1863, %v2084
  %v2086 = vpop.f32.mrb[0].mxu0
  %2087 = vmatprep.mubr.f32.mxu0 0.0
  %2088 = vmatmul.mubr.f32.gmra.mrb[0].mxu0 %v1709
  %v2089 = vpop.f32.mrb[0].mxu0
  %v2090 = vadd.f32 %v1868, %v2089
  %v2091 = vpop.f32.mrb[0].mxu0
  %2092 = vmatprep.mubr.f32.mxu0 0.0
  %2093 = vmatmul.mubr.f32.gmra.mrb[0].mxu0 %v1711
  %v2094 = vpop.f32.mrb[0].mxu0
  %v2095 = vadd.f32 %v1873, %v2094
  %v2096 = vpop.f32.mrb[0].mxu0
  %2097 = vmatprep.mubr.f32.mxu0 0.0
  %2098 = vmatmul.mubr.f32.gmra.mrb[0].mxu0 %v1713
  %v2099 = vpop.f32.mrb[0].mxu0
  %v2100 = vadd.f32 %v1878, %v2099
  %v2101 = vpop.f32.mrb[0].mxu0
  %2102 = vmatprep.mubr.f32.mxu0 0.0
  %2103 = vmatmul.mubr.f32.gmra.mrb[0].mxu0 %v1715
  %v2104 = vpop.f32.mrb[0].mxu0
  %v2105 = vpop.f32.mrb[0].mxu0
  %2106 = vmatprep.mubr.f32.mxu0 0.0
  %2107 = vmatmul.mubr.f32.gmra.mrb[0].mxu0 %v1717
  %v2108 = vpop.f32.mrb[0].mxu0
  %v2109 = vpop.f32.mrb[0].mxu0
  %2110 = vmatprep.mubr.f32.mxu0 0.0
  %2111 = vmatmul.mubr.f32.gmra.mrb[0].mxu0 %v1719
  %v2112 = vpop.f32.mrb[0].mxu0
  %v2113 = vadd.f32 %v1891, %v2112
  %v2114 = vpop.f32.mrb[0].mxu0
  %2115 = vmatprep.mubr.f32.mxu0 0.0
  %2116 = vmatmul.mubr.f32.gmra.mrb[0].mxu0 %v1721
  %v2117 = vpop.f32.mrb[0].mxu0
  %v2118 = vadd.f32 %v1896, %v2117
  %v2119 = vpop.f32.mrb[0].mxu0
  %2120 = vmatprep.mubr.f32.mxu0 0.0
  %2121 = vmatmul.mubr.f32.gmra.mrb[0].mxu0 %v1723
  %v2122 = vpop.f32.mrb[0].mxu0
  %v2123 = vadd.f32 %v1901, %v2122
  %v2124 = vpop.f32.mrb[0].mxu0
  %2125 = vmatprep.mubr.f32.mxu0 0.0
  %2126 = vmatmul.mubr.f32.gmra.mrb[0].mxu0 %v1725
  %v2127 = vpop.f32.mrb[0].mxu0
  %v2128 = vadd.f32 %v1906, %v2127
  %v2129 = vpop.f32.mrb[0].mxu0
  %2130 = vmatprep.mubr.f32.mxu0 0.0
  %2131 = vmatmul.mubr.f32.gmra.mrb[0].mxu0 %v1727
  %v2132 = vpop.f32.mrb[0].mxu0
  %v2133 = vadd.f32 %v1911, %v2132
  %v2134 = vpop.f32.mrb[0].mxu0
  %2135 = vmatprep.mubr.f32.mxu0 0.0
  %2136 = vmatmul.mubr.f32.gmra.mrb[0].mxu0 %v1729
  %v2137 = vpop.f32.mrb[0].mxu0
  %v2138 = vpop.f32.mrb[0].mxu0
  %2139 = vmatprep.mubr.f32.mxu0 0.0
  %2140 = vmatmul.mubr.f32.gmra.mrb[0].mxu0 %v1731
  %v2141 = vpop.f32.mrb[0].mxu0
  %v2142 = vpop.f32.mrb[0].mxu0
  %2143 = vmatprep.mubr.f32.mxu0 0.0
  %2144 = vmatmul.mubr.f32.gmra.mrb[0].mxu0 %v1733
  %v2145 = vpop.f32.mrb[0].mxu0
  %v2146 = vadd.f32 %v1924, %v2145
  %v2147 = vpop.f32.mrb[0].mxu0
  %2148 = vmatprep.mubr.f32.mxu0 0.0
  %2149 = vmatmul.mubr.f32.gmra.mrb[0].mxu0 %v1735
  %v2150 = vpop.f32.mrb[0].mxu0
  %v2151 = vadd.f32 %v1929, %v2150
  %v2152 = vpop.f32.mrb[0].mxu0
  %2153 = vmatprep.mubr.f32.mxu0 0.0
  %2154 = vmatmul.mubr.f32.gmra.mrb[0].mxu0 %v1737
  %v2155 = vpop.f32.mrb[0].mxu0
  %v2156 = vadd.f32 %v1934, %v2155
  %v2157 = vpop.f32.mrb[0].mxu0
  %2158 = vmatprep.mubr.f32.mxu0 0.0
  %2159 = vmatmul.mubr.f32.gmra.mrb[0].mxu0 %v1739
  %v2160 = vpop.f32.mrb[0].mxu0
  %v2161 = vadd.f32 %v1939, %v2160
  %v2162 = vpop.f32.mrb[0].mxu0
  %2163 = vmatprep.mubr.f32.mxu0 0.0
  %2164 = vmatmul.mubr.f32.gmra.mrb[0].mxu0 %v1741
  %v2165 = vpop.f32.mrb[0].mxu0
  %v2166 = vadd.f32 %v1944, %v2165
  %v2167 = vpop.f32.mrb[0].mxu0
  %2168 = vmatprep.mubr.f32.mxu0 0.0
  %2169 = vmatmul.mubr.f32.gmra.mrb[0].mxu0 %v1743
  %v2170 = vpop.f32.mrb[0].mxu0
  %v2171 = vpop.f32.mrb[0].mxu0
  %2172 = vmatprep.mubr.f32.mxu0 0.0
  %2173 = vmatmul.mubr.f32.gmra.mrb[0].mxu0 %v1745
  %v2174 = vpop.f32.mrb[0].mxu0
  %v2175 = vpop.f32.mrb[0].mxu0
  %2176 = vmatprep.mubr.f32.mxu0 0.0
  %2177 = vmatmul.mubr.f32.gmra.mrb[0].mxu0 %v1747
  %v2178 = vpop.f32.mrb[0].mxu0
  %v2179 = vadd.f32 %v1957, %v2178
  %v2180 = vpop.f32.mrb[0].mxu0
  %2181 = vmatprep.mubr.f32.mxu0 0.0
  %2182 = vmatmul.mubr.f32.gmra.mrb[0].mxu0 %v1749
  %v2183 = vpop.f32.mrb[0].mxu0
  %v2184 = vadd.f32 %v1962, %v2183
  %v2185 = vpop.f32.mrb[0].mxu0
  %2186 = vmatprep.mubr.f32.mxu0 0.0
  %2187 = vmatmul.mubr.f32.gmra.mrb[0].mxu0 %v1751
  %v2188 = vpop.f32.mrb[0].mxu0
  %v2189 = vadd.f32 %v1967, %v2188
  %v2190 = vpop.f32.mrb[0].mxu0
  %2191 = vmatprep.mubr.f32.mxu0 0.0
  %2192 = vmatmul.mubr.f32.gmra.mrb[0].mxu0 %v1753
  %v2193 = vpop.f32.mrb[0].mxu0
  %v2194 = vadd.f32 %v1972, %v2193
  %v2195 = vpop.f32.mrb[0].mxu0
  %2196 = vmatprep.mubr.f32.mxu0 0.0
  %2197 = vmatmul.mubr.f32.gmra.mrb[0].mxu0 %v1756
  %v2198 = vpop.f32.mrb[0].mxu0
  %v2199 = vadd.f32 %v1977, %v2198
  %v2200 = vpop.f32.mrb[0].mxu0
  %2201 = vdwg.mxu0
  %v2202 = vmax.f32 %v2047, 0.0
  %v2203 = vmax.f32 %v2052, 0.0
  %v2204 = vmax.f32 %v2057, 0.0
  %v2205 = vmax.f32 %v2062, 0.0
  %v2206 = vmax.f32 %v2067, 0.0
  %v2207 = vmax.f32 %v2080, 0.0
  %v2208 = vmax.f32 %v2085, 0.0
  %v2209 = vmax.f32 %v2090, 0.0
  %v2210 = vmax.f32 %v2095, 0.0
  %v2211 = vmax.f32 %v2100, 0.0
  %v2212 = vmax.f32 %v2113, 0.0
  %v2213 = vmax.f32 %v2118, 0.0
  %v2214 = vmax.f32 %v2123, 0.0
  %v2215 = vmax.f32 %v2128, 0.0
  %v2216 = vmax.f32 %v2133, 0.0
  %v2217 = vmax.f32 %v2146, 0.0
  %v2218 = vmax.f32 %v2151, 0.0
  %v2219 = vmax.f32 %v2156, 0.0
  %v2220 = vmax.f32 %v2161, 0.0
  %v2221 = vmax.f32 %v2166, 0.0
  %v2222 = vmax.f32 %v2179, 0.0
  %v2223 = vmax.f32 %v2184, 0.0
  %v2224 = vmax.f32 %v2189, 0.0
  %v2225 = vmax.f32 %v2194, 0.0
  %v2226 = vmax.f32 %v2199, 0.0
  %2228 = vrot.lane.b32.xlu0 %v2203, 64
  %v2229 = vpop.permute.xlu0 %2228
  %2232 = vrot.lane.b32.xlu0 %v2205, 64
  %v2233 = vpop.permute.xlu0 %2232
  %2236 = vrot.lane.b32.xlu0 %v2207, 64
  %v2237 = vpop.permute.xlu0 %2236
  %2240 = vrot.lane.b32.xlu0 %v2209, 64
  %v2241 = vpop.permute.xlu0 %2240
  %2244 = vrot.lane.b32.xlu0 %v2211, 64
  %v2245 = vpop.permute.xlu0 %2244
  %2248 = vrot.lane.b32.xlu0 %v2213, 64
  %v2249 = vpop.permute.xlu0 %2248
  %2252 = vrot.lane.b32.xlu0 %v2215, 64
  %v2253 = vpop.permute.xlu0 %2252
  %2256 = vrot.lane.b32.xlu0 %v2217, 64
  %v2257 = vpop.permute.xlu0 %2256
  %v2259 = vsel %vm1506, %v2202, %v2229
  %v2260 = vsel %vm1506, %v2204, %v2233
  %v2261 = vsel %vm1506, %v2206, %v2237
  %v2262 = vsel %vm1506, %v2208, %v2241
  %v2263 = vsel %vm1506, %v2210, %v2245
  %v2264 = vsel %vm1506, %v2212, %v2249
  %v2265 = vsel %vm1506, %v2214, %v2253
  %v2266 = vsel %vm1506, %v2216, %v2257
  %2268 = vrot.lane.b32.xlu0 %v2219, 64
  %v2269 = vpop.permute.xlu0 %2268
  %2272 = vrot.lane.b32.xlu0 %v2221, 64
  %v2273 = vpop.permute.xlu0 %2272
  %2276 = vrot.lane.b32.xlu0 %v2223, 64
  %v2277 = vpop.permute.xlu0 %2276
  %2280 = vrot.lane.b32.xlu0 %v2225, 64
  %v2281 = vpop.permute.xlu0 %2280
  %v2283 = vsel %vm1506, %v2218, %v2269
  %v2284 = vsel %vm1506, %v2220, %v2273
  %v2285 = vsel %vm1506, %v2222, %v2277
  %v2286 = vsel %vm1506, %v2224, %v2281
  %v2287 = vld [vmem:[%s6] sm:$0xff]
  %v2288 = vld [vmem:[%s6 + $0x8] sm:$0xff]
  %v2289 = vld [vmem:[%s6 + $0x10] sm:$0xff]
  %v2290 = vld [vmem:[%s6 + $0x18] sm:$0xff]
  %v2291 = vld [vmem:[%s6 + $0x20] sm:$0xff]
  %v2292 = vld [vmem:[%s6 + $0x28] sm:$0xff]
  %v2293 = vld [vmem:[%s6 + $0x30] sm:$0xff]
  %v2294 = vld [vmem:[%s6 + $0x38] sm:$0xff]
  %v2295 = vld [vmem:[%s6 + $0x40] sm:$0xff]
  %v2296 = vld [vmem:[%s6 + $0x48] sm:$0xff]
  %v2297 = vld [vmem:[%s6 + $0x50] sm:$0xff]
  %v2298 = vld [vmem:[%s6 + $0x58] sm:$0xff]
  %v2299 = vld [vmem:[%s6 + $0x60] sm:$0xff]
  %v2300 = vld [vmem:[%s6 + $0x68] sm:$0xff]
  %v2301 = vld [vmem:[%s6 + $0x70] sm:$0xff]
  %v2302 = vld [vmem:[%s6 + $0x78] sm:$0xff]
  %v2303 = vld [vmem:[%s6 + $0x80] sm:$0xff]
  %v2304 = vld [vmem:[%s6 + $0x88] sm:$0xff]
  %v2305 = vld [vmem:[%s6 + $0x90] sm:$0xff]
  %v2306 = vld [vmem:[%s6 + $0x98] sm:$0xff]
  %v2307 = vld [vmem:[%s6 + $0xa0] sm:$0xff]
  %v2308 = vld [vmem:[%s6 + $0xa8] sm:$0xff]
  %v2309 = vld [vmem:[%s6 + $0xb0] sm:$0xff]
  %v2310 = vld [vmem:[%s6 + $0xb8] sm:$0xff]
  %v2311 = vld [vmem:[%s6 + $0xc0] sm:$0xff]
  %v2312 = vld [vmem:[%s6 + $0xc8] sm:$0xff]
  %v2313 = vld [vmem:[%s6 + $0xd0] sm:$0xff]
  %v2314 = vld [vmem:[%s6 + $0xd8] sm:$0xff]
  %v2315 = vld [vmem:[%s6 + $0xe0] sm:$0xff]
  %v2316 = vld [vmem:[%s6 + $0xe8] sm:$0xff]
  %v2317 = vld [vmem:[%s6 + $0xf0] sm:$0xff]
  %v2318 = vld [vmem:[%s6 + $0xf8] sm:$0xff]
  %v2319 = vld [vmem:[%s6 + $0x100] sm:$0xff]
  %v2320 = vld [vmem:[%s6 + $0x108] sm:$0xff]
  %v2321 = vld [vmem:[%s6 + $0x110] sm:$0xff]
  %v2322 = vld [vmem:[%s6 + $0x118] sm:$0xff]
  %v2323 = vld [vmem:[%s6 + $0x120] sm:$0xff]
  %v2324 = vld [vmem:[%s6 + $0x128] sm:$0xff]
  %v2325 = vld [vmem:[%s6 + $0x130] sm:$0xff]
  %v2326 = vld [vmem:[%s6 + $0x138] sm:$0xff]
  %v2327 = vld [vmem:[%s6 + $0x140] sm:$0xff]
  %v2328 = vld [vmem:[%s6 + $0x148] sm:$0xff]
  %v2329 = vld [vmem:[%s6 + $0x150] sm:$0xff]
  %v2330 = vld [vmem:[%s6 + $0x158] sm:$0xff]
  %v2331 = vld [vmem:[%s6 + $0x160] sm:$0xff]
  %v2332 = vld [vmem:[%s6 + $0x168] sm:$0xff]
  %v2333 = vld [vmem:[%s6 + $0x170] sm:$0xff]
  %v2334 = vld [vmem:[%s6 + $0x178] sm:$0xff]
  %v2335 = vld [vmem:[%s6 + $0x180] sm:$0xff]
  %v2336 = vld [vmem:[%s6 + $0x188] sm:$0xff]
  %v2337 = vld [vmem:[%s6 + $0x190] sm:$0xff]
  %v2338 = vld [vmem:[%s6 + $0x198] sm:$0xff]
  %v2339 = vld [vmem:[%s6 + $0x1a0] sm:$0xff]
  %v2340 = vld [vmem:[%s6 + $0x1a8] sm:$0xff]
  %v2341 = vld [vmem:[%s6 + $0x1b0] sm:$0xff]
  %v2342 = vld [vmem:[%s6 + $0x1b8] sm:$0xff]
  %v2343 = vld [vmem:[%s6 + $0x1c0] sm:$0xff]
  %v2344 = vld [vmem:[%s6 + $0x1c8] sm:$0xff]
  %v2345 = vld [vmem:[%s6 + $0x1d0] sm:$0xff]
  %v2346 = vld [vmem:[%s6 + $0x1d8] sm:$0xff]
  %v2347 = vld [vmem:[%s6 + $0x1e0] sm:$0xff]
  %v2348 = vld [vmem:[%s6 + $0x1e8] sm:$0xff]
  %v2349 = vld [vmem:[%s6 + $0x1f0] sm:$0xff]
  %v2350 = vld [vmem:[%s6 + $0x1f8] sm:$0xff]
  %v2351 = vld [vmem:[%s6 + $0x200] sm:$0xff]
  %v2352 = vld [vmem:[%s6 + $0x208] sm:$0xff]
  %v2353 = vld [vmem:[%s6 + $0x210] sm:$0xff]
  %v2354 = vld [vmem:[%s6 + $0x218] sm:$0xff]
  %v2355 = vld [vmem:[%s6 + $0x220] sm:$0xff]
  %v2356 = vld [vmem:[%s6 + $0x228] sm:$0xff]
  %v2357 = vld [vmem:[%s6 + $0x230] sm:$0xff]
  %v2358 = vld [vmem:[%s6 + $0x238] sm:$0xff]
  %v2359 = vld [vmem:[%s6 + $0x240] sm:$0xff]
  %v2360 = vld [vmem:[%s6 + $0x248] sm:$0xff]
  %v2361 = vld [vmem:[%s6 + $0x250] sm:$0xff]
  %v2362 = vld [vmem:[%s6 + $0x258] sm:$0xff]
  %v2363 = vld [vmem:[%s6 + $0x260] sm:$0xff]
  %v2364 = vld [vmem:[%s6 + $0x268] sm:$0xff]
  %v2365 = vld [vmem:[%s6 + $0x270] sm:$0xff]
  %v2366 = vld [vmem:[%s6 + $0x278] sm:$0xff]
  %v2367 = vld [vmem:[%s6 + $0x280] sm:$0xff]
  %v2368 = vld [vmem:[%s6 + $0x288] sm:$0xff]
  %v2369 = vld [vmem:[%s6 + $0x290] sm:$0xff]
  %v2370 = vld [vmem:[%s6 + $0x298] sm:$0xff]
  %v2371 = vld [vmem:[%s6 + $0x2a0] sm:$0xff]
  %v2372 = vld [vmem:[%s6 + $0x2a8] sm:$0xff]
  %v2373 = vld [vmem:[%s6 + $0x2b0] sm:$0xff]
  %v2374 = vld [vmem:[%s6 + $0x2b8] sm:$0xff]
  %v2375 = vld [vmem:[%s6 + $0x2c0] sm:$0xff]
  %v2376 = vld [vmem:[%s6 + $0x2c8] sm:$0xff]
  %v2377 = vld [vmem:[%s6 + $0x2d0] sm:$0xff]
  %v2378 = vld [vmem:[%s6 + $0x2d8] sm:$0xff]
  %v2379 = vld [vmem:[%s6 + $0x2e0] sm:$0xff]
  %v2380 = vld [vmem:[%s6 + $0x2e8] sm:$0xff]
  %v2381 = vld [vmem:[%s6 + $0x2f0] sm:$0xff]
  %v2382 = vld [vmem:[%s6 + $0x2f8] sm:$0xff]
  %v2383 = vld [vmem:[%s6 + $0x300] sm:$0xff]
  %v2384 = vld [vmem:[%s6 + $0x308] sm:$0xff]
  %v2385 = vld [vmem:[%s6 + $0x310] sm:$0xff]
  %v2386 = vld [vmem:[%s6 + $0x318] sm:$0xff]
  %v2387 = vld [vmem:[%s6 + $0x320] sm:$0xff]
  %v2388 = vld [vmem:[%s6 + $0x328] sm:$0xff]
  %v2389 = vld [vmem:[%s6 + $0x330] sm:$0xff]
  %v2390 = vld [vmem:[%s6 + $0x338] sm:$0xff]
  %v2391 = vld [vmem:[%s6 + $0x340] sm:$0xff]
  %v2392 = vld [vmem:[%s6 + $0x348] sm:$0xff]
  %v2393 = vld [vmem:[%s6 + $0x350] sm:$0xff]
  %v2394 = vld [vmem:[%s6 + $0x358] sm:$0xff]
  %v2395 = vld [vmem:[%s6 + $0x360] sm:$0xff]
  %v2396 = vld [vmem:[%s6 + $0x368] sm:$0xff]
  %v2397 = vld [vmem:[%s6 + $0x370] sm:$0xff]
  %v2398 = vld [vmem:[%s6 + $0x378] sm:$0xff]
  %v2399 = vld [vmem:[%s6 + $0x380] sm:$0xff]
  %v2400 = vld [vmem:[%s6 + $0x388] sm:$0xff]
  %v2401 = vld [vmem:[%s6 + $0x390] sm:$0xff]
  %v2402 = vld [vmem:[%s6 + $0x398] sm:$0xff]
  %v2403 = vld [vmem:[%s6 + $0x3a0] sm:$0xff]
  %v2404 = vld [vmem:[%s6 + $0x3a8] sm:$0xff]
  %v2405 = vld [vmem:[%s6 + $0x3b0] sm:$0xff]
  %v2406 = vld [vmem:[%s6 + $0x3b8] sm:$0xff]
  %v2407 = vld [vmem:[%s6 + $0x3c0] sm:$0xff]
  %v2408 = vld [vmem:[%s6 + $0x3c8] sm:$0xff]
  %v2409 = vld [vmem:[%s6 + $0x3d0] sm:$0xff]
  %v2410 = vld [vmem:[%s6 + $0x3d8] sm:$0xff]
  %v2411 = vld [vmem:[%s6 + $0x3e0] sm:$0xff]
  %v2412 = vld [vmem:[%s6 + $0x3e8] sm:$0xff]
  %v2413 = vld [vmem:[%s6 + $0x3f0] sm:$0xff]
  %v2414 = vld [vmem:[%s6 + $0x3f8] sm:$0xff]
  %v2415 = vld [vmem:[%s6 + $0x400] sm:$0xff]
  %v2416 = vld [vmem:[%s6 + $0x408] sm:$0xff]
  %v2417 = vld [vmem:[%s6 + $0x410] sm:$0xff]
  %v2418 = vld [vmem:[%s6 + $0x418] sm:$0xff]
  %v2419 = vld [vmem:[%s6 + $0x420] sm:$0xff]
  %v2420 = vld [vmem:[%s6 + $0x428] sm:$0xff]
  %v2421 = vld [vmem:[%s6 + $0x430] sm:$0xff]
  %v2422 = vld [vmem:[%s6 + $0x438] sm:$0xff]
  %v2423 = vld [vmem:[%s6 + $0x440] sm:$0xff]
  %v2424 = vld [vmem:[%s6 + $0x448] sm:$0xff]
  %v2425 = vld [vmem:[%s6 + $0x450] sm:$0xff]
  %v2426 = vld [vmem:[%s6 + $0x458] sm:$0xff]
  %v2427 = vld [vmem:[%s6 + $0x460] sm:$0xff]
  %v2428 = vld [vmem:[%s6 + $0x468] sm:$0xff]
  %v2429 = vld [vmem:[%s6 + $0x470] sm:$0xff]
  %v2430 = vld [vmem:[%s6 + $0x478] sm:$0xff]
  %v2431 = vld [vmem:[%s6 + $0x480] sm:$0xff]
  %v2432 = vld [vmem:[%s6 + $0x488] sm:$0xff]
  %v2433 = vld [vmem:[%s6 + $0x490] sm:$0xff]
  %v2434 = vld [vmem:[%s6 + $0x498] sm:$0xff]
  %v2435 = vld [vmem:[%s6 + $0x4a0] sm:$0xff]
  %v2436 = vld [vmem:[%s6 + $0x4a8] sm:$0xff]
  %v2437 = vld [vmem:[%s6 + $0x4b0] sm:$0xff]
  %v2438 = vld [vmem:[%s6 + $0x4b8] sm:$0xff]
  %v2439 = vld [vmem:[%s6 + $0x4c0] sm:$0xff]
  %v2440 = vld [vmem:[%s6 + $0x4c8] sm:$0xff]
  %v2441 = vld [vmem:[%s6 + $0x4d0] sm:$0xff]
  %v2442 = vld [vmem:[%s6 + $0x4d8] sm:$0xff]
  %v2443 = vld [vmem:[%s6 + $0x4e0] sm:$0xff]
  %v2444 = vld [vmem:[%s6 + $0x4e8] sm:$0xff]
  %v2445 = vld [vmem:[%s6 + $0x4f0] sm:$0xff]
  %v2446 = vld [vmem:[%s6 + $0x4f8] sm:$0xff]
  %v2447 = vld [vmem:[%s6 + $0x500] sm:$0xff]
  %v2448 = vld [vmem:[%s6 + $0x508] sm:$0xff]
  %v2449 = vld [vmem:[%s6 + $0x510] sm:$0xff]
  %v2450 = vld [vmem:[%s6 + $0x518] sm:$0xff]
  %v2451 = vld [vmem:[%s6 + $0x520] sm:$0xff]
  %v2452 = vld [vmem:[%s6 + $0x528] sm:$0xff]
  %v2453 = vld [vmem:[%s6 + $0x530] sm:$0xff]
  %v2454 = vld [vmem:[%s6 + $0x538] sm:$0xff]
  %v2455 = vld [vmem:[%s6 + $0x540] sm:$0xff]
  %v2456 = vld [vmem:[%s6 + $0x548] sm:$0xff]
  %v2457 = vld [vmem:[%s6 + $0x550] sm:$0xff]
  %v2458 = vld [vmem:[%s6 + $0x558] sm:$0xff]
  %v2459 = vld [vmem:[%s6 + $0x560] sm:$0xff]
  %v2460 = vld [vmem:[%s6 + $0x568] sm:$0xff]
  %v2461 = vld [vmem:[%s6 + $0x570] sm:$0xff]
  %v2462 = vld [vmem:[%s6 + $0x578] sm:$0xff]
  %v2463 = vld [vmem:[%s6 + $0x580] sm:$0xff]
  %v2464 = vld [vmem:[%s6 + $0x588] sm:$0xff]
  %v2465 = vld [vmem:[%s6 + $0x590] sm:$0xff]
  %v2466 = vld [vmem:[%s6 + $0x598] sm:$0xff]
  %v2467 = vld [vmem:[%s6 + $0x5a0] sm:$0xff]
  %v2468 = vld [vmem:[%s6 + $0x5a8] sm:$0xff]
  %v2469 = vld [vmem:[%s6 + $0x5b0] sm:$0xff]
  %v2470 = vld [vmem:[%s6 + $0x5b8] sm:$0xff]
  %v2471 = vld [vmem:[%s6 + $0x5c0] sm:$0xff]
  %v2472 = vld [vmem:[%s6 + $0x5c8] sm:$0xff]
  %v2473 = vld [vmem:[%s6 + $0x5d0] sm:$0xff]
  %v2474 = vld [vmem:[%s6 + $0x5d8] sm:$0xff]
  %v2475 = vld [vmem:[%s6 + $0x5e0] sm:$0xff]
  %v2476 = vld [vmem:[%s6 + $0x5e8] sm:$0xff]
  %v2477 = vld [vmem:[%s6 + $0x5f0] sm:$0xff]
  %v2478 = vld [vmem:[%s6 + $0x5f8] sm:$0xff]
  %v2479 = vld [vmem:[%s6 + $0x600] sm:$0xff]
  %v2480 = vld [vmem:[%s6 + $0x608] sm:$0xff]
  %v2481 = vld [vmem:[%s6 + $0x610] sm:$0xff]
  %v2482 = vld [vmem:[%s6 + $0x618] sm:$0xff]
  %v2483 = vld [vmem:[%s6 + $0x620] sm:$0xff]
  %v2484 = vld [vmem:[%s6 + $0x628] sm:$0xff]
  %v2485 = vld [vmem:[%s6 + $0x630] sm:$0xff]
  %v2486 = vld [vmem:[%s6 + $0x638] sm:$0xff]
  %v2487 = vld [vmem:[%s6 + $0x640] sm:$0xff]
  %v2488 = vld [vmem:[%s6 + $0x648] sm:$0xff]
  %v2489 = vld [vmem:[%s6 + $0x650] sm:$0xff]
  %v2490 = vld [vmem:[%s6 + $0x658] sm:$0xff]
  %v2491 = vld [vmem:[%s6 + $0x660] sm:$0xff]
  %v2492 = vld [vmem:[%s6 + $0x668] sm:$0xff]
  %v2493 = vld [vmem:[%s6 + $0x670] sm:$0xff]
  %v2494 = vld [vmem:[%s6 + $0x678] sm:$0xff]
  %v2495 = vld [vmem:[%s6 + $0x680] sm:$0xff]
  %v2496 = vld [vmem:[%s6 + $0x688] sm:$0xff]
  %v2497 = vld [vmem:[%s6 + $0x690] sm:$0xff]
  %v2498 = vld [vmem:[%s6 + $0x698] sm:$0xff]
  %v2499 = vld [vmem:[%s6 + $0x6a0] sm:$0xff]
  %v2500 = vld [vmem:[%s6 + $0x6a8] sm:$0xff]
  %v2501 = vld [vmem:[%s6 + $0x6b0] sm:$0xff]
  %v2502 = vld [vmem:[%s6 + $0x6b8] sm:$0xff]
  %v2503 = vld [vmem:[%s6 + $0x6c0] sm:$0xff]
  %v2504 = vld [vmem:[%s6 + $0x6c8] sm:$0xff]
  %v2505 = vld [vmem:[%s6 + $0x6d0] sm:$0xff]
  %v2506 = vld [vmem:[%s6 + $0x6d8] sm:$0xff]
  %v2507 = vld [vmem:[%s6 + $0x6e0] sm:$0xff]
  %v2508 = vld [vmem:[%s6 + $0x6e8] sm:$0xff]
  %v2509 = vld [vmem:[%s6 + $0x6f0] sm:$0xff]
  %v2510 = vld [vmem:[%s6 + $0x6f8] sm:$0xff]
  %v2511 = vld [vmem:[%s6 + $0x700] sm:$0xff]
  %v2512 = vld [vmem:[%s6 + $0x708] sm:$0xff]
  %v2513 = vld [vmem:[%s6 + $0x710] sm:$0xff]
  %v2514 = vld [vmem:[%s6 + $0x718] sm:$0xff]
  %v2515 = vld [vmem:[%s6 + $0x720] sm:$0xff]
  %v2516 = vld [vmem:[%s6 + $0x728] sm:$0xff]
  %v2517 = vld [vmem:[%s6 + $0x730] sm:$0xff]
  %v2518 = vld [vmem:[%s6 + $0x738] sm:$0xff]
  %v2519 = vld [vmem:[%s6 + $0x740] sm:$0xff]
  %v2520 = vld [vmem:[%s6 + $0x748] sm:$0xff]
  %v2521 = vld [vmem:[%s6 + $0x750] sm:$0xff]
  %v2522 = vld [vmem:[%s6 + $0x758] sm:$0xff]
  %v2523 = vld [vmem:[%s6 + $0x760] sm:$0xff]
  %v2524 = vld [vmem:[%s6 + $0x768] sm:$0xff]
  %v2525 = vld [vmem:[%s6 + $0x770] sm:$0xff]
  %v2526 = vld [vmem:[%s6 + $0x778] sm:$0xff]
  %v2527 = vld [vmem:[%s6 + $0x780] sm:$0xff]
  %v2528 = vld [vmem:[%s6 + $0x788] sm:$0xff]
  %v2529 = vld [vmem:[%s6 + $0x790] sm:$0xff]
  %v2530 = vld [vmem:[%s6 + $0x798] sm:$0xff]
  %v2531 = vld [vmem:[%s6 + $0x7a0] sm:$0xff]
  %v2532 = vld [vmem:[%s6 + $0x7a8] sm:$0xff]
  %v2533 = vld [vmem:[%s6 + $0x7b0] sm:$0xff]
  %v2534 = vld [vmem:[%s6 + $0x7b8] sm:$0xff]
  %v2535 = vld [vmem:[%s6 + $0x7c0] sm:$0xff]
  %v2536 = vld [vmem:[%s6 + $0x7c8] sm:$0xff]
  %v2537 = vld [vmem:[%s6 + $0x7d0] sm:$0xff]
  %v2538 = vld [vmem:[%s6 + $0x7d8] sm:$0xff]
  %v2539 = vld [vmem:[%s6 + $0x7e0] sm:$0xff]
  %v2540 = vld [vmem:[%s6 + $0x7e8] sm:$0xff]
  %v2541 = vld [vmem:[%s6 + $0x7f0] sm:$0xff]
  %v2542 = vld [vmem:[%s6 + $0x7f8] sm:$0xff]
  %v2543 = vld [vmem:[%s6 + $0x800] sm:$0xff]
  %v2544 = vld [vmem:[%s6 + $0x808] sm:$0xff]
  %v2545 = vld [vmem:[%s6 + $0x810] sm:$0xff]
  %v2546 = vld [vmem:[%s6 + $0x818] sm:$0xff]
  %v2547 = vld [vmem:[%s6 + $0x820] sm:$0xff]
  %v2548 = vld [vmem:[%s6 + $0x828] sm:$0xff]
  %v2549 = vld [vmem:[%s6 + $0x830] sm:$0xff]
  %v2550 = vld [vmem:[%s6 + $0x838] sm:$0xff]
  %v2551 = vld [vmem:[%s6 + $0x840] sm:$0xff]
  %v2552 = vld [vmem:[%s6 + $0x848] sm:$0xff]
  %v2553 = vld [vmem:[%s6 + $0x850] sm:$0xff]
  %v2554 = vld [vmem:[%s6 + $0x858] sm:$0xff]
  %v2555 = vld [vmem:[%s6 + $0x860] sm:$0xff]
  %v2556 = vld [vmem:[%s6 + $0x868] sm:$0xff]
  %v2557 = vld [vmem:[%s6 + $0x870] sm:$0xff]
  %v2558 = vld [vmem:[%s6 + $0x878] sm:$0xff]
  %v2559 = vld [vmem:[%s6 + $0x880] sm:$0xff]
  %v2560 = vld [vmem:[%s6 + $0x888] sm:$0xff]
  %v2561 = vld [vmem:[%s6 + $0x890] sm:$0xff]
  %v2562 = vld [vmem:[%s6 + $0x898] sm:$0xff]
  %v2563 = vld [vmem:[%s6 + $0x8a0] sm:$0xff]
  %v2564 = vld [vmem:[%s6 + $0x8a8] sm:$0xff]
  %v2565 = vld [vmem:[%s6 + $0x8b0] sm:$0xff]
  %v2566 = vld [vmem:[%s6 + $0x8b8] sm:$0xff]
  %v2567 = vld [vmem:[%s6 + $0x8c0] sm:$0xff]
  %v2568 = vld [vmem:[%s6 + $0x8c8] sm:$0xff]
  %v2569 = vld [vmem:[%s6 + $0x8d0] sm:$0xff]
  %v2570 = vld [vmem:[%s6 + $0x8d8] sm:$0xff]
  %v2571 = vld [vmem:[%s6 + $0x8e0] sm:$0xff]
  %v2572 = vld [vmem:[%s6 + $0x8e8] sm:$0xff]
  %v2573 = vld [vmem:[%s6 + $0x8f0] sm:$0xff]
  %v2574 = vld [vmem:[%s6 + $0x8f8] sm:$0xff]
  %v2575 = vld [vmem:[%s6 + $0x900] sm:$0xff]
  %v2576 = vld [vmem:[%s6 + $0x908] sm:$0xff]
  %v2577 = vld [vmem:[%s6 + $0x910] sm:$0xff]
  %v2578 = vld [vmem:[%s6 + $0x918] sm:$0xff]
  %v2579 = vld [vmem:[%s6 + $0x920] sm:$0xff]
  %v2580 = vld [vmem:[%s6 + $0x928] sm:$0xff]
  %v2581 = vld [vmem:[%s6 + $0x930] sm:$0xff]
  %v2582 = vld [vmem:[%s6 + $0x938] sm:$0xff]
  %v2583 = vld [vmem:[%s6 + $0x940] sm:$0xff]
  %v2584 = vld [vmem:[%s6 + $0x948] sm:$0xff]
  %v2585 = vld [vmem:[%s6 + $0x950] sm:$0xff]
  %v2586 = vld [vmem:[%s6 + $0x958] sm:$0xff]
  %v2587 = vld [vmem:[%s6 + $0x960] sm:$0xff]
  %v2588 = vld [vmem:[%s6 + $0x968] sm:$0xff]
  %v2589 = vld [vmem:[%s6 + $0x970] sm:$0xff]
  %v2590 = vld [vmem:[%s6 + $0x978] sm:$0xff]
  %v2591 = vld [vmem:[%s6 + $0x980] sm:$0xff]
  %v2592 = vld [vmem:[%s6 + $0x988] sm:$0xff]
  %v2593 = vld [vmem:[%s6 + $0x990] sm:$0xff]
  %v2594 = vld [vmem:[%s6 + $0x998] sm:$0xff]
  %v2595 = vld [vmem:[%s6 + $0x9a0] sm:$0xff]
  %v2596 = vld [vmem:[%s6 + $0x9a8] sm:$0xff]
  %v2597 = vld [vmem:[%s6 + $0x9b0] sm:$0xff]
  %v2598 = vld [vmem:[%s6 + $0x9b8] sm:$0xff]
  %v2599 = vld [vmem:[%s6 + $0x9c0] sm:$0xff]
  %v2600 = vld [vmem:[%s6 + $0x9c8] sm:$0xff]
  %v2601 = vld [vmem:[%s6 + $0x9d0] sm:$0xff]
  %v2602 = vld [vmem:[%s6 + $0x9d8] sm:$0xff]
  %v2603 = vld [vmem:[%s6 + $0x9e0] sm:$0xff]
  %v2604 = vld [vmem:[%s6 + $0x9e8] sm:$0xff]
  %v2605 = vld [vmem:[%s6 + $0x9f0] sm:$0xff]
  %v2606 = vld [vmem:[%s6 + $0x9f8] sm:$0xff]
  %v2607 = vld [vmem:[%s6 + $0xa00] sm:$0xff]
  %v2608 = vld [vmem:[%s6 + $0xa08] sm:$0xff]
  %v2609 = vld [vmem:[%s6 + $0xa10] sm:$0xff]
  %v2610 = vld [vmem:[%s6 + $0xa18] sm:$0xff]
  %v2611 = vld [vmem:[%s6 + $0xa20] sm:$0xff]
  %v2612 = vld [vmem:[%s6 + $0xa28] sm:$0xff]
  %v2613 = vld [vmem:[%s6 + $0xa30] sm:$0xff]
  %v2614 = vld [vmem:[%s6 + $0xa38] sm:$0xff]
  %v2615 = vld [vmem:[%s6 + $0xa40] sm:$0xff]
  %v2616 = vld [vmem:[%s6 + $0xa48] sm:$0xff]
  %v2617 = vld [vmem:[%s6 + $0xa50] sm:$0xff]
  %v2618 = vld [vmem:[%s6 + $0xa58] sm:$0xff]
  %v2619 = vld [vmem:[%s6 + $0xa60] sm:$0xff]
  %v2620 = vld [vmem:[%s6 + $0xa68] sm:$0xff]
  %v2621 = vld [vmem:[%s6 + $0xa70] sm:$0xff]
  %v2622 = vld [vmem:[%s6 + $0xa78] sm:$0xff]
  %v2623 = vld [vmem:[%s6 + $0xa80] sm:$0xff]
  %v2624 = vld [vmem:[%s6 + $0xa88] sm:$0xff]
  %v2625 = vld [vmem:[%s6 + $0xa90] sm:$0xff]
  %v2626 = vld [vmem:[%s6 + $0xa98] sm:$0xff]
  %v2627 = vld [vmem:[%s6 + $0xaa0] sm:$0xff]
  %v2628 = vld [vmem:[%s6 + $0xaa8] sm:$0xff]
  %v2629 = vld [vmem:[%s6 + $0xab0] sm:$0xff]
  %v2630 = vld [vmem:[%s6 + $0xab8] sm:$0xff]
  %v2631 = vld [vmem:[%s6 + $0xac0] sm:$0xff]
  %v2632 = vld [vmem:[%s6 + $0xac8] sm:$0xff]
  %v2633 = vld [vmem:[%s6 + $0xad0] sm:$0xff]
  %v2634 = vld [vmem:[%s6 + $0xad8] sm:$0xff]
  %v2635 = vld [vmem:[%s6 + $0xae0] sm:$0xff]
  %v2636 = vld [vmem:[%s6 + $0xae8] sm:$0xff]
  %v2637 = vld [vmem:[%s6 + $0xaf0] sm:$0xff]
  %v2638 = vld [vmem:[%s6 + $0xaf8] sm:$0xff]
  %v2639 = vld [vmem:[%s6 + $0xb00] sm:$0xff]
  %v2640 = vld [vmem:[%s6 + $0xb08] sm:$0xff]
  %v2641 = vld [vmem:[%s6 + $0xb10] sm:$0xff]
  %v2642 = vld [vmem:[%s6 + $0xb18] sm:$0xff]
  %v2643 = vld [vmem:[%s6 + $0xb20] sm:$0xff]
  %v2644 = vld [vmem:[%s6 + $0xb28] sm:$0xff]
  %v2645 = vld [vmem:[%s6 + $0xb30] sm:$0xff]
  %v2646 = vld [vmem:[%s6 + $0xb38] sm:$0xff]
  %v2647 = vld [vmem:[%s6 + $0xb40] sm:$0xff]
  %v2648 = vld [vmem:[%s6 + $0xb48] sm:$0xff]
  %v2649 = vld [vmem:[%s6 + $0xb50] sm:$0xff]
  %v2650 = vld [vmem:[%s6 + $0xb58] sm:$0xff]
  %v2651 = vld [vmem:[%s6 + $0xb60] sm:$0xff]
  %v2652 = vld [vmem:[%s6 + $0xb68] sm:$0xff]
  %v2653 = vld [vmem:[%s6 + $0xb70] sm:$0xff]
  %v2654 = vld [vmem:[%s6 + $0xb78] sm:$0xff]
  %v2655 = vld [vmem:[%s6 + $0xb80] sm:$0xff]
  %v2656 = vld [vmem:[%s6 + $0xb88] sm:$0xff]
  %v2657 = vld [vmem:[%s6 + $0xb90] sm:$0xff]
  %v2658 = vld [vmem:[%s6 + $0xb98] sm:$0xff]
  %v2659 = vld [vmem:[%s6 + $0xba0] sm:$0xff]
  %v2660 = vld [vmem:[%s6 + $0xba8] sm:$0xff]
  %v2661 = vld [vmem:[%s6 + $0xbb0] sm:$0xff]
  %v2662 = vld [vmem:[%s6 + $0xbb8] sm:$0xff]
  %v2663 = vld [vmem:[%s6 + $0xbc0] sm:$0xff]
  %v2664 = vld [vmem:[%s6 + $0xbc8] sm:$0xff]
  %v2665 = vld [vmem:[%s6 + $0xbd0] sm:$0xff]
  %v2666 = vld [vmem:[%s6 + $0xbd8] sm:$0xff]
  %v2667 = vld [vmem:[%s6 + $0xbe0] sm:$0xff]
  %v2668 = vld [vmem:[%s6 + $0xbe8] sm:$0xff]
  %v2669 = vld [vmem:[%s6 + $0xbf0] sm:$0xff]
  %v2670 = vld [vmem:[%s6 + $0xbf8] sm:$0xff]
  %v2671 = vld [vmem:[%s6 + $0xc00] sm:$0xff]
  %v2672 = vld [vmem:[%s6 + $0xc08] sm:$0xff]
  %v2673 = vld [vmem:[%s6 + $0xc10] sm:$0xff]
  %v2674 = vld [vmem:[%s6 + $0xc18] sm:$0xff]
  %v2675 = vld [vmem:[%s6 + $0xc20] sm:$0xff]
  %v2676 = vld [vmem:[%s6 + $0xc28] sm:$0xff]
  %v2677 = vld [vmem:[%s6 + $0xc30] sm:$0xff]
  %v2678 = vld [vmem:[%s6 + $0xc38] sm:$0xff]
  %v2679 = vld [vmem:[%s6 + $0xc40] sm:$0xff]
  %v2680 = vld [vmem:[%s6 + $0xc48] sm:$0xff]
  %v2681 = vld [vmem:[%s6 + $0xc50] sm:$0xff]
  %v2682 = vld [vmem:[%s6 + $0xc58] sm:$0xff]
  %v2683 = vld [vmem:[%s6 + $0xc60] sm:$0xff]
  %v2684 = vld [vmem:[%s6 + $0xc68] sm:$0xff]
  %v2685 = vld [vmem:[%s6 + $0xc70] sm:$0xff]
  %v2686 = vld [vmem:[%s6 + $0xc78] sm:$0xff]
  %v2687 = vld [vmem:[%s7] sm:$0x3]
  %v2689 = vlaneseq
  %v2690 = vshrl.u32 %v2689, 7
  %v2691 = vsub.s32 0, %v2690
  %v2692 = vrot.slane %v2687, %v2691
  %v2693 = vlaneseq
  %v2694 = vshrl.u32 %v2693, 7
  %v2695 = vsub.s32 1, %v2694
  %v2696 = vrot.slane %v2687, %v2695
  %v2700 = vsel %vm1506, %v2226, 0
  %2702 = vmatprep.subr.mxu0 %v2288
  %2703 = vmatpush1.msra.mxu0 %v2287
  %2704 = vmatprep.subr.mxu0 %v2290
  %2705 = vmatpush1.msra.mxu0 %v2289
  %2706 = vmatprep.subr.mxu0 %v2292
  %2707 = vmatpush1.msra.mxu0 %v2291
  %2708 = vmatprep.subr.mxu0 %v2294
  %2709 = vmatpush1.msra.mxu0 %v2293
  %2710 = vmatprep.subr.mxu0 %v2296
  %2711 = vmatpush1.msra.mxu0 %v2295
  %2712 = vmatprep.subr.mxu0 %v2298
  %2713 = vmatpush1.msra.mxu0 %v2297
  %2714 = vmatprep.subr.mxu0 %v2300
  %2715 = vmatpush1.msra.mxu0 %v2299
  %2716 = vmatprep.subr.mxu0 %v2302
  %2717 = vmatpush1.msra.mxu0 %v2301
  %2718 = vmatprep.subr.mxu0 %v2304
  %2719 = vmatpush1.msra.mxu0 %v2303
  %2720 = vmatprep.subr.mxu0 %v2306
  %2721 = vmatpush1.msra.mxu0 %v2305
  %2722 = vmatprep.subr.mxu0 %v2308
  %2723 = vmatpush1.msra.mxu0 %v2307
  %2724 = vmatprep.subr.mxu0 %v2310
  %2725 = vmatpush1.msra.mxu0 %v2309
  %2726 = vmatprep.subr.mxu0 %v2312
  %2727 = vmatpush1.msra.mxu0 %v2311
  %2728 = vmatprep.subr.mxu0 %v2314
  %2729 = vmatpush1.msra.mxu0 %v2313
  %2730 = vmatprep.subr.mxu0 %v2316
  %2731 = vmatpush1.msra.mxu0 %v2315
  %2732 = vmatprep.subr.mxu0 %v2318
  %2733 = vmatpush1.msra.mxu0 %v2317
  %2734 = vmatprep.subr.mxu0 %v2320
  %2735 = vmatpush1.msra.mxu0 %v2319
  %2736 = vmatprep.subr.mxu0 %v2322
  %2737 = vmatpush1.msra.mxu0 %v2321
  %2738 = vmatprep.subr.mxu0 %v2324
  %2739 = vmatpush1.msra.mxu0 %v2323
  %2740 = vmatprep.subr.mxu0 %v2326
  %2741 = vmatpush1.msra.mxu0 %v2325
  %2742 = vmatprep.subr.mxu0 %v2328
  %2743 = vmatpush1.msra.mxu0 %v2327
  %2744 = vmatprep.subr.mxu0 %v2330
  %2745 = vmatpush1.msra.mxu0 %v2329
  %2746 = vmatprep.subr.mxu0 %v2332
  %2747 = vmatpush1.msra.mxu0 %v2331
  %2748 = vmatprep.subr.mxu0 %v2334
  %2749 = vmatpush1.msra.mxu0 %v2333
  %2750 = vmatprep.subr.mxu0 %v2336
  %2751 = vmatpush1.msra.mxu0 %v2335
  %2752 = vmatprep.subr.mxu0 %v2338
  %2753 = vmatpush1.msra.mxu0 %v2337
  %2754 = vmatprep.subr.mxu0 %v2340
  %2755 = vmatpush1.msra.mxu0 %v2339
  %2756 = vmatprep.subr.mxu0 %v2342
  %2757 = vmatpush1.msra.mxu0 %v2341
  %2758 = vmatprep.subr.mxu0 %v2344
  %2759 = vmatpush1.msra.mxu0 %v2343
  %2760 = vmatprep.subr.mxu0 %v2346
  %2761 = vmatpush1.msra.mxu0 %v2345
  %2762 = vmatprep.subr.mxu0 %v2348
  %2763 = vmatpush1.msra.mxu0 %v2347
  %2764 = vmatprep.subr.mxu0 %v2350
  %2765 = vmatpush1.msra.mxu0 %v2349
  %2766 = vmatprep.mubr.f32.mxu0 %v2260
  %2767 = vmatmul.mubr.f32.gmra.mrb[0].mxu0 %v2259
  %v2768 = vpop.f32.mrb[0].mxu0
  %v2769 = vadd.f32 %v2692, %v2768
  %v2770 = vpop.f32.mrb[0].mxu0
  %v2771 = vadd.f32 %v2696, %v2770
  %2772 = vdwg.mxu0
  %2773 = vmatprep.subr.mxu0 %v2352
  %2774 = vmatpush1.msra.mxu0 %v2351
  %2775 = vmatprep.subr.mxu0 %v2354
  %2776 = vmatpush1.msra.mxu0 %v2353
  %2777 = vmatprep.subr.mxu0 %v2356
  %2778 = vmatpush1.msra.mxu0 %v2355
  %2779 = vmatprep.subr.mxu0 %v2358
  %2780 = vmatpush1.msra.mxu0 %v2357
  %2781 = vmatprep.subr.mxu0 %v2360
  %2782 = vmatpush1.msra.mxu0 %v2359
  %2783 = vmatprep.subr.mxu0 %v2362
  %2784 = vmatpush1.msra.mxu0 %v2361
  %2785 = vmatprep.subr.mxu0 %v2364
  %2786 = vmatpush1.msra.mxu0 %v2363
  %2787 = vmatprep.subr.mxu0 %v2366
  %2788 = vmatpush1.msra.mxu0 %v2365
  %2789 = vmatprep.subr.mxu0 %v2368
  %2790 = vmatpush1.msra.mxu0 %v2367
  %2791 = vmatprep.subr.mxu0 %v2370
  %2792 = vmatpush1.msra.mxu0 %v2369
  %2793 = vmatprep.subr.mxu0 %v2372
  %2794 = vmatpush1.msra.mxu0 %v2371
  %2795 = vmatprep.subr.mxu0 %v2374
  %2796 = vmatpush1.msra.mxu0 %v2373
  %2797 = vmatprep.subr.mxu0 %v2376
  %2798 = vmatpush1.msra.mxu0 %v2375
  %2799 = vmatprep.subr.mxu0 %v2378
  %2800 = vmatpush1.msra.mxu0 %v2377
  %2801 = vmatprep.subr.mxu0 %v2380
  %2802 = vmatpush1.msra.mxu0 %v2379
  %2803 = vmatprep.subr.mxu0 %v2382
  %2804 = vmatpush1.msra.mxu0 %v2381
  %2805 = vmatprep.subr.mxu0 %v2384
  %2806 = vmatpush1.msra.mxu0 %v2383
  %2807 = vmatprep.subr.mxu0 %v2386
  %2808 = vmatpush1.msra.mxu0 %v2385
  %2809 = vmatprep.subr.mxu0 %v2388
  %2810 = vmatpush1.msra.mxu0 %v2387
  %2811 = vmatprep.subr.mxu0 %v2390
  %2812 = vmatpush1.msra.mxu0 %v2389
  %2813 = vmatprep.subr.mxu0 %v2392
  %2814 = vmatpush1.msra.mxu0 %v2391
  %2815 = vmatprep.subr.mxu0 %v2394
  %2816 = vmatpush1.msra.mxu0 %v2393
  %2817 = vmatprep.subr.mxu0 %v2396
  %2818 = vmatpush1.msra.mxu0 %v2395
  %2819 = vmatprep.subr.mxu0 %v2398
  %2820 = vmatpush1.msra.mxu0 %v2397
  %2821 = vmatprep.subr.mxu0 %v2400
  %2822 = vmatpush1.msra.mxu0 %v2399
  %2823 = vmatprep.subr.mxu0 %v2402
  %2824 = vmatpush1.msra.mxu0 %v2401
  %2825 = vmatprep.subr.mxu0 %v2404
  %2826 = vmatpush1.msra.mxu0 %v2403
  %2827 = vmatprep.subr.mxu0 %v2406
  %2828 = vmatpush1.msra.mxu0 %v2405
  %2829 = vmatprep.subr.mxu0 %v2408
  %2830 = vmatpush1.msra.mxu0 %v2407
  %2831 = vmatprep.subr.mxu0 %v2410
  %2832 = vmatpush1.msra.mxu0 %v2409
  %2833 = vmatprep.subr.mxu0 %v2412
  %2834 = vmatpush1.msra.mxu0 %v2411
  %2835 = vmatprep.subr.mxu0 %v2414
  %2836 = vmatpush1.msra.mxu0 %v2413
  %2837 = vmatprep.mubr.f32.mxu0 %v2262
  %2838 = vmatmul.mubr.f32.gmra.mrb[0].mxu0 %v2261
  %v2839 = vpop.f32.mrb[0].mxu0
  %v2840 = vadd.f32 %v2769, %v2839
  %v2841 = vpop.f32.mrb[0].mxu0
  %v2842 = vadd.f32 %v2771, %v2841
  %2843 = vdwg.mxu0
  %2844 = vmatprep.subr.mxu0 %v2416
  %2845 = vmatpush1.msra.mxu0 %v2415
  %2846 = vmatprep.subr.mxu0 %v2418
  %2847 = vmatpush1.msra.mxu0 %v2417
  %2848 = vmatprep.subr.mxu0 %v2420
  %2849 = vmatpush1.msra.mxu0 %v2419
  %2850 = vmatprep.subr.mxu0 %v2422
  %2851 = vmatpush1.msra.mxu0 %v2421
  %2852 = vmatprep.subr.mxu0 %v2424
  %2853 = vmatpush1.msra.mxu0 %v2423
  %2854 = vmatprep.subr.mxu0 %v2426
  %2855 = vmatpush1.msra.mxu0 %v2425
  %2856 = vmatprep.subr.mxu0 %v2428
  %2857 = vmatpush1.msra.mxu0 %v2427
  %2858 = vmatprep.subr.mxu0 %v2430
  %2859 = vmatpush1.msra.mxu0 %v2429
  %2860 = vmatprep.subr.mxu0 %v2432
  %2861 = vmatpush1.msra.mxu0 %v2431
  %2862 = vmatprep.subr.mxu0 %v2434
  %2863 = vmatpush1.msra.mxu0 %v2433
  %2864 = vmatprep.subr.mxu0 %v2436
  %2865 = vmatpush1.msra.mxu0 %v2435
  %2866 = vmatprep.subr.mxu0 %v2438
  %2867 = vmatpush1.msra.mxu0 %v2437
  %2868 = vmatprep.subr.mxu0 %v2440
  %2869 = vmatpush1.msra.mxu0 %v2439
  %2870 = vmatprep.subr.mxu0 %v2442
  %2871 = vmatpush1.msra.mxu0 %v2441
  %2872 = vmatprep.subr.mxu0 %v2444
  %2873 = vmatpush1.msra.mxu0 %v2443
  %2874 = vmatprep.subr.mxu0 %v2446
  %2875 = vmatpush1.msra.mxu0 %v2445
  %2876 = vmatprep.subr.mxu0 %v2448
  %2877 = vmatpush1.msra.mxu0 %v2447
  %2878 = vmatprep.subr.mxu0 %v2450
  %2879 = vmatpush1.msra.mxu0 %v2449
  %2880 = vmatprep.subr.mxu0 %v2452
  %2881 = vmatpush1.msra.mxu0 %v2451
  %2882 = vmatprep.subr.mxu0 %v2454
  %2883 = vmatpush1.msra.mxu0 %v2453
  %2884 = vmatprep.subr.mxu0 %v2456
  %2885 = vmatpush1.msra.mxu0 %v2455
  %2886 = vmatprep.subr.mxu0 %v2458
  %2887 = vmatpush1.msra.mxu0 %v2457
  %2888 = vmatprep.subr.mxu0 %v2460
  %2889 = vmatpush1.msra.mxu0 %v2459
  %2890 = vmatprep.subr.mxu0 %v2462
  %2891 = vmatpush1.msra.mxu0 %v2461
  %2892 = vmatprep.subr.mxu0 %v2464
  %2893 = vmatpush1.msra.mxu0 %v2463
  %2894 = vmatprep.subr.mxu0 %v2466
  %2895 = vmatpush1.msra.mxu0 %v2465
  %2896 = vmatprep.subr.mxu0 %v2468
  %2897 = vmatpush1.msra.mxu0 %v2467
  %2898 = vmatprep.subr.mxu0 %v2470
  %2899 = vmatpush1.msra.mxu0 %v2469
  %2900 = vmatprep.subr.mxu0 %v2472
  %2901 = vmatpush1.msra.mxu0 %v2471
  %2902 = vmatprep.subr.mxu0 %v2474
  %2903 = vmatpush1.msra.mxu0 %v2473
  %2904 = vmatprep.subr.mxu0 %v2476
  %2905 = vmatpush1.msra.mxu0 %v2475
  %2906 = vmatprep.subr.mxu0 %v2478
  %2907 = vmatpush1.msra.mxu0 %v2477
  %2908 = vmatprep.mubr.f32.mxu0 %v2264
  %2909 = vmatmul.mubr.f32.gmra.mrb[0].mxu0 %v2263
  %v2910 = vpop.f32.mrb[0].mxu0
  %v2911 = vadd.f32 %v2840, %v2910
  %v2912 = vpop.f32.mrb[0].mxu0
  %v2913 = vadd.f32 %v2842, %v2912
  %2914 = vdwg.mxu0
  %2915 = vmatprep.subr.mxu0 %v2480
  %2916 = vmatpush1.msra.mxu0 %v2479
  %2917 = vmatprep.subr.mxu0 %v2482
  %2918 = vmatpush1.msra.mxu0 %v2481
  %2919 = vmatprep.subr.mxu0 %v2484
  %2920 = vmatpush1.msra.mxu0 %v2483
  %2921 = vmatprep.subr.mxu0 %v2486
  %2922 = vmatpush1.msra.mxu0 %v2485
  %2923 = vmatprep.subr.mxu0 %v2488
  %2924 = vmatpush1.msra.mxu0 %v2487
  %2925 = vmatprep.subr.mxu0 %v2490
  %2926 = vmatpush1.msra.mxu0 %v2489
  %2927 = vmatprep.subr.mxu0 %v2492
  %2928 = vmatpush1.msra.mxu0 %v2491
  %2929 = vmatprep.subr.mxu0 %v2494
  %2930 = vmatpush1.msra.mxu0 %v2493
  %2931 = vmatprep.subr.mxu0 %v2496
  %2932 = vmatpush1.msra.mxu0 %v2495
  %2933 = vmatprep.subr.mxu0 %v2498
  %2934 = vmatpush1.msra.mxu0 %v2497
  %2935 = vmatprep.subr.mxu0 %v2500
  %2936 = vmatpush1.msra.mxu0 %v2499
  %2937 = vmatprep.subr.mxu0 %v2502
  %2938 = vmatpush1.msra.mxu0 %v2501
  %2939 = vmatprep.subr.mxu0 %v2504
  %2940 = vmatpush1.msra.mxu0 %v2503
  %2941 = vmatprep.subr.mxu0 %v2506
  %2942 = vmatpush1.msra.mxu0 %v2505
  %2943 = vmatprep.subr.mxu0 %v2508
  %2944 = vmatpush1.msra.mxu0 %v2507
  %2945 = vmatprep.subr.mxu0 %v2510
  %2946 = vmatpush1.msra.mxu0 %v2509
  %2947 = vmatprep.subr.mxu0 %v2512
  %2948 = vmatpush1.msra.mxu0 %v2511
  %2949 = vmatprep.subr.mxu0 %v2514
  %2950 = vmatpush1.msra.mxu0 %v2513
  %2951 = vmatprep.subr.mxu0 %v2516
  %2952 = vmatpush1.msra.mxu0 %v2515
  %2953 = vmatprep.subr.mxu0 %v2518
  %2954 = vmatpush1.msra.mxu0 %v2517
  %2955 = vmatprep.subr.mxu0 %v2520
  %2956 = vmatpush1.msra.mxu0 %v2519
  %2957 = vmatprep.subr.mxu0 %v2522
  %2958 = vmatpush1.msra.mxu0 %v2521
  %2959 = vmatprep.subr.mxu0 %v2524
  %2960 = vmatpush1.msra.mxu0 %v2523
  %2961 = vmatprep.subr.mxu0 %v2526
  %2962 = vmatpush1.msra.mxu0 %v2525
  %2963 = vmatprep.subr.mxu0 %v2528
  %2964 = vmatpush1.msra.mxu0 %v2527
  %2965 = vmatprep.subr.mxu0 %v2530
  %2966 = vmatpush1.msra.mxu0 %v2529
  %2967 = vmatprep.subr.mxu0 %v2532
  %2968 = vmatpush1.msra.mxu0 %v2531
  %2969 = vmatprep.subr.mxu0 %v2534
  %2970 = vmatpush1.msra.mxu0 %v2533
  %2971 = vmatprep.subr.mxu0 %v2536
  %2972 = vmatpush1.msra.mxu0 %v2535
  %2973 = vmatprep.subr.mxu0 %v2538
  %2974 = vmatpush1.msra.mxu0 %v2537
  %2975 = vmatprep.subr.mxu0 %v2540
  %2976 = vmatpush1.msra.mxu0 %v2539
  %2977 = vmatprep.subr.mxu0 %v2542
  %2978 = vmatpush1.msra.mxu0 %v2541
  %2979 = vmatprep.mubr.f32.mxu0 %v2266
  %2980 = vmatmul.mubr.f32.gmra.mrb[0].mxu0 %v2265
  %v2981 = vpop.f32.mrb[0].mxu0
  %v2982 = vadd.f32 %v2911, %v2981
  %v2983 = vpop.f32.mrb[0].mxu0
  %v2984 = vadd.f32 %v2913, %v2983
  %2985 = vdwg.mxu0
  %2986 = vmatprep.subr.mxu0 %v2544
  %2987 = vmatpush1.msra.mxu0 %v2543
  %2988 = vmatprep.subr.mxu0 %v2546
  %2989 = vmatpush1.msra.mxu0 %v2545
  %2990 = vmatprep.subr.mxu0 %v2548
  %2991 = vmatpush1.msra.mxu0 %v2547
  %2992 = vmatprep.subr.mxu0 %v2550
  %2993 = vmatpush1.msra.mxu0 %v2549
  %2994 = vmatprep.subr.mxu0 %v2552
  %2995 = vmatpush1.msra.mxu0 %v2551
  %2996 = vmatprep.subr.mxu0 %v2554
  %2997 = vmatpush1.msra.mxu0 %v2553
  %2998 = vmatprep.subr.mxu0 %v2556
  %2999 = vmatpush1.msra.mxu0 %v2555
  %3000 = vmatprep.subr.mxu0 %v2558
  %3001 = vmatpush1.msra.mxu0 %v2557
  %3002 = vmatprep.subr.mxu0 %v2560
  %3003 = vmatpush1.msra.mxu0 %v2559
  %3004 = vmatprep.subr.mxu0 %v2562
  %3005 = vmatpush1.msra.mxu0 %v2561
  %3006 = vmatprep.subr.mxu0 %v2564
  %3007 = vmatpush1.msra.mxu0 %v2563
  %3008 = vmatprep.subr.mxu0 %v2566
  %3009 = vmatpush1.msra.mxu0 %v2565
  %3010 = vmatprep.subr.mxu0 %v2568
  %3011 = vmatpush1.msra.mxu0 %v2567
  %3012 = vmatprep.subr.mxu0 %v2570
  %3013 = vmatpush1.msra.mxu0 %v2569
  %3014 = vmatprep.subr.mxu0 %v2572
  %3015 = vmatpush1.msra.mxu0 %v2571
  %3016 = vmatprep.subr.mxu0 %v2574
  %3017 = vmatpush1.msra.mxu0 %v2573
  %3018 = vmatprep.subr.mxu0 %v2576
  %3019 = vmatpush1.msra.mxu0 %v2575
  %3020 = vmatprep.subr.mxu0 %v2578
  %3021 = vmatpush1.msra.mxu0 %v2577
  %3022 = vmatprep.subr.mxu0 %v2580
  %3023 = vmatpush1.msra.mxu0 %v2579
  %3024 = vmatprep.subr.mxu0 %v2582
  %3025 = vmatpush1.msra.mxu0 %v2581
  %3026 = vmatprep.subr.mxu0 %v2584
  %3027 = vmatpush1.msra.mxu0 %v2583
  %3028 = vmatprep.subr.mxu0 %v2586
  %3029 = vmatpush1.msra.mxu0 %v2585
  %3030 = vmatprep.subr.mxu0 %v2588
  %3031 = vmatpush1.msra.mxu0 %v2587
  %3032 = vmatprep.subr.mxu0 %v2590
  %3033 = vmatpush1.msra.mxu0 %v2589
  %3034 = vmatprep.subr.mxu0 %v2592
  %3035 = vmatpush1.msra.mxu0 %v2591
  %3036 = vmatprep.subr.mxu0 %v2594
  %3037 = vmatpush1.msra.mxu0 %v2593
  %3038 = vmatprep.subr.mxu0 %v2596
  %3039 = vmatpush1.msra.mxu0 %v2595
  %3040 = vmatprep.subr.mxu0 %v2598
  %3041 = vmatpush1.msra.mxu0 %v2597
  %3042 = vmatprep.subr.mxu0 %v2600
  %3043 = vmatpush1.msra.mxu0 %v2599
  %3044 = vmatprep.subr.mxu0 %v2602
  %3045 = vmatpush1.msra.mxu0 %v2601
  %3046 = vmatprep.subr.mxu0 %v2604
  %3047 = vmatpush1.msra.mxu0 %v2603
  %3048 = vmatprep.subr.mxu0 %v2606
  %3049 = vmatpush1.msra.mxu0 %v2605
  %3050 = vmatprep.mubr.f32.mxu0 %v2284
  %3051 = vmatmul.mubr.f32.gmra.mrb[0].mxu0 %v2283
  %v3052 = vpop.f32.mrb[0].mxu0
  %v3053 = vadd.f32 %v2982, %v3052
  %v3054 = vpop.f32.mrb[0].mxu0
  %v3055 = vadd.f32 %v2984, %v3054
  %3056 = vdwg.mxu0
  %3057 = vmatprep.subr.mxu0 %v2608
  %3058 = vmatpush1.msra.mxu0 %v2607
  %3059 = vmatprep.subr.mxu0 %v2610
  %3060 = vmatpush1.msra.mxu0 %v2609
  %3061 = vmatprep.subr.mxu0 %v2612
  %3062 = vmatpush1.msra.mxu0 %v2611
  %3063 = vmatprep.subr.mxu0 %v2614
  %3064 = vmatpush1.msra.mxu0 %v2613
  %3065 = vmatprep.subr.mxu0 %v2616
  %3066 = vmatpush1.msra.mxu0 %v2615
  %3067 = vmatprep.subr.mxu0 %v2618
  %3068 = vmatpush1.msra.mxu0 %v2617
  %3069 = vmatprep.subr.mxu0 %v2620
  %3070 = vmatpush1.msra.mxu0 %v2619
  %3071 = vmatprep.subr.mxu0 %v2622
  %3072 = vmatpush1.msra.mxu0 %v2621
  %3073 = vmatprep.subr.mxu0 %v2624
  %3074 = vmatpush1.msra.mxu0 %v2623
  %3075 = vmatprep.subr.mxu0 %v2626
  %3076 = vmatpush1.msra.mxu0 %v2625
  %3077 = vmatprep.subr.mxu0 %v2628
  %3078 = vmatpush1.msra.mxu0 %v2627
  %3079 = vmatprep.subr.mxu0 %v2630
  %3080 = vmatpush1.msra.mxu0 %v2629
  %3081 = vmatprep.subr.mxu0 %v2632
  %3082 = vmatpush1.msra.mxu0 %v2631
  %3083 = vmatprep.subr.mxu0 %v2634
  %3084 = vmatpush1.msra.mxu0 %v2633
  %3085 = vmatprep.subr.mxu0 %v2636
  %3086 = vmatpush1.msra.mxu0 %v2635
  %3087 = vmatprep.subr.mxu0 %v2638
  %3088 = vmatpush1.msra.mxu0 %v2637
  %3089 = vmatprep.subr.mxu0 %v2640
  %3090 = vmatpush1.msra.mxu0 %v2639
  %3091 = vmatprep.subr.mxu0 %v2642
  %3092 = vmatpush1.msra.mxu0 %v2641
  %3093 = vmatprep.subr.mxu0 %v2644
  %3094 = vmatpush1.msra.mxu0 %v2643
  %3095 = vmatprep.subr.mxu0 %v2646
  %3096 = vmatpush1.msra.mxu0 %v2645
  %3097 = vmatprep.subr.mxu0 %v2648
  %3098 = vmatpush1.msra.mxu0 %v2647
  %3099 = vmatprep.subr.mxu0 %v2650
  %3100 = vmatpush1.msra.mxu0 %v2649
  %3101 = vmatprep.subr.mxu0 %v2652
  %3102 = vmatpush1.msra.mxu0 %v2651
  %3103 = vmatprep.subr.mxu0 %v2654
  %3104 = vmatpush1.msra.mxu0 %v2653
  %3105 = vmatprep.subr.mxu0 %v2656
  %3106 = vmatpush1.msra.mxu0 %v2655
  %3107 = vmatprep.subr.mxu0 %v2658
  %3108 = vmatpush1.msra.mxu0 %v2657
  %3109 = vmatprep.subr.mxu0 %v2660
  %3110 = vmatpush1.msra.mxu0 %v2659
  %3111 = vmatprep.subr.mxu0 %v2662
  %3112 = vmatpush1.msra.mxu0 %v2661
  %3113 = vmatprep.subr.mxu0 %v2664
  %3114 = vmatpush1.msra.mxu0 %v2663
  %3115 = vmatprep.subr.mxu0 %v2666
  %3116 = vmatpush1.msra.mxu0 %v2665
  %3117 = vmatprep.subr.mxu0 %v2668
  %3118 = vmatpush1.msra.mxu0 %v2667
  %3119 = vmatprep.subr.mxu0 %v2670
  %3120 = vmatpush1.msra.mxu0 %v2669
  %3121 = vmatprep.mubr.f32.mxu0 %v2286
  %3122 = vmatmul.mubr.f32.gmra.mrb[0].mxu0 %v2285
  %v3123 = vpop.f32.mrb[0].mxu0
  %v3124 = vadd.f32 %v3053, %v3123
  %v3125 = vpop.f32.mrb[0].mxu0
  %v3126 = vadd.f32 %v3055, %v3125
  %3127 = vdwg.mxu0
  %3128 = vmatprep.subr.mxu0 %v2672
  %3129 = vmatpush1.msra.mxu0 %v2671
  %3130 = vmatprep.subr.mxu0 %v2674
  %3131 = vmatpush1.msra.mxu0 %v2673
  %3132 = vmatprep.subr.mxu0 %v2676
  %3133 = vmatpush1.msra.mxu0 %v2675
  %3134 = vmatprep.subr.mxu0 %v2678
  %3135 = vmatpush1.msra.mxu0 %v2677
  %3136 = vmatprep.subr.mxu0 %v2680
  %3137 = vmatpush1.msra.mxu0 %v2679
  %3138 = vmatprep.subr.mxu0 %v2682
  %3139 = vmatpush1.msra.mxu0 %v2681
  %3140 = vmatprep.subr.mxu0 %v2684
  %3141 = vmatpush1.msra.mxu0 %v2683
  %3142 = vmatprep.subr.mxu0 %v2686
  %3143 = vmatpush1.msra.mxu0 %v2685
  %3144 = vmatprep.subr.mxu0 0.0
  %3145 = vmatpush1.msra.mxu0 0.0
  %3146 = vmatprep.subr.mxu0 0.0
  %3147 = vmatpush1.msra.mxu0 0.0
  %3148 = vmatprep.subr.mxu0 0.0
  %3149 = vmatpush1.msra.mxu0 0.0
  %3150 = vmatprep.subr.mxu0 0.0
  %3151 = vmatpush1.msra.mxu0 0.0
  %3152 = vmatprep.subr.mxu0 0.0
  %3153 = vmatpush1.msra.mxu0 0.0
  %3154 = vmatprep.subr.mxu0 0.0
  %3155 = vmatpush1.msra.mxu0 0.0
  %3156 = vmatprep.subr.mxu0 0.0
  %3157 = vmatpush1.msra.mxu0 0.0
  %3158 = vmatprep.subr.mxu0 0.0
  %3159 = vmatpush1.msra.mxu0 0.0
  %3160 = vmatprep.subr.mxu0 0.0
  %3161 = vmatpush1.msra.mxu0 0.0
  %3162 = vmatprep.subr.mxu0 0.0
  %3163 = vmatpush1.msra.mxu0 0.0
  %3164 = vmatprep.subr.mxu0 0.0
  %3165 = vmatpush1.msra.mxu0 0.0
  %3166 = vmatprep.subr.mxu0 0.0
  %3167 = vmatpush1.msra.mxu0 0.0
  %3168 = vmatprep.subr.mxu0 0.0
  %3169 = vmatpush1.msra.mxu0 0.0
  %3170 = vmatprep.subr.mxu0 0.0
  %3171 = vmatpush1.msra.mxu0 0.0
  %3172 = vmatprep.subr.mxu0 0.0
  %3173 = vmatpush1.msra.mxu0 0.0
  %3174 = vmatprep.subr.mxu0 0.0
  %3175 = vmatpush1.msra.mxu0 0.0
  %3176 = vmatprep.subr.mxu0 0.0
  %3177 = vmatpush1.msra.mxu0 0.0
  %3178 = vmatprep.subr.mxu0 0.0
  %3179 = vmatpush1.msra.mxu0 0.0
  %3180 = vmatprep.subr.mxu0 0.0
  %3181 = vmatpush1.msra.mxu0 0.0
  %3182 = vmatprep.subr.mxu0 0.0
  %3183 = vmatpush1.msra.mxu0 0.0
  %3184 = vmatprep.subr.mxu0 0.0
  %3185 = vmatpush1.msra.mxu0 0.0
  %3186 = vmatprep.subr.mxu0 0.0
  %3187 = vmatpush1.msra.mxu0 0.0
  %3188 = vmatprep.subr.mxu0 0.0
  %3189 = vmatpush1.msra.mxu0 0.0
  %3190 = vmatprep.subr.mxu0 0.0
  %3191 = vmatpush1.msra.mxu0 0.0
  %3192 = vmatprep.mubr.f32.mxu0 0.0
  %3193 = vmatmul.mubr.f32.gmra.mrb[0].mxu0 %v2700
  %v3194 = vpop.f32.mrb[0].mxu0
  %v3195 = vadd.f32 %v3124, %v3194
  %v3196 = vpop.f32.mrb[0].mxu0
  %v3197 = vadd.f32 %v3126, %v3196
  %3198 = vdwg.mxu0
  %v3199 = vmax.f32 %v3195, 0.0
  %v3200 = vmax.f32 %v3197, 0.0
  %v3201 = vld [vmem:[%s8] sm:$0xff]
  %v3202 = vld [vmem:[%s8 + $0x8] sm:$0xff]
  %v3203 = vld [vmem:[%s8 + $0x10] sm:$0xff]
  %v3204 = vld [vmem:[%s8 + $0x18] sm:$0xff]
  %v3205 = vld [vmem:[%s8 + $0x20] sm:$0xff]
  %v3206 = vld [vmem:[%s8 + $0x28] sm:$0xff]
  %v3207 = vld [vmem:[%s8 + $0x30] sm:$0xff]
  %v3208 = vld [vmem:[%s8 + $0x38] sm:$0xff]
  %v3209 = vld [vmem:[%s8 + $0x40] sm:$0xff]
  %v3210 = vld [vmem:[%s8 + $0x48] sm:$0xff]
  %v3211 = vld [vmem:[%s8 + $0x50] sm:$0xff]
  %v3212 = vld [vmem:[%s8 + $0x58] sm:$0xff]
  %v3213 = vld [vmem:[%s8 + $0x60] sm:$0xff]
  %v3214 = vld [vmem:[%s8 + $0x68] sm:$0xff]
  %v3215 = vld [vmem:[%s8 + $0x70] sm:$0xff]
  %v3216 = vld [vmem:[%s8 + $0x78] sm:$0xff]
  %v3217 = vld [vmem:[%s8 + $0x80] sm:$0xff]
  %v3218 = vld [vmem:[%s8 + $0x88] sm:$0xff]
  %v3219 = vld [vmem:[%s8 + $0x90] sm:$0xff]
  %v3220 = vld [vmem:[%s8 + $0x98] sm:$0xff]
  %v3221 = vld [vmem:[%s8 + $0xa0] sm:$0xff]
  %v3222 = vld [vmem:[%s8 + $0xa8] sm:$0xff]
  %v3223 = vld [vmem:[%s8 + $0xb0] sm:$0xff]
  %v3224 = vld [vmem:[%s8 + $0xb8] sm:$0xff]
  %v3225 = vld [vmem:[%s8 + $0xc0] sm:$0xff]
  %v3226 = vld [vmem:[%s8 + $0xc8] sm:$0xff]
  %v3227 = vld [vmem:[%s8 + $0xd0] sm:$0xff]
  %v3228 = vld [vmem:[%s8 + $0xd8] sm:$0xff]
  %v3229 = vld [vmem:[%s8 + $0xe0] sm:$0xff]
  %v3230 = vld [vmem:[%s8 + $0xe8] sm:$0xff]
  %v3231 = vld [vmem:[%s8 + $0xf0] sm:$0xff]
  %v3232 = vld [vmem:[%s8 + $0xf8] sm:$0xff]
  %v3233 = vld [vmem:[%s9] sm:$0x1]
  %v3235 = vlaneseq
  %v3236 = vshrl.u32 %v3235, 7
  %v3237 = vsub.s32 0, %v3236
  %v3238 = vrot.slane %v3233, %v3237
  %3240 = vmatprep.subr.mxu0 0.0
  %3241 = vmatpush1.msra.mxu0 %v3201
  %3242 = vmatprep.subr.mxu0 0.0
  %3243 = vmatpush1.msra.mxu0 %v3202
  %3244 = vmatprep.subr.mxu0 0.0
  %3245 = vmatpush1.msra.mxu0 %v3203
  %3246 = vmatprep.subr.mxu0 0.0
  %3247 = vmatpush1.msra.mxu0 %v3204
  %3248 = vmatprep.subr.mxu0 0.0
  %3249 = vmatpush1.msra.mxu0 %v3205
  %3250 = vmatprep.subr.mxu0 0.0
  %3251 = vmatpush1.msra.mxu0 %v3206
  %3252 = vmatprep.subr.mxu0 0.0
  %3253 = vmatpush1.msra.mxu0 %v3207
  %3254 = vmatprep.subr.mxu0 0.0
  %3255 = vmatpush1.msra.mxu0 %v3208
  %3256 = vmatprep.subr.mxu0 0.0
  %3257 = vmatpush1.msra.mxu0 %v3209
  %3258 = vmatprep.subr.mxu0 0.0
  %3259 = vmatpush1.msra.mxu0 %v3210
  %3260 = vmatprep.subr.mxu0 0.0
  %3261 = vmatpush1.msra.mxu0 %v3211
  %3262 = vmatprep.subr.mxu0 0.0
  %3263 = vmatpush1.msra.mxu0 %v3212
  %3264 = vmatprep.subr.mxu0 0.0
  %3265 = vmatpush1.msra.mxu0 %v3213
  %3266 = vmatprep.subr.mxu0 0.0
  %3267 = vmatpush1.msra.mxu0 %v3214
  %3268 = vmatprep.subr.mxu0 0.0
  %3269 = vmatpush1.msra.mxu0 %v3215
  %3270 = vmatprep.subr.mxu0 0.0
  %3271 = vmatpush1.msra.mxu0 %v3216
  %3272 = vmatprep.subr.mxu0 0.0
  %3273 = vmatpush1.msra.mxu0 %v3217
  %3274 = vmatprep.subr.mxu0 0.0
  %3275 = vmatpush1.msra.mxu0 %v3218
  %3276 = vmatprep.subr.mxu0 0.0
  %3277 = vmatpush1.msra.mxu0 %v3219
  %3278 = vmatprep.subr.mxu0 0.0
  %3279 = vmatpush1.msra.mxu0 %v3220
  %3280 = vmatprep.subr.mxu0 0.0
  %3281 = vmatpush1.msra.mxu0 %v3221
  %3282 = vmatprep.subr.mxu0 0.0
  %3283 = vmatpush1.msra.mxu0 %v3222
  %3284 = vmatprep.subr.mxu0 0.0
  %3285 = vmatpush1.msra.mxu0 %v3223
  %3286 = vmatprep.subr.mxu0 0.0
  %3287 = vmatpush1.msra.mxu0 %v3224
  %3288 = vmatprep.subr.mxu0 0.0
  %3289 = vmatpush1.msra.mxu0 %v3225
  %3290 = vmatprep.subr.mxu0 0.0
  %3291 = vmatpush1.msra.mxu0 %v3226
  %3292 = vmatprep.subr.mxu0 0.0
  %3293 = vmatpush1.msra.mxu0 %v3227
  %3294 = vmatprep.subr.mxu0 0.0
  %3295 = vmatpush1.msra.mxu0 %v3228
  %3296 = vmatprep.subr.mxu0 0.0
  %3297 = vmatpush1.msra.mxu0 %v3229
  %3298 = vmatprep.subr.mxu0 0.0
  %3299 = vmatpush1.msra.mxu0 %v3230
  %3300 = vmatprep.subr.mxu0 0.0
  %3301 = vmatpush1.msra.mxu0 %v3231
  %3302 = vmatprep.subr.mxu0 0.0
  %3303 = vmatpush1.msra.mxu0 %v3232
  %3304 = vmatprep.mubr.f32.mxu0 %v3200
  %3305 = vmatmul.mubr.f32.gmra.mrb[0].mxu0 %v3199
  %v3306 = vpop.f32.mrb[0].mxu0
  %v3307 = vadd.f32 %v3238, %v3306
  %v3308 = vpop.f32.mrb[0].mxu0
  %3309 = vdwg.mxu0
  %3310 = vst [vmem:[%s10] sm:$0xff] %v3307
  // Predicated region
  $region42: #{dqn_forward.1} parent=0 // pred_check
    _
  $region43: #{dqn_forward.1} parent=0 // pred_check_branch
    %3312 = sbr.rel (0) target = $region45
  $region44: #{dqn_forward.1} parent=0 // pred_region
    _
  $region45: #{dqn_forward.1} parent=0 // pred_fallthru
    _
  // Predicated region
  $region46: #{dqn_forward.1} parent=0 // pred_check
    _
  $region47: #{dqn_forward.1} parent=0 // pred_check_branch
    %3314 = sbr.rel (0) target = $region49
  $region48: #{dqn_forward.1} parent=0 // pred_region
    _
  $region49: #{dqn_forward.1} parent=0 // pred_fallthru
    _

</llo_original>
